<compile_context>
chip_gen: v7x
topology: tpu7x:2x2x1
jax: 0.10.0
libtpu: 0.0.40
codegen_flags: <defaults>
</compile_context>

<pallas_src>
import functools

import jax
import jax.numpy as jnp
from jax import lax
from jax.experimental import pallas as pl
from jax.experimental.pallas import tpu as pltpu

EPS = 1e-5          # PyTorch BatchNorm1d default eps
NUM_LAYERS = 5


def _round_up(x, m):
    return ((x + m - 1) // m) * m


def _encoder_kernel(B, N, tile_n, x_ref, *refs):
    n_in = 3 * NUM_LAYERS
    w_refs = refs[0:n_in:3]          # per-layer weights (C_in, C_out)
    g_refs = refs[1:n_in:3]          # BN gamma (1, C_out), f32
    be_refs = refs[2:n_in:3]         # BN beta  (1, C_out), f32
    out_ref = refs[n_in]             # (B, F_pad) output
    stat_refs = refs[n_in + 1: n_in + 1 + 2 * NUM_LAYERS]
    sum_refs = stat_refs[0::2]       # running sum(z)   -> reused as folded BN scale
    sq_refs = stat_refs[1::2]        # running sum(z^2) -> reused as folded BN shift
    mx_ref = refs[n_in + 1 + 2 * NUM_LAYERS]   # (B, F_pad) running max

    phase = pl.program_id(0)
    b = pl.program_id(1)
    t = pl.program_id(2)
    is_first = jnp.logical_and(b == 0, t == 0)
    is_last = jnp.logical_and(b == pl.num_programs(1) - 1,
                              t == pl.num_programs(2) - 1)

    h3 = x_ref[0]                                               # (tile_n, 3) f32
    row = t * tile_n + lax.broadcasted_iota(jnp.int32, (tile_n, 1), 0)
    valid = row < N                                             # mask for padded rows

    inv_count = jnp.float32(1.0 / (B * N))

    def pre_act(j, h):
        """Pre-activation of layer j (0-based). Conv bias dropped: cancelled by BN mean."""
        if j == 0:
            # C_in = 3: three VPU broadcast-FMAs instead of a K=3 MXU contraction.
            w1 = w_refs[0][...]                                 # (3, 64) f32
            z = h[:, 0:1] * w1[0:1, :]
            z = z + h[:, 1:2] * w1[1:2, :]
            z = z + h[:, 2:3] * w1[2:3, :]
            return z
        wv = w_refs[j][...]                                     # (C_in, C_out), bf16/f32
        return jnp.dot(h.astype(wv.dtype), wv, preferred_element_type=jnp.float32)

    def act_upto(k):
        """Activation after layers 1..k using the folded BN affine; k == 0 -> raw input."""
        h = h3
        for j in range(k):
            z = pre_act(j, h)
            h = jnp.maximum(z * sum_refs[j][...] + sq_refs[j][...], 0.0)
        return h

    # ---- phases 0..4: accumulate BN statistics of layer p+1's pre-activation ----
    for p in range(NUM_LAYERS):
        @pl.when(phase == p)
        def _stats_phase(p=p):
            @pl.when(is_first)
            def _():
                sum_refs[p][...] = jnp.zeros_like(sum_refs[p])
                sq_refs[p][...] = jnp.zeros_like(sq_refs[p])

            z = pre_act(p, act_upto(p))                         # (tile_n, C_out) f32
            zm = jnp.where(valid, z, 0.0)                       # ignore padded rows
            sum_refs[p][...] += jnp.sum(zm, axis=0, keepdims=True)
            sq_refs[p][...] += jnp.sum(zm * zm, axis=0, keepdims=True)

            @pl.when(is_last)
            def _():
                mean = sum_refs[p][...] * inv_count
                var = jnp.maximum(sq_refs[p][...] * inv_count - mean * mean, 0.0)
                scale = g_refs[p][...] * lax.rsqrt(var + EPS)
                shift = be_refs[p][...] - mean * scale
                sum_refs[p][...] = scale       # scratch now holds the folded BN scale
                sq_refs[p][...] = shift        # scratch now holds the folded BN shift

    # ---- phase 5: full folded forward pass + streamed max over points ----
    @pl.when(phase == NUM_LAYERS)
    def _final_phase():
        @pl.when(is_first)
        def _():
            mx_ref[...] = jnp.full_like(mx_ref, -jnp.inf)

        h = act_upto(NUM_LAYERS)                                # (tile_n, F_pad) f32
        tile_max = jnp.max(jnp.where(valid, h, -jnp.inf),
                           axis=0, keepdims=True)               # (1, F_pad)
        b_rows = lax.broadcasted_iota(jnp.int32, (mx_ref.shape[0], 1), 0)
        upd = jnp.where(b_rows == b, tile_max, -jnp.inf)        # only this batch row
        mx_ref[...] = jnp.maximum(mx_ref[...], upd)

        @pl.when(is_last)
        def _():
            out_ref[...] = mx_ref[...]


def ae_encoder_forward(x, params, *, tile_n=1024, matmul_dtype=jnp.bfloat16):
    """x: (B, N, 3) float32; params: dict with w{i}, g{i}, be{i} (biases b{i} are ignored:
    under training-mode BatchNorm they are exact no-ops)."""
    B, N, c_in = x.shape
    assert c_in == 3
    feat_len = params["w5"].shape[1]
    f_pad = _round_up(feat_len, 128)                  # lane-dense output block

    # Row tile: multiple of 8 sublanes, capped by the (padded) point count.  1024 is a
    # safe default for v5e/v6e/v7x VMEM budgets; it can be raised on v6e (128 MiB VMEM).
    tile_n = int(min(_round_up(tile_n, 8), _round_up(N, 8)))
    n_pad = _round_up(N, tile_n)
    n_tiles = n_pad // tile_n

    x_pad = jnp.pad(x.astype(jnp.float32), ((0, 0), (0, n_pad - N), (0, 0)))

    # Collect weights / BN affine params; pad layer 5 channels to f_pad with zeros
    # (zero gamma/beta in padded columns -> those columns stay exactly 0 through BN+ReLU).
    w = [params[f"w{i}"].astype(jnp.float32) for i in range(1, 6)]
    g = [params[f"g{i}"].astype(jnp.float32) for i in range(1, 6)]
    be = [params[f"be{i}"].astype(jnp.float32) for i in range(1, 6)]
    if f_pad != feat_len:
        pad_c = f_pad - feat_len
        w[4] = jnp.pad(w[4], ((0, 0), (0, pad_c)))
        g[4] = jnp.pad(g[4], ((0, 0), (0, pad_c)))
        be[4] = jnp.pad(be[4], ((0, 0), (0, pad_c)))
    # MXU layers 2..5 use matmul_dtype operands (f32 accumulation); layer 1 stays f32 (VPU).
    w = [w[0]] + [wi.astype(matmul_dtype) for wi in w[1:]]
    c_outs = [wi.shape[1] for wi in w]                # 64, 64, 64, 128, f_pad

    inputs = [x_pad]
    in_specs = [pl.BlockSpec((1, tile_n, 3), lambda p, b, t: (b, t, 0))]
    for i in range(NUM_LAYERS):
        for arr in (w[i], g[i], be[i]):
            inputs.append(arr)
            # Constant index map -> parameters are DMA'd once and stay VMEM-resident.
            in_specs.append(pl.BlockSpec(arr.shape, lambda p, b, t: (0, 0)))

    scratch = []
    for c in c_outs:
        scratch.append(pltpu.VMEM((1, c), jnp.float32))    # sum(z)   -> folded scale
        scratch.append(pltpu.VMEM((1, c), jnp.float32))    # sum(z^2) -> folded shift
    scratch.append(pltpu.VMEM((B, f_pad), jnp.float32))    # running per-batch max

    kernel = functools.partial(_encoder_kernel, B, N, tile_n)

    out = pl.pallas_call(
        kernel,
        out_shape=jax.ShapeDtypeStruct((B, f_pad), jnp.float32),
        grid_spec=pltpu.PrefetchScalarGridSpec(
            num_scalar_prefetch=0,
            grid=(NUM_LAYERS + 1, B, n_tiles),
            in_specs=in_specs,
            out_specs=pl.BlockSpec((B, f_pad), lambda p, b, t: (0, 0)),
            scratch_shapes=scratch),
        compiler_params=pltpu.CompilerParams(
            # Accumulators (BN stats / running max) are shared across all steps -> sequential.
            dimension_semantics=("arbitrary", "arbitrary", "arbitrary"),
            vmem_limit_bytes=32 * 1024 * 1024),
    )(*inputs)

    return out[:, :feat_len]


def _init_params(key, feat_len):
    dims = [(3, 64), (64, 64), (64, 64), (64, 128), (128, feat_len)]
    params = {}
    for i, (cin, cout) in enumerate(dims, start=1):
        key, kw, kb, kg, kbe = jax.random.split(key, 5)
        params[f"w{i}"] = 0.1 * jax.random.normal(kw, (cin, cout), jnp.float32)
        params[f"b{i}"] = 0.1 * jax.random.normal(kb, (1, cout), jnp.float32)
        params[f"g{i}"] = 1.0 + 0.1 * jax.random.normal(kg, (1, cout), jnp.float32)
        params[f"be{i}"] = 0.1 * jax.random.normal(kbe, (1, cout), jnp.float32)
    return params


def _reference(x, params, matmul_dtype=jnp.float32):
    """Pure-JAX reference with training-mode BN.  Includes the conv biases to verify the
    kernel's bias-dropping (they cancel exactly under the BN mean subtraction)."""
    B, N, _ = x.shape
    h = x.reshape(B * N, 3).astype(jnp.float32)
    for i in range(1, 6):
        w = params[f"w{i}"]
        if i == 1:
            z = h @ w + params["b1"]
        else:
            z = jnp.dot(h.astype(matmul_dtype), w.astype(matmul_dtype),
                        preferred_element_type=jnp.float32) + params[f"b{i}"]
        mean = jnp.mean(z, axis=0, keepdims=True)
        var = jnp.mean((z - mean) ** 2, axis=0, keepdims=True)
        z = (z - mean) * lax.rsqrt(var + EPS)
        z = z * params[f"g{i}"] + params[f"be{i}"]
        h = jnp.maximum(z, 0.0)
    return jnp.max(h.reshape(B, N, -1), axis=1)


if __name__ == "__main__":
    B, N, FEAT_LEN = 2, 20, 32

    key = jax.random.PRNGKey(0)
    key, kx = jax.random.split(key)
    x = jax.random.normal(kx, (B, N, 3), jnp.float32)
    params = _init_params(key, FEAT_LEN)

    # 1) Exact-precision check (f32 MXU operands), multiple tiles per batch + padded rows.
    out_f32 = jax.block_until_ready(
        ae_encoder_forward(x, params, tile_n=8, matmul_dtype=jnp.float32))
    ref_f32 = jax.block_until_ready(_reference(x, params, jnp.float32))
    assert out_f32.shape == (B, FEAT_LEN)
    assert jnp.allclose(out_f32, ref_f32, atol=1e-4, rtol=1e-4), (
        float(jnp.max(jnp.abs(out_f32 - ref_f32))))

    # 2) Performance configuration (bf16 MXU operands), different tiling; compared against a
    #    matching bf16-matmul reference with a bf16-level tolerance.
    out_bf16 = jax.block_until_ready(
        ae_encoder_forward(x, params, tile_n=16, matmul_dtype=jnp.bfloat16))
    ref_bf16 = jax.block_until_ready(_reference(x, params, jnp.bfloat16))
    assert out_bf16.shape == (B, FEAT_LEN)
    assert jnp.allclose(out_bf16, ref_bf16, atol=5e-2, rtol=5e-2), (
        float(jnp.max(jnp.abs(out_bf16 - ref_bf16))))

    print("KERNEL_OK")
</pallas_src>

<mosaic_0001>
module attributes {stable_mosaic.version = 11 : i64} {
  func.func @_encoder_kernel(%arg0: i32, %arg1: i32, %arg2: i32, %arg3: memref<1x8x3xf32, #tpu.memory_space<vmem>>, %arg4: memref<3x64xf32, #tpu.memory_space<vmem>>, %arg5: memref<1x64xf32, #tpu.memory_space<vmem>>, %arg6: memref<1x64xf32, #tpu.memory_space<vmem>>, %arg7: memref<64x64xf32, #tpu.memory_space<vmem>>, %arg8: memref<1x64xf32, #tpu.memory_space<vmem>>, %arg9: memref<1x64xf32, #tpu.memory_space<vmem>>, %arg10: memref<64x64xf32, #tpu.memory_space<vmem>>, %arg11: memref<1x64xf32, #tpu.memory_space<vmem>>, %arg12: memref<1x64xf32, #tpu.memory_space<vmem>>, %arg13: memref<64x128xf32, #tpu.memory_space<vmem>>, %arg14: memref<1x128xf32, #tpu.memory_space<vmem>>, %arg15: memref<1x128xf32, #tpu.memory_space<vmem>>, %arg16: memref<128x128xf32, #tpu.memory_space<vmem>>, %arg17: memref<1x128xf32, #tpu.memory_space<vmem>>, %arg18: memref<1x128xf32, #tpu.memory_space<vmem>>, %arg19: memref<2x128xf32, #tpu.memory_space<vmem>>, %arg20: memref<1x64xf32, #tpu.memory_space<vmem>>, %arg21: memref<1x64xf32, #tpu.memory_space<vmem>>, %arg22: memref<1x64xf32, #tpu.memory_space<vmem>>, %arg23: memref<1x64xf32, #tpu.memory_space<vmem>>, %arg24: memref<1x64xf32, #tpu.memory_space<vmem>>, %arg25: memref<1x64xf32, #tpu.memory_space<vmem>>, %arg26: memref<1x128xf32, #tpu.memory_space<vmem>>, %arg27: memref<1x128xf32, #tpu.memory_space<vmem>>, %arg28: memref<1x128xf32, #tpu.memory_space<vmem>>, %arg29: memref<1x128xf32, #tpu.memory_space<vmem>>, %arg30: memref<2x128xf32, #tpu.memory_space<vmem>>) attributes {dimension_semantics = [#tpu.dimension_semantics<arbitrary>, #tpu.dimension_semantics<arbitrary>, #tpu.dimension_semantics<arbitrary>], iteration_bounds = array<i64: 6, 2, 3>, scalar_prefetch = 0 : i64, scratch_operands = 11 : i64, tpu.core_type = #tpu.core_type<tc>, window_params = [{transform_indices = @transform_0, window_bounds = array<i64: 1, 8, 3>}, {pipeline_mode = #tpu.pipeline_mode<synchronous>, transform_indices = @transform_1, window_bounds = array<i64: 3, 64>}, {pipeline_mode = #tpu.pipeline_mode<synchronous>, transform_indices = @transform_2, window_bounds = array<i64: 1, 64>}, {pipeline_mode = #tpu.pipeline_mode<synchronous>, transform_indices = @transform_3, window_bounds = array<i64: 1, 64>}, {pipeline_mode = #tpu.pipeline_mode<synchronous>, transform_indices = @transform_4, window_bounds = array<i64: 64, 64>}, {pipeline_mode = #tpu.pipeline_mode<synchronous>, transform_indices = @transform_5, window_bounds = array<i64: 1, 64>}, {pipeline_mode = #tpu.pipeline_mode<synchronous>, transform_indices = @transform_6, window_bounds = array<i64: 1, 64>}, {pipeline_mode = #tpu.pipeline_mode<synchronous>, transform_indices = @transform_7, window_bounds = array<i64: 64, 64>}, {pipeline_mode = #tpu.pipeline_mode<synchronous>, transform_indices = @transform_8, window_bounds = array<i64: 1, 64>}, {pipeline_mode = #tpu.pipeline_mode<synchronous>, transform_indices = @transform_9, window_bounds = array<i64: 1, 64>}, {pipeline_mode = #tpu.pipeline_mode<synchronous>, transform_indices = @transform_10, window_bounds = array<i64: 64, 128>}, {pipeline_mode = #tpu.pipeline_mode<synchronous>, transform_indices = @transform_11, window_bounds = array<i64: 1, 128>}, {pipeline_mode = #tpu.pipeline_mode<synchronous>, transform_indices = @transform_12, window_bounds = array<i64: 1, 128>}, {pipeline_mode = #tpu.pipeline_mode<synchronous>, transform_indices = @transform_13, window_bounds = array<i64: 128, 128>}, {pipeline_mode = #tpu.pipeline_mode<synchronous>, transform_indices = @transform_14, window_bounds = array<i64: 1, 128>}, {pipeline_mode = #tpu.pipeline_mode<synchronous>, transform_indices = @transform_15, window_bounds = array<i64: 1, 128>}, {pipeline_mode = #tpu.pipeline_mode<synchronous>, transform_indices = @transform_16, window_bounds = array<i64: 2, 128>}]} {
    %c0_i32 = arith.constant 0 : i32
    %0 = arith.cmpi eq, %arg1, %c0_i32 : i32
    %c0_i32_0 = arith.constant 0 : i32
    %1 = arith.cmpi eq, %arg2, %c0_i32_0 : i32
    %2 = arith.andi %0, %1 : i1
    %c1_i32 = arith.constant 1 : i32
    %3 = arith.cmpi eq, %arg1, %c1_i32 : i32
    %c2_i32 = arith.constant 2 : i32
    %4 = arith.cmpi eq, %arg2, %c2_i32 : i32
    %5 = arith.andi %3, %4 : i1
    %c0 = arith.constant 0 : index
    %c0_1 = arith.constant 0 : index
    %c0_2 = arith.constant 0 : index
    %6 = vector.load %arg3[%c0, %c0_1, %c0_2] : memref<1x8x3xf32, #tpu.memory_space<vmem>>, vector<1x8x3xf32>
    %7 = vector.shape_cast %6 : vector<1x8x3xf32> to vector<8x3xf32>
    %c8_i32 = arith.constant 8 : i32
    %8 = arith.muli %arg2, %c8_i32 : i32
    %9 = tpu.iota {dimensions = array<i32: 0>} : vector<8x1xi32>
    %10 = vector.broadcast %8 : i32 to vector<8x1xi32>
    %11 = arith.addi %10, %9 : vector<8x1xi32>
    %c20_i32 = arith.constant 20 : i32
    %12 = vector.broadcast %c20_i32 : i32 to vector<8x1xi32>
    %13 = arith.cmpi slt, %11, %12 : vector<8x1xi32>
    %c0_i32_3 = arith.constant 0 : i32
    %14 = arith.cmpi eq, %arg0, %c0_i32_3 : i32
    %15 = arith.extui %14 : i1 to i32
    %cst = arith.constant 2.500000e-02 : f32
    %c0_i32_4 = arith.constant 0 : i32
    %16 = arith.cmpi ne, %15, %c0_i32_4 : i32
    scf.if %16 {
      %32 = arith.extui %2 : i1 to i32
      %c0_i32_16 = arith.constant 0 : i32
      %33 = arith.cmpi ne, %32, %c0_i32_16 : i32
      scf.if %33 {
        %cst_31 = arith.constant 0.000000e+00 : f32
        %69 = vector.broadcast %cst_31 : f32 to vector<1x64xf32>
        %c0_32 = arith.constant 0 : index
        %c0_33 = arith.constant 0 : index
        %70 = vector.load %arg20[%c0_32, %c0_33] : memref<1x64xf32, #tpu.memory_space<vmem>>, vector<1x64xf32>
        tpu.vector_store %arg20[%c0_32, %c0_33], %69 {strides = array<i32>} : memref<1x64xf32, #tpu.memory_space<vmem>>, vector<1x64xf32>,
        %cst_34 = arith.constant 0.000000e+00 : f32
        %71 = vector.broadcast %cst_34 : f32 to vector<1x64xf32>
        %c0_35 = arith.constant 0 : index
        %c0_36 = arith.constant 0 : index
        %72 = vector.load %arg21[%c0_35, %c0_36] : memref<1x64xf32, #tpu.memory_space<vmem>>, vector<1x64xf32>
        tpu.vector_store %arg21[%c0_35, %c0_36], %71 {strides = array<i32>} : memref<1x64xf32, #tpu.memory_space<vmem>>, vector<1x64xf32>,
      } else {
      }
      %c0_17 = arith.constant 0 : index
      %c0_18 = arith.constant 0 : index
      %34 = vector.load %arg4[%c0_17, %c0_18] : memref<3x64xf32, #tpu.memory_space<vmem>>, vector<3x64xf32>
      %35 = vector.extract_strided_slice %7 {offsets = [0, 0], sizes = [8, 1], strides = [1, 1]} : vector<8x3xf32> to vector<8x1xf32>
      %36 = vector.extract_strided_slice %34 {offsets = [0, 0], sizes = [1, 64], strides = [1, 1]} : vector<3x64xf32> to vector<1x64xf32>
      %37 = vector.broadcast %35 : vector<8x1xf32> to vector<8x64xf32>
      %38 = vector.broadcast %36 : vector<1x64xf32> to vector<8x64xf32>
      %39 = arith.mulf %37, %38 : vector<8x64xf32>
      %40 = vector.extract_strided_slice %7 {offsets = [0, 1], sizes = [8, 1], strides = [1, 1]} : vector<8x3xf32> to vector<8x1xf32>
      %41 = vector.extract_strided_slice %34 {offsets = [1, 0], sizes = [1, 64], strides = [1, 1]} : vector<3x64xf32> to vector<1x64xf32>
      %42 = vector.broadcast %40 : vector<8x1xf32> to vector<8x64xf32>
      %43 = vector.broadcast %41 : vector<1x64xf32> to vector<8x64xf32>
      %44 = arith.mulf %42, %43 : vector<8x64xf32>
      %45 = arith.addf %39, %44 : vector<8x64xf32>
      %46 = vector.extract_strided_slice %7 {offsets = [0, 2], sizes = [8, 1], strides = [1, 1]} : vector<8x3xf32> to vector<8x1xf32>
      %47 = vector.extract_strided_slice %34 {offsets = [2, 0], sizes = [1, 64], strides = [1, 1]} : vector<3x64xf32> to vector<1x64xf32>
      %48 = vector.broadcast %46 : vector<8x1xf32> to vector<8x64xf32>
      %49 = vector.broadcast %47 : vector<1x64xf32> to vector<8x64xf32>
      %50 = arith.mulf %48, %49 : vector<8x64xf32>
      %51 = arith.addf %45, %50 : vector<8x64xf32>
      %cst_19 = arith.constant 0.000000e+00 : f32
      %52 = vector.shape_cast %13 : vector<8x1xi1> to vector<8x1xi1>
      %53 = vector.broadcast %52 : vector<8x1xi1> to vector<8x64xi1>
      %54 = vector.broadcast %cst_19 : f32 to vector<8x64xf32>
      %55 = arith.select %53, %51, %54 : vector<8x64xi1>, vector<8x64xf32>
      %c0_20 = arith.constant 0 : index
      %c0_21 = arith.constant 0 : index
      %56 = vector.load %arg20[%c0_20, %c0_21] : memref<1x64xf32, #tpu.memory_space<vmem>>, vector<1x64xf32>
      %cst_22 = arith.constant dense<0.000000e+00> : vector<64xf32>
      %57 = vector.multi_reduction <add>, %55, %cst_22 [0] : vector<8x64xf32> to vector<64xf32>
      %58 = vector.shape_cast %57 : vector<64xf32> to vector<1x64xf32>
      %59 = arith.addf %56, %58 : vector<1x64xf32>
      %c0_23 = arith.constant 0 : index
      %c0_24 = arith.constant 0 : index
      %60 = vector.load %arg20[%c0_23, %c0_24] : memref<1x64xf32, #tpu.memory_space<vmem>>, vector<1x64xf32>
      tpu.vector_store %arg20[%c0_23, %c0_24], %59 {strides = array<i32>} : memref<1x64xf32, #tpu.memory_space<vmem>>, vector<1x64xf32>,
      %c0_25 = arith.constant 0 : index
      %c0_26 = arith.constant 0 : index
      %61 = vector.load %arg21[%c0_25, %c0_26] : memref<1x64xf32, #tpu.memory_space<vmem>>, vector<1x64xf32>
      %62 = arith.mulf %55, %55 : vector<8x64xf32>
      %cst_27 = arith.constant dense<0.000000e+00> : vector<64xf32>
      %63 = vector.multi_reduction <add>, %62, %cst_27 [0] : vector<8x64xf32> to vector<64xf32>
      %64 = vector.shape_cast %63 : vector<64xf32> to vector<1x64xf32>
      %65 = arith.addf %61, %64 : vector<1x64xf32>
      %c0_28 = arith.constant 0 : index
      %c0_29 = arith.constant 0 : index
      %66 = vector.load %arg21[%c0_28, %c0_29] : memref<1x64xf32, #tpu.memory_space<vmem>>, vector<1x64xf32>
      tpu.vector_store %arg21[%c0_28, %c0_29], %65 {strides = array<i32>} : memref<1x64xf32, #tpu.memory_space<vmem>>, vector<1x64xf32>,
      %67 = arith.extui %5 : i1 to i32
      %c0_i32_30 = arith.constant 0 : i32
      %68 = arith.cmpi ne, %67, %c0_i32_30 : i32
      scf.if %68 {
        %c0_31 = arith.constant 0 : index
        %c0_32 = arith.constant 0 : index
        %69 = vector.load %arg20[%c0_31, %c0_32] : memref<1x64xf32, #tpu.memory_space<vmem>>, vector<1x64xf32>
        %70 = vector.broadcast %cst : f32 to vector<1x64xf32>
        %71 = arith.mulf %69, %70 : vector<1x64xf32>
        %c0_33 = arith.constant 0 : index
        %c0_34 = arith.constant 0 : index
        %72 = vector.load %arg21[%c0_33, %c0_34] : memref<1x64xf32, #tpu.memory_space<vmem>>, vector<1x64xf32>
        %73 = vector.broadcast %cst : f32 to vector<1x64xf32>
        %74 = arith.mulf %72, %73 : vector<1x64xf32>
        %75 = arith.mulf %71, %71 : vector<1x64xf32>
        %76 = arith.subf %74, %75 : vector<1x64xf32>
        %cst_35 = arith.constant 0.000000e+00 : f32
        %77 = vector.broadcast %cst_35 : f32 to vector<1x64xf32>
        %78 = arith.maximumf %76, %77 : vector<1x64xf32>
        %c0_36 = arith.constant 0 : index
        %c0_37 = arith.constant 0 : index
        %79 = vector.load %arg5[%c0_36, %c0_37] : memref<1x64xf32, #tpu.memory_space<vmem>>, vector<1x64xf32>
        %cst_38 = arith.constant 9.99999974E-6 : f32
        %80 = vector.broadcast %cst_38 : f32 to vector<1x64xf32>
        %81 = arith.addf %78, %80 : vector<1x64xf32>
        %82 = math.rsqrt %81 : vector<1x64xf32>
        %83 = arith.mulf %79, %82 : vector<1x64xf32>
        %c0_39 = arith.constant 0 : index
        %c0_40 = arith.constant 0 : index
        %84 = vector.load %arg6[%c0_39, %c0_40] : memref<1x64xf32, #tpu.memory_space<vmem>>, vector<1x64xf32>
        %85 = arith.mulf %71, %83 : vector<1x64xf32>
        %86 = arith.subf %84, %85 : vector<1x64xf32>
        %c0_41 = arith.constant 0 : index
        %c0_42 = arith.constant 0 : index
        %87 = vector.load %arg20[%c0_41, %c0_42] : memref<1x64xf32, #tpu.memory_space<vmem>>, vector<1x64xf32>
        tpu.vector_store %arg20[%c0_41, %c0_42], %83 {strides = array<i32>} : memref<1x64xf32, #tpu.memory_space<vmem>>, vector<1x64xf32>,
        %c0_43 = arith.constant 0 : index
        %c0_44 = arith.constant 0 : index
        %88 = vector.load %arg21[%c0_43, %c0_44] : memref<1x64xf32, #tpu.memory_space<vmem>>, vector<1x64xf32>
        tpu.vector_store %arg21[%c0_43, %c0_44], %86 {strides = array<i32>} : memref<1x64xf32, #tpu.memory_space<vmem>>, vector<1x64xf32>,
      } else {
      }
    } else {
    }
    %c1_i32_5 = arith.constant 1 : i32
    %17 = arith.cmpi eq, %arg0, %c1_i32_5 : i32
    %18 = arith.extui %17 : i1 to i32
    %cst_6 = arith.constant 2.500000e-02 : f32
    %c0_i32_7 = arith.constant 0 : i32
    %19 = arith.cmpi ne, %18, %c0_i32_7 : i32
    scf.if %19 {
      %32 = arith.extui %2 : i1 to i32
      %c0_i32_16 = arith.constant 0 : i32
      %33 = arith.cmpi ne, %32, %c0_i32_16 : i32
      scf.if %33 {
        %cst_39 = arith.constant 0.000000e+00 : f32
        %79 = vector.broadcast %cst_39 : f32 to vector<1x64xf32>
        %c0_40 = arith.constant 0 : index
        %c0_41 = arith.constant 0 : index
        %80 = vector.load %arg22[%c0_40, %c0_41] : memref<1x64xf32, #tpu.memory_space<vmem>>, vector<1x64xf32>
        tpu.vector_store %arg22[%c0_40, %c0_41], %79 {strides = array<i32>} : memref<1x64xf32, #tpu.memory_space<vmem>>, vector<1x64xf32>,
        %cst_42 = arith.constant 0.000000e+00 : f32
        %81 = vector.broadcast %cst_42 : f32 to vector<1x64xf32>
        %c0_43 = arith.constant 0 : index
        %c0_44 = arith.constant 0 : index
        %82 = vector.load %arg23[%c0_43, %c0_44] : memref<1x64xf32, #tpu.memory_space<vmem>>, vector<1x64xf32>
        tpu.vector_store %arg23[%c0_43, %c0_44], %81 {strides = array<i32>} : memref<1x64xf32, #tpu.memory_space<vmem>>, vector<1x64xf32>,
      } else {
      }
      %c0_17 = arith.constant 0 : index
      %c0_18 = arith.constant 0 : index
      %34 = vector.load %arg4[%c0_17, %c0_18] : memref<3x64xf32, #tpu.memory_space<vmem>>, vector<3x64xf32>
      %35 = vector.extract_strided_slice %7 {offsets = [0, 0], sizes = [8, 1], strides = [1, 1]} : vector<8x3xf32> to vector<8x1xf32>
      %36 = vector.extract_strided_slice %34 {offsets = [0, 0], sizes = [1, 64], strides = [1, 1]} : vector<3x64xf32> to vector<1x64xf32>
      %37 = vector.broadcast %35 : vector<8x1xf32> to vector<8x64xf32>
      %38 = vector.broadcast %36 : vector<1x64xf32> to vector<8x64xf32>
      %39 = arith.mulf %37, %38 : vector<8x64xf32>
      %40 = vector.extract_strided_slice %7 {offsets = [0, 1], sizes = [8, 1], strides = [1, 1]} : vector<8x3xf32> to vector<8x1xf32>
      %41 = vector.extract_strided_slice %34 {offsets = [1, 0], sizes = [1, 64], strides = [1, 1]} : vector<3x64xf32> to vector<1x64xf32>
      %42 = vector.broadcast %40 : vector<8x1xf32> to vector<8x64xf32>
      %43 = vector.broadcast %41 : vector<1x64xf32> to vector<8x64xf32>
      %44 = arith.mulf %42, %43 : vector<8x64xf32>
      %45 = arith.addf %39, %44 : vector<8x64xf32>
      %46 = vector.extract_strided_slice %7 {offsets = [0, 2], sizes = [8, 1], strides = [1, 1]} : vector<8x3xf32> to vector<8x1xf32>
      %47 = vector.extract_strided_slice %34 {offsets = [2, 0], sizes = [1, 64], strides = [1, 1]} : vector<3x64xf32> to vector<1x64xf32>
      %48 = vector.broadcast %46 : vector<8x1xf32> to vector<8x64xf32>
      %49 = vector.broadcast %47 : vector<1x64xf32> to vector<8x64xf32>
      %50 = arith.mulf %48, %49 : vector<8x64xf32>
      %51 = arith.addf %45, %50 : vector<8x64xf32>
      %c0_19 = arith.constant 0 : index
      %c0_20 = arith.constant 0 : index
      %52 = vector.load %arg20[%c0_19, %c0_20] : memref<1x64xf32, #tpu.memory_space<vmem>>, vector<1x64xf32>
      %53 = vector.broadcast %52 : vector<1x64xf32> to vector<8x64xf32>
      %54 = arith.mulf %51, %53 : vector<8x64xf32>
      %c0_21 = arith.constant 0 : index
      %c0_22 = arith.constant 0 : index
      %55 = vector.load %arg21[%c0_21, %c0_22] : memref<1x64xf32, #tpu.memory_space<vmem>>, vector<1x64xf32>
      %56 = vector.broadcast %55 : vector<1x64xf32> to vector<8x64xf32>
      %57 = arith.addf %54, %56 : vector<8x64xf32>
      %cst_23 = arith.constant 0.000000e+00 : f32
      %58 = vector.broadcast %cst_23 : f32 to vector<8x64xf32>
      %59 = arith.maximumf %57, %58 : vector<8x64xf32>
      %c0_24 = arith.constant 0 : index
      %c0_25 = arith.constant 0 : index
      %60 = vector.load %arg7[%c0_24, %c0_25] : memref<64x64xf32, #tpu.memory_space<vmem>>, vector<64x64xf32>
      %cst_26 = arith.constant dense<0.000000e+00> : vector<8x64xf32>
      %61 = tpu.matmul %59, %60, %cst_26 {dimension_numbers = #tpu.dot_dimension_numbers<[1], [0], [0], [1], [0, 0, 1, 1], [], []>} : vector<8x64xf32>, vector<64x64xf32>, vector<8x64xf32> -> vector<8x64xf32>
      %cst_27 = arith.constant 0.000000e+00 : f32
      %62 = vector.shape_cast %13 : vector<8x1xi1> to vector<8x1xi1>
      %63 = vector.broadcast %62 : vector<8x1xi1> to vector<8x64xi1>
      %64 = vector.broadcast %cst_27 : f32 to vector<8x64xf32>
      %65 = arith.select %63, %61, %64 : vector<8x64xi1>, vector<8x64xf32>
      %c0_28 = arith.constant 0 : index
      %c0_29 = arith.constant 0 : index
      %66 = vector.load %arg22[%c0_28, %c0_29] : memref<1x64xf32, #tpu.memory_space<vmem>>, vector<1x64xf32>
      %cst_30 = arith.constant dense<0.000000e+00> : vector<64xf32>
      %67 = vector.multi_reduction <add>, %65, %cst_30 [0] : vector<8x64xf32> to vector<64xf32>
      %68 = vector.shape_cast %67 : vector<64xf32> to vector<1x64xf32>
      %69 = arith.addf %66, %68 : vector<1x64xf32>
      %c0_31 = arith.constant 0 : index
      %c0_32 = arith.constant 0 : index
      %70 = vector.load %arg22[%c0_31, %c0_32] : memref<1x64xf32, #tpu.memory_space<vmem>>, vector<1x64xf32>
      tpu.vector_store %arg22[%c0_31, %c0_32], %69 {strides = array<i32>} : memref<1x64xf32, #tpu.memory_space<vmem>>, vector<1x64xf32>,
      %c0_33 = arith.constant 0 : index
      %c0_34 = arith.constant 0 : index
      %71 = vector.load %arg23[%c0_33, %c0_34] : memref<1x64xf32, #tpu.memory_space<vmem>>, vector<1x64xf32>
      %72 = arith.mulf %65, %65 : vector<8x64xf32>
      %cst_35 = arith.constant dense<0.000000e+00> : vector<64xf32>
      %73 = vector.multi_reduction <add>, %72, %cst_35 [0] : vector<8x64xf32> to vector<64xf32>
      %74 = vector.shape_cast %73 : vector<64xf32> to vector<1x64xf32>
      %75 = arith.addf %71, %74 : vector<1x64xf32>
      %c0_36 = arith.constant 0 : index
      %c0_37 = arith.constant 0 : index
      %76 = vector.load %arg23[%c0_36, %c0_37] : memref<1x64xf32, #tpu.memory_space<vmem>>, vector<1x64xf32>
      tpu.vector_store %arg23[%c0_36, %c0_37], %75 {strides = array<i32>} : memref<1x64xf32, #tpu.memory_space<vmem>>, vector<1x64xf32>,
      %77 = arith.extui %5 : i1 to i32
      %c0_i32_38 = arith.constant 0 : i32
      %78 = arith.cmpi ne, %77, %c0_i32_38 : i32
      scf.if %78 {
        %c0_39 = arith.constant 0 : index
        %c0_40 = arith.constant 0 : index
        %79 = vector.load %arg22[%c0_39, %c0_40] : memref<1x64xf32, #tpu.memory_space<vmem>>, vector<1x64xf32>
        %80 = vector.broadcast %cst_6 : f32 to vector<1x64xf32>
        %81 = arith.mulf %79, %80 : vector<1x64xf32>
        %c0_41 = arith.constant 0 : index
        %c0_42 = arith.constant 0 : index
        %82 = vector.load %arg23[%c0_41, %c0_42] : memref<1x64xf32, #tpu.memory_space<vmem>>, vector<1x64xf32>
        %83 = vector.broadcast %cst_6 : f32 to vector<1x64xf32>
        %84 = arith.mulf %82, %83 : vector<1x64xf32>
        %85 = arith.mulf %81, %81 : vector<1x64xf32>
        %86 = arith.subf %84, %85 : vector<1x64xf32>
        %cst_43 = arith.constant 0.000000e+00 : f32
        %87 = vector.broadcast %cst_43 : f32 to vector<1x64xf32>
        %88 = arith.maximumf %86, %87 : vector<1x64xf32>
        %c0_44 = arith.constant 0 : index
        %c0_45 = arith.constant 0 : index
        %89 = vector.load %arg8[%c0_44, %c0_45] : memref<1x64xf32, #tpu.memory_space<vmem>>, vector<1x64xf32>
        %cst_46 = arith.constant 9.99999974E-6 : f32
        %90 = vector.broadcast %cst_46 : f32 to vector<1x64xf32>
        %91 = arith.addf %88, %90 : vector<1x64xf32>
        %92 = math.rsqrt %91 : vector<1x64xf32>
        %93 = arith.mulf %89, %92 : vector<1x64xf32>
        %c0_47 = arith.constant 0 : index
        %c0_48 = arith.constant 0 : index
        %94 = vector.load %arg9[%c0_47, %c0_48] : memref<1x64xf32, #tpu.memory_space<vmem>>, vector<1x64xf32>
        %95 = arith.mulf %81, %93 : vector<1x64xf32>
        %96 = arith.subf %94, %95 : vector<1x64xf32>
        %c0_49 = arith.constant 0 : index
        %c0_50 = arith.constant 0 : index
        %97 = vector.load %arg22[%c0_49, %c0_50] : memref<1x64xf32, #tpu.memory_space<vmem>>, vector<1x64xf32>
        tpu.vector_store %arg22[%c0_49, %c0_50], %93 {strides = array<i32>} : memref<1x64xf32, #tpu.memory_space<vmem>>, vector<1x64xf32>,
        %c0_51 = arith.constant 0 : index
        %c0_52 = arith.constant 0 : index
        %98 = vector.load %arg23[%c0_51, %c0_52] : memref<1x64xf32, #tpu.memory_space<vmem>>, vector<1x64xf32>
        tpu.vector_store %arg23[%c0_51, %c0_52], %96 {strides = array<i32>} : memref<1x64xf32, #tpu.memory_space<vmem>>, vector<1x64xf32>,
      } else {
      }
    } else {
    }
    %c2_i32_8 = arith.constant 2 : i32
    %20 = arith.cmpi eq, %arg0, %c2_i32_8 : i32
    %21 = arith.extui %20 : i1 to i32
    %cst_9 = arith.constant 2.500000e-02 : f32
    %c0_i32_10 = arith.constant 0 : i32
    %22 = arith.cmpi ne, %21, %c0_i32_10 : i32
    scf.if %22 {
      %32 = arith.extui %2 : i1 to i32
      %c0_i32_16 = arith.constant 0 : i32
      %33 = arith.cmpi ne, %32, %c0_i32_16 : i32
      scf.if %33 {
        %cst_47 = arith.constant 0.000000e+00 : f32
        %89 = vector.broadcast %cst_47 : f32 to vector<1x64xf32>
        %c0_48 = arith.constant 0 : index
        %c0_49 = arith.constant 0 : index
        %90 = vector.load %arg24[%c0_48, %c0_49] : memref<1x64xf32, #tpu.memory_space<vmem>>, vector<1x64xf32>
        tpu.vector_store %arg24[%c0_48, %c0_49], %89 {strides = array<i32>} : memref<1x64xf32, #tpu.memory_space<vmem>>, vector<1x64xf32>,
        %cst_50 = arith.constant 0.000000e+00 : f32
        %91 = vector.broadcast %cst_50 : f32 to vector<1x64xf32>
        %c0_51 = arith.constant 0 : index
        %c0_52 = arith.constant 0 : index
        %92 = vector.load %arg25[%c0_51, %c0_52] : memref<1x64xf32, #tpu.memory_space<vmem>>, vector<1x64xf32>
        tpu.vector_store %arg25[%c0_51, %c0_52], %91 {strides = array<i32>} : memref<1x64xf32, #tpu.memory_space<vmem>>, vector<1x64xf32>,
      } else {
      }
      %c0_17 = arith.constant 0 : index
      %c0_18 = arith.constant 0 : index
      %34 = vector.load %arg4[%c0_17, %c0_18] : memref<3x64xf32, #tpu.memory_space<vmem>>, vector<3x64xf32>
      %35 = vector.extract_strided_slice %7 {offsets = [0, 0], sizes = [8, 1], strides = [1, 1]} : vector<8x3xf32> to vector<8x1xf32>
      %36 = vector.extract_strided_slice %34 {offsets = [0, 0], sizes = [1, 64], strides = [1, 1]} : vector<3x64xf32> to vector<1x64xf32>
      %37 = vector.broadcast %35 : vector<8x1xf32> to vector<8x64xf32>
      %38 = vector.broadcast %36 : vector<1x64xf32> to vector<8x64xf32>
      %39 = arith.mulf %37, %38 : vector<8x64xf32>
      %40 = vector.extract_strided_slice %7 {offsets = [0, 1], sizes = [8, 1], strides = [1, 1]} : vector<8x3xf32> to vector<8x1xf32>
      %41 = vector.extract_strided_slice %34 {offsets = [1, 0], sizes = [1, 64], strides = [1, 1]} : vector<3x64xf32> to vector<1x64xf32>
      %42 = vector.broadcast %40 : vector<8x1xf32> to vector<8x64xf32>
      %43 = vector.broadcast %41 : vector<1x64xf32> to vector<8x64xf32>
      %44 = arith.mulf %42, %43 : vector<8x64xf32>
      %45 = arith.addf %39, %44 : vector<8x64xf32>
      %46 = vector.extract_strided_slice %7 {offsets = [0, 2], sizes = [8, 1], strides = [1, 1]} : vector<8x3xf32> to vector<8x1xf32>
      %47 = vector.extract_strided_slice %34 {offsets = [2, 0], sizes = [1, 64], strides = [1, 1]} : vector<3x64xf32> to vector<1x64xf32>
      %48 = vector.broadcast %46 : vector<8x1xf32> to vector<8x64xf32>
      %49 = vector.broadcast %47 : vector<1x64xf32> to vector<8x64xf32>
      %50 = arith.mulf %48, %49 : vector<8x64xf32>
      %51 = arith.addf %45, %50 : vector<8x64xf32>
      %c0_19 = arith.constant 0 : index
      %c0_20 = arith.constant 0 : index
      %52 = vector.load %arg20[%c0_19, %c0_20] : memref<1x64xf32, #tpu.memory_space<vmem>>, vector<1x64xf32>
      %53 = vector.broadcast %52 : vector<1x64xf32> to vector<8x64xf32>
      %54 = arith.mulf %51, %53 : vector<8x64xf32>
      %c0_21 = arith.constant 0 : index
      %c0_22 = arith.constant 0 : index
      %55 = vector.load %arg21[%c0_21, %c0_22] : memref<1x64xf32, #tpu.memory_space<vmem>>, vector<1x64xf32>
      %56 = vector.broadcast %55 : vector<1x64xf32> to vector<8x64xf32>
      %57 = arith.addf %54, %56 : vector<8x64xf32>
      %cst_23 = arith.constant 0.000000e+00 : f32
      %58 = vector.broadcast %cst_23 : f32 to vector<8x64xf32>
      %59 = arith.maximumf %57, %58 : vector<8x64xf32>
      %c0_24 = arith.constant 0 : index
      %c0_25 = arith.constant 0 : index
      %60 = vector.load %arg7[%c0_24, %c0_25] : memref<64x64xf32, #tpu.memory_space<vmem>>, vector<64x64xf32>
      %cst_26 = arith.constant dense<0.000000e+00> : vector<8x64xf32>
      %61 = tpu.matmul %59, %60, %cst_26 {dimension_numbers = #tpu.dot_dimension_numbers<[1], [0], [0], [1], [0, 0, 1, 1], [], []>} : vector<8x64xf32>, vector<64x64xf32>, vector<8x64xf32> -> vector<8x64xf32>
      %c0_27 = arith.constant 0 : index
      %c0_28 = arith.constant 0 : index
      %62 = vector.load %arg22[%c0_27, %c0_28] : memref<1x64xf32, #tpu.memory_space<vmem>>, vector<1x64xf32>
      %63 = vector.broadcast %62 : vector<1x64xf32> to vector<8x64xf32>
      %64 = arith.mulf %61, %63 : vector<8x64xf32>
      %c0_29 = arith.constant 0 : index
      %c0_30 = arith.constant 0 : index
      %65 = vector.load %arg23[%c0_29, %c0_30] : memref<1x64xf32, #tpu.memory_space<vmem>>, vector<1x64xf32>
      %66 = vector.broadcast %65 : vector<1x64xf32> to vector<8x64xf32>
      %67 = arith.addf %64, %66 : vector<8x64xf32>
      %cst_31 = arith.constant 0.000000e+00 : f32
      %68 = vector.broadcast %cst_31 : f32 to vector<8x64xf32>
      %69 = arith.maximumf %67, %68 : vector<8x64xf32>
      %c0_32 = arith.constant 0 : index
      %c0_33 = arith.constant 0 : index
      %70 = vector.load %arg10[%c0_32, %c0_33] : memref<64x64xf32, #tpu.memory_space<vmem>>, vector<64x64xf32>
      %cst_34 = arith.constant dense<0.000000e+00> : vector<8x64xf32>
      %71 = tpu.matmul %69, %70, %cst_34 {dimension_numbers = #tpu.dot_dimension_numbers<[1], [0], [0], [1], [0, 0, 1, 1], [], []>} : vector<8x64xf32>, vector<64x64xf32>, vector<8x64xf32> -> vector<8x64xf32>
      %cst_35 = arith.constant 0.000000e+00 : f32
      %72 = vector.shape_cast %13 : vector<8x1xi1> to vector<8x1xi1>
      %73 = vector.broadcast %72 : vector<8x1xi1> to vector<8x64xi1>
      %74 = vector.broadcast %cst_35 : f32 to vector<8x64xf32>
      %75 = arith.select %73, %71, %74 : vector<8x64xi1>, vector<8x64xf32>
      %c0_36 = arith.constant 0 : index
      %c0_37 = arith.constant 0 : index
      %76 = vector.load %arg24[%c0_36, %c0_37] : memref<1x64xf32, #tpu.memory_space<vmem>>, vector<1x64xf32>
      %cst_38 = arith.constant dense<0.000000e+00> : vector<64xf32>
      %77 = vector.multi_reduction <add>, %75, %cst_38 [0] : vector<8x64xf32> to vector<64xf32>
      %78 = vector.shape_cast %77 : vector<64xf32> to vector<1x64xf32>
      %79 = arith.addf %76, %78 : vector<1x64xf32>
      %c0_39 = arith.constant 0 : index
      %c0_40 = arith.constant 0 : index
      %80 = vector.load %arg24[%c0_39, %c0_40] : memref<1x64xf32, #tpu.memory_space<vmem>>, vector<1x64xf32>
      tpu.vector_store %arg24[%c0_39, %c0_40], %79 {strides = array<i32>} : memref<1x64xf32, #tpu.memory_space<vmem>>, vector<1x64xf32>,
      %c0_41 = arith.constant 0 : index
      %c0_42 = arith.constant 0 : index
      %81 = vector.load %arg25[%c0_41, %c0_42] : memref<1x64xf32, #tpu.memory_space<vmem>>, vector<1x64xf32>
      %82 = arith.mulf %75, %75 : vector<8x64xf32>
      %cst_43 = arith.constant dense<0.000000e+00> : vector<64xf32>
      %83 = vector.multi_reduction <add>, %82, %cst_43 [0] : vector<8x64xf32> to vector<64xf32>
      %84 = vector.shape_cast %83 : vector<64xf32> to vector<1x64xf32>
      %85 = arith.addf %81, %84 : vector<1x64xf32>
      %c0_44 = arith.constant 0 : index
      %c0_45 = arith.constant 0 : index
      %86 = vector.load %arg25[%c0_44, %c0_45] : memref<1x64xf32, #tpu.memory_space<vmem>>, vector<1x64xf32>
      tpu.vector_store %arg25[%c0_44, %c0_45], %85 {strides = array<i32>} : memref<1x64xf32, #tpu.memory_space<vmem>>, vector<1x64xf32>,
      %87 = arith.extui %5 : i1 to i32
      %c0_i32_46 = arith.constant 0 : i32
      %88 = arith.cmpi ne, %87, %c0_i32_46 : i32
      scf.if %88 {
        %c0_47 = arith.constant 0 : index
        %c0_48 = arith.constant 0 : index
        %89 = vector.load %arg24[%c0_47, %c0_48] : memref<1x64xf32, #tpu.memory_space<vmem>>, vector<1x64xf32>
        %90 = vector.broadcast %cst_9 : f32 to vector<1x64xf32>
        %91 = arith.mulf %89, %90 : vector<1x64xf32>
        %c0_49 = arith.constant 0 : index
        %c0_50 = arith.constant 0 : index
        %92 = vector.load %arg25[%c0_49, %c0_50] : memref<1x64xf32, #tpu.memory_space<vmem>>, vector<1x64xf32>
        %93 = vector.broadcast %cst_9 : f32 to vector<1x64xf32>
        %94 = arith.mulf %92, %93 : vector<1x64xf32>
        %95 = arith.mulf %91, %91 : vector<1x64xf32>
        %96 = arith.subf %94, %95 : vector<1x64xf32>
        %cst_51 = arith.constant 0.000000e+00 : f32
        %97 = vector.broadcast %cst_51 : f32 to vector<1x64xf32>
        %98 = arith.maximumf %96, %97 : vector<1x64xf32>
        %c0_52 = arith.constant 0 : index
        %c0_53 = arith.constant 0 : index
        %99 = vector.load %arg11[%c0_52, %c0_53] : memref<1x64xf32, #tpu.memory_space<vmem>>, vector<1x64xf32>
        %cst_54 = arith.constant 9.99999974E-6 : f32
        %100 = vector.broadcast %cst_54 : f32 to vector<1x64xf32>
        %101 = arith.addf %98, %100 : vector<1x64xf32>
        %102 = math.rsqrt %101 : vector<1x64xf32>
        %103 = arith.mulf %99, %102 : vector<1x64xf32>
        %c0_55 = arith.constant 0 : index
        %c0_56 = arith.constant 0 : index
        %104 = vector.load %arg12[%c0_55, %c0_56] : memref<1x64xf32, #tpu.memory_space<vmem>>, vector<1x64xf32>
        %105 = arith.mulf %91, %103 : vector<1x64xf32>
        %106 = arith.subf %104, %105 : vector<1x64xf32>
        %c0_57 = arith.constant 0 : index
        %c0_58 = arith.constant 0 : index
        %107 = vector.load %arg24[%c0_57, %c0_58] : memref<1x64xf32, #tpu.memory_space<vmem>>, vector<1x64xf32>
        tpu.vector_store %arg24[%c0_57, %c0_58], %103 {strides = array<i32>} : memref<1x64xf32, #tpu.memory_space<vmem>>, vector<1x64xf32>,
        %c0_59 = arith.constant 0 : index
        %c0_60 = arith.constant 0 : index
        %108 = vector.load %arg25[%c0_59, %c0_60] : memref<1x64xf32, #tpu.memory_space<vmem>>, vector<1x64xf32>
        tpu.vector_store %arg25[%c0_59, %c0_60], %106 {strides = array<i32>} : memref<1x64xf32, #tpu.memory_space<vmem>>, vector<1x64xf32>,
      } else {
      }
    } else {
    }
    %c3_i32 = arith.constant 3 : i32
    %23 = arith.cmpi eq, %arg0, %c3_i32 : i32
    %24 = arith.extui %23 : i1 to i32
    %cst_11 = arith.constant 2.500000e-02 : f32
    %c0_i32_12 = arith.constant 0 : i32
    %25 = arith.cmpi ne, %24, %c0_i32_12 : i32
    scf.if %25 {
      %32 = arith.extui %2 : i1 to i32
      %c0_i32_16 = arith.constant 0 : i32
      %33 = arith.cmpi ne, %32, %c0_i32_16 : i32
      scf.if %33 {
        %cst_55 = arith.constant 0.000000e+00 : f32
        %99 = vector.broadcast %cst_55 : f32 to vector<1x128xf32>
        %c0_56 = arith.constant 0 : index
        %c0_57 = arith.constant 0 : index
        %100 = vector.load %arg26[%c0_56, %c0_57] : memref<1x128xf32, #tpu.memory_space<vmem>>, vector<1x128xf32>
        tpu.vector_store %arg26[%c0_56, %c0_57], %99 {strides = array<i32>} : memref<1x128xf32, #tpu.memory_space<vmem>>, vector<1x128xf32>,
        %cst_58 = arith.constant 0.000000e+00 : f32
        %101 = vector.broadcast %cst_58 : f32 to vector<1x128xf32>
        %c0_59 = arith.constant 0 : index
        %c0_60 = arith.constant 0 : index
        %102 = vector.load %arg27[%c0_59, %c0_60] : memref<1x128xf32, #tpu.memory_space<vmem>>, vector<1x128xf32>
        tpu.vector_store %arg27[%c0_59, %c0_60], %101 {strides = array<i32>} : memref<1x128xf32, #tpu.memory_space<vmem>>, vector<1x128xf32>,
      } else {
      }
      %c0_17 = arith.constant 0 : index
      %c0_18 = arith.constant 0 : index
      %34 = vector.load %arg4[%c0_17, %c0_18] : memref<3x64xf32, #tpu.memory_space<vmem>>, vector<3x64xf32>
      %35 = vector.extract_strided_slice %7 {offsets = [0, 0], sizes = [8, 1], strides = [1, 1]} : vector<8x3xf32> to vector<8x1xf32>
      %36 = vector.extract_strided_slice %34 {offsets = [0, 0], sizes = [1, 64], strides = [1, 1]} : vector<3x64xf32> to vector<1x64xf32>
      %37 = vector.broadcast %35 : vector<8x1xf32> to vector<8x64xf32>
      %38 = vector.broadcast %36 : vector<1x64xf32> to vector<8x64xf32>
      %39 = arith.mulf %37, %38 : vector<8x64xf32>
      %40 = vector.extract_strided_slice %7 {offsets = [0, 1], sizes = [8, 1], strides = [1, 1]} : vector<8x3xf32> to vector<8x1xf32>
      %41 = vector.extract_strided_slice %34 {offsets = [1, 0], sizes = [1, 64], strides = [1, 1]} : vector<3x64xf32> to vector<1x64xf32>
      %42 = vector.broadcast %40 : vector<8x1xf32> to vector<8x64xf32>
      %43 = vector.broadcast %41 : vector<1x64xf32> to vector<8x64xf32>
      %44 = arith.mulf %42, %43 : vector<8x64xf32>
      %45 = arith.addf %39, %44 : vector<8x64xf32>
      %46 = vector.extract_strided_slice %7 {offsets = [0, 2], sizes = [8, 1], strides = [1, 1]} : vector<8x3xf32> to vector<8x1xf32>
      %47 = vector.extract_strided_slice %34 {offsets = [2, 0], sizes = [1, 64], strides = [1, 1]} : vector<3x64xf32> to vector<1x64xf32>
      %48 = vector.broadcast %46 : vector<8x1xf32> to vector<8x64xf32>
      %49 = vector.broadcast %47 : vector<1x64xf32> to vector<8x64xf32>
      %50 = arith.mulf %48, %49 : vector<8x64xf32>
      %51 = arith.addf %45, %50 : vector<8x64xf32>
      %c0_19 = arith.constant 0 : index
      %c0_20 = arith.constant 0 : index
      %52 = vector.load %arg20[%c0_19, %c0_20] : memref<1x64xf32, #tpu.memory_space<vmem>>, vector<1x64xf32>
      %53 = vector.broadcast %52 : vector<1x64xf32> to vector<8x64xf32>
      %54 = arith.mulf %51, %53 : vector<8x64xf32>
      %c0_21 = arith.constant 0 : index
      %c0_22 = arith.constant 0 : index
      %55 = vector.load %arg21[%c0_21, %c0_22] : memref<1x64xf32, #tpu.memory_space<vmem>>, vector<1x64xf32>
      %56 = vector.broadcast %55 : vector<1x64xf32> to vector<8x64xf32>
      %57 = arith.addf %54, %56 : vector<8x64xf32>
      %cst_23 = arith.constant 0.000000e+00 : f32
      %58 = vector.broadcast %cst_23 : f32 to vector<8x64xf32>
      %59 = arith.maximumf %57, %58 : vector<8x64xf32>
      %c0_24 = arith.constant 0 : index
      %c0_25 = arith.constant 0 : index
      %60 = vector.load %arg7[%c0_24, %c0_25] : memref<64x64xf32, #tpu.memory_space<vmem>>, vector<64x64xf32>
      %cst_26 = arith.constant dense<0.000000e+00> : vector<8x64xf32>
      %61 = tpu.matmul %59, %60, %cst_26 {dimension_numbers = #tpu.dot_dimension_numbers<[1], [0], [0], [1], [0, 0, 1, 1], [], []>} : vector<8x64xf32>, vector<64x64xf32>, vector<8x64xf32> -> vector<8x64xf32>
      %c0_27 = arith.constant 0 : index
      %c0_28 = arith.constant 0 : index
      %62 = vector.load %arg22[%c0_27, %c0_28] : memref<1x64xf32, #tpu.memory_space<vmem>>, vector<1x64xf32>
      %63 = vector.broadcast %62 : vector<1x64xf32> to vector<8x64xf32>
      %64 = arith.mulf %61, %63 : vector<8x64xf32>
      %c0_29 = arith.constant 0 : index
      %c0_30 = arith.constant 0 : index
      %65 = vector.load %arg23[%c0_29, %c0_30] : memref<1x64xf32, #tpu.memory_space<vmem>>, vector<1x64xf32>
      %66 = vector.broadcast %65 : vector<1x64xf32> to vector<8x64xf32>
      %67 = arith.addf %64, %66 : vector<8x64xf32>
      %cst_31 = arith.constant 0.000000e+00 : f32
      %68 = vector.broadcast %cst_31 : f32 to vector<8x64xf32>
      %69 = arith.maximumf %67, %68 : vector<8x64xf32>
      %c0_32 = arith.constant 0 : index
      %c0_33 = arith.constant 0 : index
      %70 = vector.load %arg10[%c0_32, %c0_33] : memref<64x64xf32, #tpu.memory_space<vmem>>, vector<64x64xf32>
      %cst_34 = arith.constant dense<0.000000e+00> : vector<8x64xf32>
      %71 = tpu.matmul %69, %70, %cst_34 {dimension_numbers = #tpu.dot_dimension_numbers<[1], [0], [0], [1], [0, 0, 1, 1], [], []>} : vector<8x64xf32>, vector<64x64xf32>, vector<8x64xf32> -> vector<8x64xf32>
      %c0_35 = arith.constant 0 : index
      %c0_36 = arith.constant 0 : index
      %72 = vector.load %arg24[%c0_35, %c0_36] : memref<1x64xf32, #tpu.memory_space<vmem>>, vector<1x64xf32>
      %73 = vector.broadcast %72 : vector<1x64xf32> to vector<8x64xf32>
      %74 = arith.mulf %71, %73 : vector<8x64xf32>
      %c0_37 = arith.constant 0 : index
      %c0_38 = arith.constant 0 : index
      %75 = vector.load %arg25[%c0_37, %c0_38] : memref<1x64xf32, #tpu.memory_space<vmem>>, vector<1x64xf32>
      %76 = vector.broadcast %75 : vector<1x64xf32> to vector<8x64xf32>
      %77 = arith.addf %74, %76 : vector<8x64xf32>
      %cst_39 = arith.constant 0.000000e+00 : f32
      %78 = vector.broadcast %cst_39 : f32 to vector<8x64xf32>
      %79 = arith.maximumf %77, %78 : vector<8x64xf32>
      %c0_40 = arith.constant 0 : index
      %c0_41 = arith.constant 0 : index
      %80 = vector.load %arg13[%c0_40, %c0_41] : memref<64x128xf32, #tpu.memory_space<vmem>>, vector<64x128xf32>
      %cst_42 = arith.constant dense<0.000000e+00> : vector<8x128xf32>
      %81 = tpu.matmul %79, %80, %cst_42 {dimension_numbers = #tpu.dot_dimension_numbers<[1], [0], [0], [1], [0, 0, 1, 1], [], []>} : vector<8x64xf32>, vector<64x128xf32>, vector<8x128xf32> -> vector<8x128xf32>
      %cst_43 = arith.constant 0.000000e+00 : f32
      %82 = vector.shape_cast %13 : vector<8x1xi1> to vector<8x1xi1>
      %83 = vector.broadcast %82 : vector<8x1xi1> to vector<8x128xi1>
      %84 = vector.broadcast %cst_43 : f32 to vector<8x128xf32>
      %85 = arith.select %83, %81, %84 : vector<8x128xi1>, vector<8x128xf32>
      %c0_44 = arith.constant 0 : index
      %c0_45 = arith.constant 0 : index
      %86 = vector.load %arg26[%c0_44, %c0_45] : memref<1x128xf32, #tpu.memory_space<vmem>>, vector<1x128xf32>
      %cst_46 = arith.constant dense<0.000000e+00> : vector<128xf32>
      %87 = vector.multi_reduction <add>, %85, %cst_46 [0] : vector<8x128xf32> to vector<128xf32>
      %88 = vector.shape_cast %87 : vector<128xf32> to vector<1x128xf32>
      %89 = arith.addf %86, %88 : vector<1x128xf32>
      %c0_47 = arith.constant 0 : index
      %c0_48 = arith.constant 0 : index
      %90 = vector.load %arg26[%c0_47, %c0_48] : memref<1x128xf32, #tpu.memory_space<vmem>>, vector<1x128xf32>
      tpu.vector_store %arg26[%c0_47, %c0_48], %89 {strides = array<i32>} : memref<1x128xf32, #tpu.memory_space<vmem>>, vector<1x128xf32>,
      %c0_49 = arith.constant 0 : index
      %c0_50 = arith.constant 0 : index
      %91 = vector.load %arg27[%c0_49, %c0_50] : memref<1x128xf32, #tpu.memory_space<vmem>>, vector<1x128xf32>
      %92 = arith.mulf %85, %85 : vector<8x128xf32>
      %cst_51 = arith.constant dense<0.000000e+00> : vector<128xf32>
      %93 = vector.multi_reduction <add>, %92, %cst_51 [0] : vector<8x128xf32> to vector<128xf32>
      %94 = vector.shape_cast %93 : vector<128xf32> to vector<1x128xf32>
      %95 = arith.addf %91, %94 : vector<1x128xf32>
      %c0_52 = arith.constant 0 : index
      %c0_53 = arith.constant 0 : index
      %96 = vector.load %arg27[%c0_52, %c0_53] : memref<1x128xf32, #tpu.memory_space<vmem>>, vector<1x128xf32>
      tpu.vector_store %arg27[%c0_52, %c0_53], %95 {strides = array<i32>} : memref<1x128xf32, #tpu.memory_space<vmem>>, vector<1x128xf32>,
      %97 = arith.extui %5 : i1 to i32
      %c0_i32_54 = arith.constant 0 : i32
      %98 = arith.cmpi ne, %97, %c0_i32_54 : i32
      scf.if %98 {
        %c0_55 = arith.constant 0 : index
        %c0_56 = arith.constant 0 : index
        %99 = vector.load %arg26[%c0_55, %c0_56] : memref<1x128xf32, #tpu.memory_space<vmem>>, vector<1x128xf32>
        %100 = vector.broadcast %cst_11 : f32 to vector<1x128xf32>
        %101 = arith.mulf %99, %100 : vector<1x128xf32>
        %c0_57 = arith.constant 0 : index
        %c0_58 = arith.constant 0 : index
        %102 = vector.load %arg27[%c0_57, %c0_58] : memref<1x128xf32, #tpu.memory_space<vmem>>, vector<1x128xf32>
        %103 = vector.broadcast %cst_11 : f32 to vector<1x128xf32>
        %104 = arith.mulf %102, %103 : vector<1x128xf32>
        %105 = arith.mulf %101, %101 : vector<1x128xf32>
        %106 = arith.subf %104, %105 : vector<1x128xf32>
        %cst_59 = arith.constant 0.000000e+00 : f32
        %107 = vector.broadcast %cst_59 : f32 to vector<1x128xf32>
        %108 = arith.maximumf %106, %107 : vector<1x128xf32>
        %c0_60 = arith.constant 0 : index
        %c0_61 = arith.constant 0 : index
        %109 = vector.load %arg14[%c0_60, %c0_61] : memref<1x128xf32, #tpu.memory_space<vmem>>, vector<1x128xf32>
        %cst_62 = arith.constant 9.99999974E-6 : f32
        %110 = vector.broadcast %cst_62 : f32 to vector<1x128xf32>
        %111 = arith.addf %108, %110 : vector<1x128xf32>
        %112 = math.rsqrt %111 : vector<1x128xf32>
        %113 = arith.mulf %109, %112 : vector<1x128xf32>
        %c0_63 = arith.constant 0 : index
        %c0_64 = arith.constant 0 : index
        %114 = vector.load %arg15[%c0_63, %c0_64] : memref<1x128xf32, #tpu.memory_space<vmem>>, vector<1x128xf32>
        %115 = arith.mulf %101, %113 : vector<1x128xf32>
        %116 = arith.subf %114, %115 : vector<1x128xf32>
        %c0_65 = arith.constant 0 : index
        %c0_66 = arith.constant 0 : index
        %117 = vector.load %arg26[%c0_65, %c0_66] : memref<1x128xf32, #tpu.memory_space<vmem>>, vector<1x128xf32>
        tpu.vector_store %arg26[%c0_65, %c0_66], %113 {strides = array<i32>} : memref<1x128xf32, #tpu.memory_space<vmem>>, vector<1x128xf32>,
        %c0_67 = arith.constant 0 : index
        %c0_68 = arith.constant 0 : index
        %118 = vector.load %arg27[%c0_67, %c0_68] : memref<1x128xf32, #tpu.memory_space<vmem>>, vector<1x128xf32>
        tpu.vector_store %arg27[%c0_67, %c0_68], %116 {strides = array<i32>} : memref<1x128xf32, #tpu.memory_space<vmem>>, vector<1x128xf32>,
      } else {
      }
    } else {
    }
    %c4_i32 = arith.constant 4 : i32
    %26 = arith.cmpi eq, %arg0, %c4_i32 : i32
    %27 = arith.extui %26 : i1 to i32
    %cst_13 = arith.constant 2.500000e-02 : f32
    %c0_i32_14 = arith.constant 0 : i32
    %28 = arith.cmpi ne, %27, %c0_i32_14 : i32
    scf.if %28 {
      %32 = arith.extui %2 : i1 to i32
      %c0_i32_16 = arith.constant 0 : i32
      %33 = arith.cmpi ne, %32, %c0_i32_16 : i32
      scf.if %33 {
        %cst_63 = arith.constant 0.000000e+00 : f32
        %109 = vector.broadcast %cst_63 : f32 to vector<1x128xf32>
        %c0_64 = arith.constant 0 : index
        %c0_65 = arith.constant 0 : index
        %110 = vector.load %arg28[%c0_64, %c0_65] : memref<1x128xf32, #tpu.memory_space<vmem>>, vector<1x128xf32>
        tpu.vector_store %arg28[%c0_64, %c0_65], %109 {strides = array<i32>} : memref<1x128xf32, #tpu.memory_space<vmem>>, vector<1x128xf32>,
        %cst_66 = arith.constant 0.000000e+00 : f32
        %111 = vector.broadcast %cst_66 : f32 to vector<1x128xf32>
        %c0_67 = arith.constant 0 : index
        %c0_68 = arith.constant 0 : index
        %112 = vector.load %arg29[%c0_67, %c0_68] : memref<1x128xf32, #tpu.memory_space<vmem>>, vector<1x128xf32>
        tpu.vector_store %arg29[%c0_67, %c0_68], %111 {strides = array<i32>} : memref<1x128xf32, #tpu.memory_space<vmem>>, vector<1x128xf32>,
      } else {
      }
      %c0_17 = arith.constant 0 : index
      %c0_18 = arith.constant 0 : index
      %34 = vector.load %arg4[%c0_17, %c0_18] : memref<3x64xf32, #tpu.memory_space<vmem>>, vector<3x64xf32>
      %35 = vector.extract_strided_slice %7 {offsets = [0, 0], sizes = [8, 1], strides = [1, 1]} : vector<8x3xf32> to vector<8x1xf32>
      %36 = vector.extract_strided_slice %34 {offsets = [0, 0], sizes = [1, 64], strides = [1, 1]} : vector<3x64xf32> to vector<1x64xf32>
      %37 = vector.broadcast %35 : vector<8x1xf32> to vector<8x64xf32>
      %38 = vector.broadcast %36 : vector<1x64xf32> to vector<8x64xf32>
      %39 = arith.mulf %37, %38 : vector<8x64xf32>
      %40 = vector.extract_strided_slice %7 {offsets = [0, 1], sizes = [8, 1], strides = [1, 1]} : vector<8x3xf32> to vector<8x1xf32>
      %41 = vector.extract_strided_slice %34 {offsets = [1, 0], sizes = [1, 64], strides = [1, 1]} : vector<3x64xf32> to vector<1x64xf32>
      %42 = vector.broadcast %40 : vector<8x1xf32> to vector<8x64xf32>
      %43 = vector.broadcast %41 : vector<1x64xf32> to vector<8x64xf32>
      %44 = arith.mulf %42, %43 : vector<8x64xf32>
      %45 = arith.addf %39, %44 : vector<8x64xf32>
      %46 = vector.extract_strided_slice %7 {offsets = [0, 2], sizes = [8, 1], strides = [1, 1]} : vector<8x3xf32> to vector<8x1xf32>
      %47 = vector.extract_strided_slice %34 {offsets = [2, 0], sizes = [1, 64], strides = [1, 1]} : vector<3x64xf32> to vector<1x64xf32>
      %48 = vector.broadcast %46 : vector<8x1xf32> to vector<8x64xf32>
      %49 = vector.broadcast %47 : vector<1x64xf32> to vector<8x64xf32>
      %50 = arith.mulf %48, %49 : vector<8x64xf32>
      %51 = arith.addf %45, %50 : vector<8x64xf32>
      %c0_19 = arith.constant 0 : index
      %c0_20 = arith.constant 0 : index
      %52 = vector.load %arg20[%c0_19, %c0_20] : memref<1x64xf32, #tpu.memory_space<vmem>>, vector<1x64xf32>
      %53 = vector.broadcast %52 : vector<1x64xf32> to vector<8x64xf32>
      %54 = arith.mulf %51, %53 : vector<8x64xf32>
      %c0_21 = arith.constant 0 : index
      %c0_22 = arith.constant 0 : index
      %55 = vector.load %arg21[%c0_21, %c0_22] : memref<1x64xf32, #tpu.memory_space<vmem>>, vector<1x64xf32>
      %56 = vector.broadcast %55 : vector<1x64xf32> to vector<8x64xf32>
      %57 = arith.addf %54, %56 : vector<8x64xf32>
      %cst_23 = arith.constant 0.000000e+00 : f32
      %58 = vector.broadcast %cst_23 : f32 to vector<8x64xf32>
      %59 = arith.maximumf %57, %58 : vector<8x64xf32>
      %c0_24 = arith.constant 0 : index
      %c0_25 = arith.constant 0 : index
      %60 = vector.load %arg7[%c0_24, %c0_25] : memref<64x64xf32, #tpu.memory_space<vmem>>, vector<64x64xf32>
      %cst_26 = arith.constant dense<0.000000e+00> : vector<8x64xf32>
      %61 = tpu.matmul %59, %60, %cst_26 {dimension_numbers = #tpu.dot_dimension_numbers<[1], [0], [0], [1], [0, 0, 1, 1], [], []>} : vector<8x64xf32>, vector<64x64xf32>, vector<8x64xf32> -> vector<8x64xf32>
      %c0_27 = arith.constant 0 : index
      %c0_28 = arith.constant 0 : index
      %62 = vector.load %arg22[%c0_27, %c0_28] : memref<1x64xf32, #tpu.memory_space<vmem>>, vector<1x64xf32>
      %63 = vector.broadcast %62 : vector<1x64xf32> to vector<8x64xf32>
      %64 = arith.mulf %61, %63 : vector<8x64xf32>
      %c0_29 = arith.constant 0 : index
      %c0_30 = arith.constant 0 : index
      %65 = vector.load %arg23[%c0_29, %c0_30] : memref<1x64xf32, #tpu.memory_space<vmem>>, vector<1x64xf32>
      %66 = vector.broadcast %65 : vector<1x64xf32> to vector<8x64xf32>
      %67 = arith.addf %64, %66 : vector<8x64xf32>
      %cst_31 = arith.constant 0.000000e+00 : f32
      %68 = vector.broadcast %cst_31 : f32 to vector<8x64xf32>
      %69 = arith.maximumf %67, %68 : vector<8x64xf32>
      %c0_32 = arith.constant 0 : index
      %c0_33 = arith.constant 0 : index
      %70 = vector.load %arg10[%c0_32, %c0_33] : memref<64x64xf32, #tpu.memory_space<vmem>>, vector<64x64xf32>
      %cst_34 = arith.constant dense<0.000000e+00> : vector<8x64xf32>
      %71 = tpu.matmul %69, %70, %cst_34 {dimension_numbers = #tpu.dot_dimension_numbers<[1], [0], [0], [1], [0, 0, 1, 1], [], []>} : vector<8x64xf32>, vector<64x64xf32>, vector<8x64xf32> -> vector<8x64xf32>
      %c0_35 = arith.constant 0 : index
      %c0_36 = arith.constant 0 : index
      %72 = vector.load %arg24[%c0_35, %c0_36] : memref<1x64xf32, #tpu.memory_space<vmem>>, vector<1x64xf32>
      %73 = vector.broadcast %72 : vector<1x64xf32> to vector<8x64xf32>
      %74 = arith.mulf %71, %73 : vector<8x64xf32>
      %c0_37 = arith.constant 0 : index
      %c0_38 = arith.constant 0 : index
      %75 = vector.load %arg25[%c0_37, %c0_38] : memref<1x64xf32, #tpu.memory_space<vmem>>, vector<1x64xf32>
      %76 = vector.broadcast %75 : vector<1x64xf32> to vector<8x64xf32>
      %77 = arith.addf %74, %76 : vector<8x64xf32>
      %cst_39 = arith.constant 0.000000e+00 : f32
      %78 = vector.broadcast %cst_39 : f32 to vector<8x64xf32>
      %79 = arith.maximumf %77, %78 : vector<8x64xf32>
      %c0_40 = arith.constant 0 : index
      %c0_41 = arith.constant 0 : index
      %80 = vector.load %arg13[%c0_40, %c0_41] : memref<64x128xf32, #tpu.memory_space<vmem>>, vector<64x128xf32>
      %cst_42 = arith.constant dense<0.000000e+00> : vector<8x128xf32>
      %81 = tpu.matmul %79, %80, %cst_42 {dimension_numbers = #tpu.dot_dimension_numbers<[1], [0], [0], [1], [0, 0, 1, 1], [], []>} : vector<8x64xf32>, vector<64x128xf32>, vector<8x128xf32> -> vector<8x128xf32>
      %c0_43 = arith.constant 0 : index
      %c0_44 = arith.constant 0 : index
      %82 = vector.load %arg26[%c0_43, %c0_44] : memref<1x128xf32, #tpu.memory_space<vmem>>, vector<1x128xf32>
      %83 = vector.broadcast %82 : vector<1x128xf32> to vector<8x128xf32>
      %84 = arith.mulf %81, %83 : vector<8x128xf32>
      %c0_45 = arith.constant 0 : index
      %c0_46 = arith.constant 0 : index
      %85 = vector.load %arg27[%c0_45, %c0_46] : memref<1x128xf32, #tpu.memory_space<vmem>>, vector<1x128xf32>
      %86 = vector.broadcast %85 : vector<1x128xf32> to vector<8x128xf32>
      %87 = arith.addf %84, %86 : vector<8x128xf32>
      %cst_47 = arith.constant 0.000000e+00 : f32
      %88 = vector.broadcast %cst_47 : f32 to vector<8x128xf32>
      %89 = arith.maximumf %87, %88 : vector<8x128xf32>
      %c0_48 = arith.constant 0 : index
      %c0_49 = arith.constant 0 : index
      %90 = vector.load %arg16[%c0_48, %c0_49] : memref<128x128xf32, #tpu.memory_space<vmem>>, vector<128x128xf32>
      %cst_50 = arith.constant dense<0.000000e+00> : vector<8x128xf32>
      %91 = tpu.matmul %89, %90, %cst_50 {dimension_numbers = #tpu.dot_dimension_numbers<[1], [0], [0], [1], [0, 0, 1, 1], [], []>} : vector<8x128xf32>, vector<128x128xf32>, vector<8x128xf32> -> vector<8x128xf32>
      %cst_51 = arith.constant 0.000000e+00 : f32
      %92 = vector.shape_cast %13 : vector<8x1xi1> to vector<8x1xi1>
      %93 = vector.broadcast %92 : vector<8x1xi1> to vector<8x128xi1>
      %94 = vector.broadcast %cst_51 : f32 to vector<8x128xf32>
      %95 = arith.select %93, %91, %94 : vector<8x128xi1>, vector<8x128xf32>
      %c0_52 = arith.constant 0 : index
      %c0_53 = arith.constant 0 : index
      %96 = vector.load %arg28[%c0_52, %c0_53] : memref<1x128xf32, #tpu.memory_space<vmem>>, vector<1x128xf32>
      %cst_54 = arith.constant dense<0.000000e+00> : vector<128xf32>
      %97 = vector.multi_reduction <add>, %95, %cst_54 [0] : vector<8x128xf32> to vector<128xf32>
      %98 = vector.shape_cast %97 : vector<128xf32> to vector<1x128xf32>
      %99 = arith.addf %96, %98 : vector<1x128xf32>
      %c0_55 = arith.constant 0 : index
      %c0_56 = arith.constant 0 : index
      %100 = vector.load %arg28[%c0_55, %c0_56] : memref<1x128xf32, #tpu.memory_space<vmem>>, vector<1x128xf32>
      tpu.vector_store %arg28[%c0_55, %c0_56], %99 {strides = array<i32>} : memref<1x128xf32, #tpu.memory_space<vmem>>, vector<1x128xf32>,
      %c0_57 = arith.constant 0 : index
      %c0_58 = arith.constant 0 : index
      %101 = vector.load %arg29[%c0_57, %c0_58] : memref<1x128xf32, #tpu.memory_space<vmem>>, vector<1x128xf32>
      %102 = arith.mulf %95, %95 : vector<8x128xf32>
      %cst_59 = arith.constant dense<0.000000e+00> : vector<128xf32>
      %103 = vector.multi_reduction <add>, %102, %cst_59 [0] : vector<8x128xf32> to vector<128xf32>
      %104 = vector.shape_cast %103 : vector<128xf32> to vector<1x128xf32>
      %105 = arith.addf %101, %104 : vector<1x128xf32>
      %c0_60 = arith.constant 0 : index
      %c0_61 = arith.constant 0 : index
      %106 = vector.load %arg29[%c0_60, %c0_61] : memref<1x128xf32, #tpu.memory_space<vmem>>, vector<1x128xf32>
      tpu.vector_store %arg29[%c0_60, %c0_61], %105 {strides = array<i32>} : memref<1x128xf32, #tpu.memory_space<vmem>>, vector<1x128xf32>,
      %107 = arith.extui %5 : i1 to i32
      %c0_i32_62 = arith.constant 0 : i32
      %108 = arith.cmpi ne, %107, %c0_i32_62 : i32
      scf.if %108 {
        %c0_63 = arith.constant 0 : index
        %c0_64 = arith.constant 0 : index
        %109 = vector.load %arg28[%c0_63, %c0_64] : memref<1x128xf32, #tpu.memory_space<vmem>>, vector<1x128xf32>
        %110 = vector.broadcast %cst_13 : f32 to vector<1x128xf32>
        %111 = arith.mulf %109, %110 : vector<1x128xf32>
        %c0_65 = arith.constant 0 : index
        %c0_66 = arith.constant 0 : index
        %112 = vector.load %arg29[%c0_65, %c0_66] : memref<1x128xf32, #tpu.memory_space<vmem>>, vector<1x128xf32>
        %113 = vector.broadcast %cst_13 : f32 to vector<1x128xf32>
        %114 = arith.mulf %112, %113 : vector<1x128xf32>
        %115 = arith.mulf %111, %111 : vector<1x128xf32>
        %116 = arith.subf %114, %115 : vector<1x128xf32>
        %cst_67 = arith.constant 0.000000e+00 : f32
        %117 = vector.broadcast %cst_67 : f32 to vector<1x128xf32>
        %118 = arith.maximumf %116, %117 : vector<1x128xf32>
        %c0_68 = arith.constant 0 : index
        %c0_69 = arith.constant 0 : index
        %119 = vector.load %arg17[%c0_68, %c0_69] : memref<1x128xf32, #tpu.memory_space<vmem>>, vector<1x128xf32>
        %cst_70 = arith.constant 9.99999974E-6 : f32
        %120 = vector.broadcast %cst_70 : f32 to vector<1x128xf32>
        %121 = arith.addf %118, %120 : vector<1x128xf32>
        %122 = math.rsqrt %121 : vector<1x128xf32>
        %123 = arith.mulf %119, %122 : vector<1x128xf32>
        %c0_71 = arith.constant 0 : index
        %c0_72 = arith.constant 0 : index
        %124 = vector.load %arg18[%c0_71, %c0_72] : memref<1x128xf32, #tpu.memory_space<vmem>>, vector<1x128xf32>
        %125 = arith.mulf %111, %123 : vector<1x128xf32>
        %126 = arith.subf %124, %125 : vector<1x128xf32>
        %c0_73 = arith.constant 0 : index
        %c0_74 = arith.constant 0 : index
        %127 = vector.load %arg28[%c0_73, %c0_74] : memref<1x128xf32, #tpu.memory_space<vmem>>, vector<1x128xf32>
        tpu.vector_store %arg28[%c0_73, %c0_74], %123 {strides = array<i32>} : memref<1x128xf32, #tpu.memory_space<vmem>>, vector<1x128xf32>,
        %c0_75 = arith.constant 0 : index
        %c0_76 = arith.constant 0 : index
        %128 = vector.load %arg29[%c0_75, %c0_76] : memref<1x128xf32, #tpu.memory_space<vmem>>, vector<1x128xf32>
        tpu.vector_store %arg29[%c0_75, %c0_76], %126 {strides = array<i32>} : memref<1x128xf32, #tpu.memory_space<vmem>>, vector<1x128xf32>,
      } else {
      }
    } else {
    }
    %c5_i32 = arith.constant 5 : i32
    %29 = arith.cmpi eq, %arg0, %c5_i32 : i32
    %30 = arith.extui %29 : i1 to i32
    %c0_i32_15 = arith.constant 0 : i32
    %31 = arith.cmpi ne, %30, %c0_i32_15 : i32
    scf.if %31 {
      %32 = arith.extui %2 : i1 to i32
      %c0_i32_16 = arith.constant 0 : i32
      %33 = arith.cmpi ne, %32, %c0_i32_16 : i32
      scf.if %33 {
        %cst_64 = arith.constant 0xFF800000 : f32
        %120 = vector.broadcast %cst_64 : f32 to vector<2x128xf32>
        %c0_65 = arith.constant 0 : index
        %c0_66 = arith.constant 0 : index
        %121 = vector.load %arg30[%c0_65, %c0_66] : memref<2x128xf32, #tpu.memory_space<vmem>>, vector<2x128xf32>
        tpu.vector_store %arg30[%c0_65, %c0_66], %120 {strides = array<i32>} : memref<2x128xf32, #tpu.memory_space<vmem>>, vector<2x128xf32>,
      } else {
      }
      %c0_17 = arith.constant 0 : index
      %c0_18 = arith.constant 0 : index
      %34 = vector.load %arg4[%c0_17, %c0_18] : memref<3x64xf32, #tpu.memory_space<vmem>>, vector<3x64xf32>
      %35 = vector.extract_strided_slice %7 {offsets = [0, 0], sizes = [8, 1], strides = [1, 1]} : vector<8x3xf32> to vector<8x1xf32>
      %36 = vector.extract_strided_slice %34 {offsets = [0, 0], sizes = [1, 64], strides = [1, 1]} : vector<3x64xf32> to vector<1x64xf32>
      %37 = vector.broadcast %35 : vector<8x1xf32> to vector<8x64xf32>
      %38 = vector.broadcast %36 : vector<1x64xf32> to vector<8x64xf32>
      %39 = arith.mulf %37, %38 : vector<8x64xf32>
      %40 = vector.extract_strided_slice %7 {offsets = [0, 1], sizes = [8, 1], strides = [1, 1]} : vector<8x3xf32> to vector<8x1xf32>
      %41 = vector.extract_strided_slice %34 {offsets = [1, 0], sizes = [1, 64], strides = [1, 1]} : vector<3x64xf32> to vector<1x64xf32>
      %42 = vector.broadcast %40 : vector<8x1xf32> to vector<8x64xf32>
      %43 = vector.broadcast %41 : vector<1x64xf32> to vector<8x64xf32>
      %44 = arith.mulf %42, %43 : vector<8x64xf32>
      %45 = arith.addf %39, %44 : vector<8x64xf32>
      %46 = vector.extract_strided_slice %7 {offsets = [0, 2], sizes = [8, 1], strides = [1, 1]} : vector<8x3xf32> to vector<8x1xf32>
      %47 = vector.extract_strided_slice %34 {offsets = [2, 0], sizes = [1, 64], strides = [1, 1]} : vector<3x64xf32> to vector<1x64xf32>
      %48 = vector.broadcast %46 : vector<8x1xf32> to vector<8x64xf32>
      %49 = vector.broadcast %47 : vector<1x64xf32> to vector<8x64xf32>
      %50 = arith.mulf %48, %49 : vector<8x64xf32>
      %51 = arith.addf %45, %50 : vector<8x64xf32>
      %c0_19 = arith.constant 0 : index
      %c0_20 = arith.constant 0 : index
      %52 = vector.load %arg20[%c0_19, %c0_20] : memref<1x64xf32, #tpu.memory_space<vmem>>, vector<1x64xf32>
      %53 = vector.broadcast %52 : vector<1x64xf32> to vector<8x64xf32>
      %54 = arith.mulf %51, %53 : vector<8x64xf32>
      %c0_21 = arith.constant 0 : index
      %c0_22 = arith.constant 0 : index
      %55 = vector.load %arg21[%c0_21, %c0_22] : memref<1x64xf32, #tpu.memory_space<vmem>>, vector<1x64xf32>
      %56 = vector.broadcast %55 : vector<1x64xf32> to vector<8x64xf32>
      %57 = arith.addf %54, %56 : vector<8x64xf32>
      %cst_23 = arith.constant 0.000000e+00 : f32
      %58 = vector.broadcast %cst_23 : f32 to vector<8x64xf32>
      %59 = arith.maximumf %57, %58 : vector<8x64xf32>
      %c0_24 = arith.constant 0 : index
      %c0_25 = arith.constant 0 : index
      %60 = vector.load %arg7[%c0_24, %c0_25] : memref<64x64xf32, #tpu.memory_space<vmem>>, vector<64x64xf32>
      %cst_26 = arith.constant dense<0.000000e+00> : vector<8x64xf32>
      %61 = tpu.matmul %59, %60, %cst_26 {dimension_numbers = #tpu.dot_dimension_numbers<[1], [0], [0], [1], [0, 0, 1, 1], [], []>} : vector<8x64xf32>, vector<64x64xf32>, vector<8x64xf32> -> vector<8x64xf32>
      %c0_27 = arith.constant 0 : index
      %c0_28 = arith.constant 0 : index
      %62 = vector.load %arg22[%c0_27, %c0_28] : memref<1x64xf32, #tpu.memory_space<vmem>>, vector<1x64xf32>
      %63 = vector.broadcast %62 : vector<1x64xf32> to vector<8x64xf32>
      %64 = arith.mulf %61, %63 : vector<8x64xf32>
      %c0_29 = arith.constant 0 : index
      %c0_30 = arith.constant 0 : index
      %65 = vector.load %arg23[%c0_29, %c0_30] : memref<1x64xf32, #tpu.memory_space<vmem>>, vector<1x64xf32>
      %66 = vector.broadcast %65 : vector<1x64xf32> to vector<8x64xf32>
      %67 = arith.addf %64, %66 : vector<8x64xf32>
      %cst_31 = arith.constant 0.000000e+00 : f32
      %68 = vector.broadcast %cst_31 : f32 to vector<8x64xf32>
      %69 = arith.maximumf %67, %68 : vector<8x64xf32>
      %c0_32 = arith.constant 0 : index
      %c0_33 = arith.constant 0 : index
      %70 = vector.load %arg10[%c0_32, %c0_33] : memref<64x64xf32, #tpu.memory_space<vmem>>, vector<64x64xf32>
      %cst_34 = arith.constant dense<0.000000e+00> : vector<8x64xf32>
      %71 = tpu.matmul %69, %70, %cst_34 {dimension_numbers = #tpu.dot_dimension_numbers<[1], [0], [0], [1], [0, 0, 1, 1], [], []>} : vector<8x64xf32>, vector<64x64xf32>, vector<8x64xf32> -> vector<8x64xf32>
      %c0_35 = arith.constant 0 : index
      %c0_36 = arith.constant 0 : index
      %72 = vector.load %arg24[%c0_35, %c0_36] : memref<1x64xf32, #tpu.memory_space<vmem>>, vector<1x64xf32>
      %73 = vector.broadcast %72 : vector<1x64xf32> to vector<8x64xf32>
      %74 = arith.mulf %71, %73 : vector<8x64xf32>
      %c0_37 = arith.constant 0 : index
      %c0_38 = arith.constant 0 : index
      %75 = vector.load %arg25[%c0_37, %c0_38] : memref<1x64xf32, #tpu.memory_space<vmem>>, vector<1x64xf32>
      %76 = vector.broadcast %75 : vector<1x64xf32> to vector<8x64xf32>
      %77 = arith.addf %74, %76 : vector<8x64xf32>
      %cst_39 = arith.constant 0.000000e+00 : f32
      %78 = vector.broadcast %cst_39 : f32 to vector<8x64xf32>
      %79 = arith.maximumf %77, %78 : vector<8x64xf32>
      %c0_40 = arith.constant 0 : index
      %c0_41 = arith.constant 0 : index
      %80 = vector.load %arg13[%c0_40, %c0_41] : memref<64x128xf32, #tpu.memory_space<vmem>>, vector<64x128xf32>
      %cst_42 = arith.constant dense<0.000000e+00> : vector<8x128xf32>
      %81 = tpu.matmul %79, %80, %cst_42 {dimension_numbers = #tpu.dot_dimension_numbers<[1], [0], [0], [1], [0, 0, 1, 1], [], []>} : vector<8x64xf32>, vector<64x128xf32>, vector<8x128xf32> -> vector<8x128xf32>
      %c0_43 = arith.constant 0 : index
      %c0_44 = arith.constant 0 : index
      %82 = vector.load %arg26[%c0_43, %c0_44] : memref<1x128xf32, #tpu.memory_space<vmem>>, vector<1x128xf32>
      %83 = vector.broadcast %82 : vector<1x128xf32> to vector<8x128xf32>
      %84 = arith.mulf %81, %83 : vector<8x128xf32>
      %c0_45 = arith.constant 0 : index
      %c0_46 = arith.constant 0 : index
      %85 = vector.load %arg27[%c0_45, %c0_46] : memref<1x128xf32, #tpu.memory_space<vmem>>, vector<1x128xf32>
      %86 = vector.broadcast %85 : vector<1x128xf32> to vector<8x128xf32>
      %87 = arith.addf %84, %86 : vector<8x128xf32>
      %cst_47 = arith.constant 0.000000e+00 : f32
      %88 = vector.broadcast %cst_47 : f32 to vector<8x128xf32>
      %89 = arith.maximumf %87, %88 : vector<8x128xf32>
      %c0_48 = arith.constant 0 : index
      %c0_49 = arith.constant 0 : index
      %90 = vector.load %arg16[%c0_48, %c0_49] : memref<128x128xf32, #tpu.memory_space<vmem>>, vector<128x128xf32>
      %cst_50 = arith.constant dense<0.000000e+00> : vector<8x128xf32>
      %91 = tpu.matmul %89, %90, %cst_50 {dimension_numbers = #tpu.dot_dimension_numbers<[1], [0], [0], [1], [0, 0, 1, 1], [], []>} : vector<8x128xf32>, vector<128x128xf32>, vector<8x128xf32> -> vector<8x128xf32>
      %c0_51 = arith.constant 0 : index
      %c0_52 = arith.constant 0 : index
      %92 = vector.load %arg28[%c0_51, %c0_52] : memref<1x128xf32, #tpu.memory_space<vmem>>, vector<1x128xf32>
      %93 = vector.broadcast %92 : vector<1x128xf32> to vector<8x128xf32>
      %94 = arith.mulf %91, %93 : vector<8x128xf32>
      %c0_53 = arith.constant 0 : index
      %c0_54 = arith.constant 0 : index
      %95 = vector.load %arg29[%c0_53, %c0_54] : memref<1x128xf32, #tpu.memory_space<vmem>>, vector<1x128xf32>
      %96 = vector.broadcast %95 : vector<1x128xf32> to vector<8x128xf32>
      %97 = arith.addf %94, %96 : vector<8x128xf32>
      %cst_55 = arith.constant 0.000000e+00 : f32
      %98 = vector.broadcast %cst_55 : f32 to vector<8x128xf32>
      %99 = arith.maximumf %97, %98 : vector<8x128xf32>
      %cst_56 = arith.constant 0xFF800000 : f32
      %100 = vector.shape_cast %13 : vector<8x1xi1> to vector<8x1xi1>
      %101 = vector.broadcast %100 : vector<8x1xi1> to vector<8x128xi1>
      %102 = vector.broadcast %cst_56 : f32 to vector<8x128xf32>
      %103 = arith.select %101, %99, %102 : vector<8x128xi1>, vector<8x128xf32>
      %cst_57 = arith.constant dense<0xFF800000> : vector<128xf32>
      %104 = vector.multi_reduction <maximumf>, %103, %cst_57 [0] : vector<8x128xf32> to vector<128xf32>
      %105 = vector.shape_cast %104 : vector<128xf32> to vector<1x128xf32>
      %106 = tpu.iota {dimensions = array<i32: 0>} : vector<2x1xi32>
      %107 = vector.broadcast %arg1 : i32 to vector<2x1xi32>
      %108 = arith.cmpi eq, %106, %107 : vector<2x1xi32>
      %cst_58 = arith.constant 0xFF800000 : f32
      %109 = vector.shape_cast %108 : vector<2x1xi1> to vector<2x1xi1>
      %110 = vector.broadcast %109 : vector<2x1xi1> to vector<2x128xi1>
      %111 = vector.shape_cast %105 : vector<1x128xf32> to vector<1x128xf32>
      %112 = vector.broadcast %111 : vector<1x128xf32> to vector<2x128xf32>
      %113 = vector.broadcast %cst_58 : f32 to vector<2x128xf32>
      %114 = arith.select %110, %112, %113 : vector<2x128xi1>, vector<2x128xf32>
      %c0_59 = arith.constant 0 : index
      %c0_60 = arith.constant 0 : index
      %115 = vector.load %arg30[%c0_59, %c0_60] : memref<2x128xf32, #tpu.memory_space<vmem>>, vector<2x128xf32>
      %116 = arith.maximumf %115, %114 : vector<2x128xf32>
      %c0_61 = arith.constant 0 : index
      %c0_62 = arith.constant 0 : index
      %117 = vector.load %arg30[%c0_61, %c0_62] : memref<2x128xf32, #tpu.memory_space<vmem>>, vector<2x128xf32>
      tpu.vector_store %arg30[%c0_61, %c0_62], %116 {strides = array<i32>} : memref<2x128xf32, #tpu.memory_space<vmem>>, vector<2x128xf32>,
      %118 = arith.extui %5 : i1 to i32
      %c0_i32_63 = arith.constant 0 : i32
      %119 = arith.cmpi ne, %118, %c0_i32_63 : i32
      scf.if %119 {
        %c0_64 = arith.constant 0 : index
        %c0_65 = arith.constant 0 : index
        %120 = vector.load %arg30[%c0_64, %c0_65] : memref<2x128xf32, #tpu.memory_space<vmem>>, vector<2x128xf32>
        %c0_66 = arith.constant 0 : index
        %c0_67 = arith.constant 0 : index
        %121 = vector.load %arg19[%c0_66, %c0_67] : memref<2x128xf32, #tpu.memory_space<vmem>>, vector<2x128xf32>
        tpu.vector_store %arg19[%c0_66, %c0_67], %120 {strides = array<i32>} : memref<2x128xf32, #tpu.memory_space<vmem>>, vector<2x128xf32>,
      } else {
      }
    } else {
    }
    return
  }
  func.func @transform_0(%arg0: i32, %arg1: i32, %arg2: i32) -> (i32, i32, i32) {
    %c0_i32 = arith.constant 0 : i32
    %c0_i32_0 = arith.constant 0 : i32
    return %arg1, %arg2, %c0_i32 : i32, i32, i32
  }
  func.func @transform_1(%arg0: i32, %arg1: i32, %arg2: i32) -> (i32, i32) {
    %c0_i32 = arith.constant 0 : i32
    %c0_i32_0 = arith.constant 0 : i32
    %c0_i32_1 = arith.constant 0 : i32
    return %c0_i32, %c0_i32_0 : i32, i32
  }
  func.func @transform_2(%arg0: i32, %arg1: i32, %arg2: i32) -> (i32, i32) {
    %c0_i32 = arith.constant 0 : i32
    %c0_i32_0 = arith.constant 0 : i32
    %c0_i32_1 = arith.constant 0 : i32
    return %c0_i32, %c0_i32_0 : i32, i32
  }
  func.func @transform_3(%arg0: i32, %arg1: i32, %arg2: i32) -> (i32, i32) {
    %c0_i32 = arith.constant 0 : i32
    %c0_i32_0 = arith.constant 0 : i32
    %c0_i32_1 = arith.constant 0 : i32
    return %c0_i32, %c0_i32_0 : i32, i32
  }
  func.func @transform_4(%arg0: i32, %arg1: i32, %arg2: i32) -> (i32, i32) {
    %c0_i32 = arith.constant 0 : i32
    %c0_i32_0 = arith.constant 0 : i32
    %c0_i32_1 = arith.constant 0 : i32
    return %c0_i32, %c0_i32_0 : i32, i32
  }
  func.func @transform_5(%arg0: i32, %arg1: i32, %arg2: i32) -> (i32, i32) {
    %c0_i32 = arith.constant 0 : i32
    %c0_i32_0 = arith.constant 0 : i32
    %c0_i32_1 = arith.constant 0 : i32
    return %c0_i32, %c0_i32_0 : i32, i32
  }
  func.func @transform_6(%arg0: i32, %arg1: i32, %arg2: i32) -> (i32, i32) {
    %c0_i32 = arith.constant 0 : i32
    %c0_i32_0 = arith.constant 0 : i32
    %c0_i32_1 = arith.constant 0 : i32
    return %c0_i32, %c0_i32_0 : i32, i32
  }
  func.func @transform_7(%arg0: i32, %arg1: i32, %arg2: i32) -> (i32, i32) {
    %c0_i32 = arith.constant 0 : i32
    %c0_i32_0 = arith.constant 0 : i32
    %c0_i32_1 = arith.constant 0 : i32
    return %c0_i32, %c0_i32_0 : i32, i32
  }
  func.func @transform_8(%arg0: i32, %arg1: i32, %arg2: i32) -> (i32, i32) {
    %c0_i32 = arith.constant 0 : i32
    %c0_i32_0 = arith.constant 0 : i32
    %c0_i32_1 = arith.constant 0 : i32
    return %c0_i32, %c0_i32_0 : i32, i32
  }
  func.func @transform_9(%arg0: i32, %arg1: i32, %arg2: i32) -> (i32, i32) {
    %c0_i32 = arith.constant 0 : i32
    %c0_i32_0 = arith.constant 0 : i32
    %c0_i32_1 = arith.constant 0 : i32
    return %c0_i32, %c0_i32_0 : i32, i32
  }
  func.func @transform_10(%arg0: i32, %arg1: i32, %arg2: i32) -> (i32, i32) {
    %c0_i32 = arith.constant 0 : i32
    %c0_i32_0 = arith.constant 0 : i32
    %c0_i32_1 = arith.constant 0 : i32
    return %c0_i32, %c0_i32_0 : i32, i32
  }
  func.func @transform_11(%arg0: i32, %arg1: i32, %arg2: i32) -> (i32, i32) {
    %c0_i32 = arith.constant 0 : i32
    %c0_i32_0 = arith.constant 0 : i32
    %c0_i32_1 = arith.constant 0 : i32
    return %c0_i32, %c0_i32_0 : i32, i32
  }
  func.func @transform_12(%arg0: i32, %arg1: i32, %arg2: i32) -> (i32, i32) {
    %c0_i32 = arith.constant 0 : i32
    %c0_i32_0 = arith.constant 0 : i32
    %c0_i32_1 = arith.constant 0 : i32
    return %c0_i32, %c0_i32_0 : i32, i32
  }
  func.func @transform_13(%arg0: i32, %arg1: i32, %arg2: i32) -> (i32, i32) {
    %c0_i32 = arith.constant 0 : i32
    %c0_i32_0 = arith.constant 0 : i32
    %c0_i32_1 = arith.constant 0 : i32
    return %c0_i32, %c0_i32_0 : i32, i32
  }
  func.func @transform_14(%arg0: i32, %arg1: i32, %arg2: i32) -> (i32, i32) {
    %c0_i32 = arith.constant 0 : i32
    %c0_i32_0 = arith.constant 0 : i32
    %c0_i32_1 = arith.constant 0 : i32
    return %c0_i32, %c0_i32_0 : i32, i32
  }
  func.func @transform_15(%arg0: i32, %arg1: i32, %arg2: i32) -> (i32, i32) {
    %c0_i32 = arith.constant 0 : i32
    %c0_i32_0 = arith.constant 0 : i32
    %c0_i32_1 = arith.constant 0 : i32
    return %c0_i32, %c0_i32_0 : i32, i32
  }
  func.func @transform_16(%arg0: i32, %arg1: i32, %arg2: i32) -> (i32, i32) {
    %c0_i32 = arith.constant 0 : i32
    %c0_i32_0 = arith.constant 0 : i32
    %c0_i32_1 = arith.constant 0 : i32
    return %c0_i32, %c0_i32_0 : i32, i32
  }
}

</mosaic_0001>

<llo_original>
// kernel: tpu_custom_call.1
$region0: #{tpu_custom_call.1}
  #allocation0 [shape = 'u32[]', space=smem, size = 0x4, offset = 0x4, fixed_abs, tag = 'smem constant byte address 0x4 - core index']
  #allocation1 [shape = 'u32[144,128]{1,0:T(1,128)}', space=vmem, size = 0x12000, scoped, tag = 'internal scratch']
  #allocation2 [shape = 'f32[1,64]{1,0:T(1,128)}', space=vmem, size = 0x200, scoped, tag = 'scratch operand']
  #allocation3 [shape = 'f32[1,64]{1,0:T(1,128)}', space=vmem, size = 0x200, scoped, tag = 'scratch operand']
  #allocation4 [shape = 'f32[1,64]{1,0:T(1,128)}', space=vmem, size = 0x200, scoped, tag = 'scratch operand']
  #allocation5 [shape = 'f32[1,64]{1,0:T(1,128)}', space=vmem, size = 0x200, scoped, tag = 'scratch operand']
  #allocation6 [shape = 'f32[1,64]{1,0:T(1,128)}', space=vmem, size = 0x200, scoped, tag = 'scratch operand']
  #allocation7 [shape = 'f32[1,64]{1,0:T(1,128)}', space=vmem, size = 0x200, scoped, tag = 'scratch operand']
  #allocation8 [shape = 'f32[1,128]{1,0:T(1,128)}', space=vmem, size = 0x200, scoped, tag = 'scratch operand']
  #allocation9 [shape = 'f32[1,128]{1,0:T(1,128)}', space=vmem, size = 0x200, scoped, tag = 'scratch operand']
  #allocation10 [shape = 'f32[1,128]{1,0:T(1,128)}', space=vmem, size = 0x200, scoped, tag = 'scratch operand']
  #allocation11 [shape = 'f32[1,128]{1,0:T(1,128)}', space=vmem, size = 0x200, scoped, tag = 'scratch operand']
  #allocation12 [shape = 'f32[2,128]{1,0:T(2,128)}', space=vmem, size = 0x400, scoped, tag = 'scratch operand']
  %s0 = inlined_call_operand.vmem [shape: f32[2,24,3], index: 0, kind: input, shape index: {}]
  %s1 = inlined_call_operand.vmem [shape: f32[3,64], index: 1, kind: input, shape index: {}]
  %s2 = inlined_call_operand.vmem [shape: f32[1,64], index: 2, kind: input, shape index: {}]
  %s3 = inlined_call_operand.hbm [shape: f32[1,64], index: 3, kind: input, shape index: {}]
  %s4 = inlined_call_operand.vmem [shape: f32[64,64], index: 4, kind: input, shape index: {}]
  %s5 = inlined_call_operand.vmem [shape: f32[1,64], index: 5, kind: input, shape index: {}]
  %s6 = inlined_call_operand.vmem [shape: f32[1,64], index: 6, kind: input, shape index: {}]
  %s7 = inlined_call_operand.hbm [shape: f32[64,64], index: 7, kind: input, shape index: {}]
  %s8 = inlined_call_operand.vmem [shape: f32[1,64], index: 8, kind: input, shape index: {}]
  %s9 = inlined_call_operand.vmem [shape: f32[1,64], index: 9, kind: input, shape index: {}]
  %s10 = inlined_call_operand.hbm [shape: f32[64,128], index: 10, kind: input, shape index: {}]
  %s11 = inlined_call_operand.vmem [shape: f32[1,128], index: 11, kind: input, shape index: {}]
  %s12 = inlined_call_operand.vmem [shape: f32[1,128], index: 12, kind: input, shape index: {}]
  %s13 = inlined_call_operand.hbm [shape: f32[128,128], index: 13, kind: input, shape index: {}]
  %s14 = inlined_call_operand.vmem [shape: f32[1,128], index: 14, kind: input, shape index: {}]
  %s15 = inlined_call_operand.vmem [shape: f32[1,128], index: 15, kind: input, shape index: {}]
  %s16 = inlined_call_operand.hbm [shape: f32[2,128], index: 16, kind: output, shape index: {}]
  %s17 = sld [smem:[#allocation0]]
  $region185: #{tpu_custom_call.1} parent=0
    _
  %s19 = ssub.s32 1, %s17
  %s20 = scalar_select 0, %s19, %s17
  $region1: #{tpu_custom_call.1} parent=0
    #allocation13 [shape = 'u8[512]{0}', space=vmem, size = 0x400, scoped, tag = 'input window, operand 3, single buffered']
    #allocation14 [shape = 's32[2]{0}', space=sflag, size = 0x8, scoped, tag = 'scoped memory for tpu_custom_call.1']
    #allocation15 [shape = 's32[2]{0}', space=sflag, size = 0x8, scoped, tag = 'scoped memory for tpu_custom_call.1']
    #allocation16 [shape = 'u8[32768]{0}', space=vmem, size = 0x8000, scoped, tag = 'input window, operand 7, single buffered']
    #allocation17 [shape = 's32[1]{0}', space=sflag, size = 0x4, scoped, tag = 'scoped memory for tpu_custom_call.1']
    #allocation18 [shape = 'u8[32768]{0}', space=vmem, size = 0x8000, scoped, tag = 'input window, operand 10, single buffered']
    #allocation19 [shape = 'u8[65536]{0}', space=vmem, size = 0x10000, scoped, tag = 'input window, operand 13, single buffered']
    #allocation20 [shape = 's32[1]{0}', space=sflag, size = 0x4, scoped, tag = 'scoped memory for tpu_custom_call.1']
    #allocation21 [shape = 'u8[1024]{0}', space=vmem, size = 0x400, scoped, tag = 'output window, operand 0, single buffered']
    %21 = vsyncpa [#allocation14], 0
    %22 = vsyncpa [#allocation17], 0
    %23 = vsyncpa [#allocation20], 0
    %24 = vsyncpa [#allocation15], 0
    loop: start=0, step=1, limit=38
    $region2: #{tpu_custom_call.1} parent=1 // loop_pre_header
      _
    $region3: #{tpu_custom_call.1} parent=1 // loop_header
      %s26 = sphi 0, %s30
      %p27 = scmp.ge.s32.totalorder %s26, 38
      %s33 = sphi 0, %s52
      %s34 = sphi 0, %s48
      %s35 = sphi 0, %s44
      %s36 = sphi 0, %s33
      %s37 = sphi 0, %s34
      %s38 = sphi 0, %s35
      %s39 = sphi 0, %s36
      %s40 = sphi 0, %s37
      %s41 = sphi 0, %s38
      %s57 = sphi 0, %s59
      %s60 = sphi 0, %s57
      %s61 = sphi 0, %s60
      %s77 = sphi 0, %s61
      %s81 = sphi 0, %s81
      %s83 = sphi 0, %s81
      %s84 = sphi 0, %s83
      %s98 = sphi 0, %s84
      %s102 = sphi 0, %s102
      %s104 = sphi 0, %s102
      %s105 = sphi 0, %s104
      %s119 = sphi 0, %s105
      %s123 = sphi 0, %s123
      %s125 = sphi 0, %s123
      %s126 = sphi 0, %s125
      %s140 = sphi 0, %s126
      %s144 = sphi 0, %s144
      %s146 = sphi 0, %s144
      %s147 = sphi 0, %s146
      %s161 = sphi 0, %s147
      %s165 = sphi 0, %s165
      %s167 = sphi 0, %s165
      %s168 = sphi 0, %s167
      %s182 = sphi 0, %s168
      %s186 = sphi 0, %s186
      %s188 = sphi 0, %s186
      %s189 = sphi 0, %s188
      %s203 = sphi 0, %s189
      %s207 = sphi 0, %s207
      %s209 = sphi 0, %s207
      %s210 = sphi 0, %s209
      %s224 = sphi 0, %s210
      %s228 = sphi 0, %s228
      %s230 = sphi 0, %s228
      %s231 = sphi 0, %s230
      %s245 = sphi 0, %s231
      %s249 = sphi 0, %s249
      %s251 = sphi 0, %s249
      %s252 = sphi 0, %s251
      %s266 = sphi 0, %s252
      %s270 = sphi 0, %s270
      %s272 = sphi 0, %s270
      %s273 = sphi 0, %s272
      %s287 = sphi 0, %s273
      %s291 = sphi 0, %s291
      %s293 = sphi 0, %s291
      %s294 = sphi 0, %s293
      %s308 = sphi 0, %s294
      %s312 = sphi 0, %s312
      %s314 = sphi 0, %s312
      %s315 = sphi 0, %s314
      %s329 = sphi 0, %s315
      %s333 = sphi 0, %s333
      %s335 = sphi 0, %s333
      %s336 = sphi 0, %s335
      %s350 = sphi 0, %s336
      %s354 = sphi 0, %s354
      %s356 = sphi 0, %s354
      %s357 = sphi 0, %s356
      %s371 = sphi 0, %s357
      %s375 = sphi 0, %s375
      %s377 = sphi 0, %s375
      %s378 = sphi 0, %s377
      %s392 = sphi 0, %s378
      %s396 = sphi 0, %s396
      %s398 = sphi 0, %s396
      %s399 = sphi 0, %s398
      %s413 = sphi 0, %s399
    $region4: #{tpu_custom_call.1} parent=1 // loop_header_branch
      %29 = sbr.rel (%p27) target = $region8
    $region5: #{tpu_custom_call.1} parent=1 // loop_body
      %s31 = ssub.s32 %s26, 1
      %s32 = ssub.s32 %s26, 2
      %s42 = sadd.s32 1, %s35
      %p43 = scmp.ge.s32.totalorder %s42, 3
      %s44 = scalar_select %p43, 0, %s42
      %s45 = sadd.s32 1, %s34
      %s46 = scalar_select %p43, %s45, %s34
      %p47 = scmp.ge.s32.totalorder %s46, 2
      %s48 = scalar_select %p47, 0, %s46
      %s49 = sadd.s32 1, %s33
      %s50 = scalar_select %p47, %s49, %s33
      %p51 = scmp.ge.s32.totalorder %s50, 6
      %s52 = scalar_select %p51, 0, %s50
      %s53 = ssub.s32 %s34, %s48
      %s54 = ssub.s32 %s35, %s44
      %s55 = sor.u32 %s53, %s54
      %p56 = scmp.eq.s32.totalorder %s55, 0
      %s58 = sadd.s32 %s57, 1
      %s59 = scalar_select %p56, %s57, %s58
      %p62 = pneg %p56
      %p63 = scmp.eq.s32.totalorder %s26, 35
      %p64 = por %p62, %p63
      %p65 = scmp.ne.s32.totalorder %s57, %s60
      %p66 = scmp.eq.s32.totalorder %s26, 0
      %p67 = por %p65, %p66
      %p68 = scmp.ne.s32.totalorder %s57, %s60
      %p69 = scmp.eq.s32.totalorder %s31, 35
      %p70 = por %p68, %p69
      %p71 = scmp.ne.s32.totalorder %s60, %s61
      %p72 = scmp.eq.s32.totalorder %s31, 0
      %p73 = por %p71, %p72
      %p74 = scmp.ne.s32.totalorder %s60, %s61
      %p75 = scmp.eq.s32.totalorder %s32, 35
      %p76 = por %p74, %p75
      %p78 = scmp.ne.s32.totalorder %s61, %s77
      %p79 = scmp.eq.s32.totalorder %s32, 0
      %p80 = por %p78, %p79
      %s82 = sadd.s32 %s81, 1
      %p85 = scmp.eq.s32.totalorder %s26, 35
      %p86 = scmp.ne.s32.totalorder %s81, %s83
      %p87 = scmp.eq.s32.totalorder %s26, 0
      %p88 = por %p86, %p87
      %p89 = scmp.ne.s32.totalorder %s81, %s83
      %p90 = scmp.eq.s32.totalorder %s31, 35
      %p91 = por %p89, %p90
      %p92 = scmp.ne.s32.totalorder %s83, %s84
      %p93 = scmp.eq.s32.totalorder %s31, 0
      %p94 = por %p92, %p93
      %p95 = scmp.ne.s32.totalorder %s83, %s84
      %p96 = scmp.eq.s32.totalorder %s32, 35
      %p97 = por %p95, %p96
      %p99 = scmp.ne.s32.totalorder %s84, %s98
      %p100 = scmp.eq.s32.totalorder %s32, 0
      %p101 = por %p99, %p100
      %s103 = sadd.s32 %s102, 1
      %p106 = scmp.eq.s32.totalorder %s26, 35
      %p107 = scmp.ne.s32.totalorder %s102, %s104
      %p108 = scmp.eq.s32.totalorder %s26, 0
      %p109 = por %p107, %p108
      %p110 = scmp.ne.s32.totalorder %s102, %s104
      %p111 = scmp.eq.s32.totalorder %s31, 35
      %p112 = por %p110, %p111
      %p113 = scmp.ne.s32.totalorder %s104, %s105
      %p114 = scmp.eq.s32.totalorder %s31, 0
      %p115 = por %p113, %p114
      %p116 = scmp.ne.s32.totalorder %s104, %s105
      %p117 = scmp.eq.s32.totalorder %s32, 35
      %p118 = por %p116, %p117
      %p120 = scmp.ne.s32.totalorder %s105, %s119
      %p121 = scmp.eq.s32.totalorder %s32, 0
      %p122 = por %p120, %p121
      %s124 = sadd.s32 %s123, 1
      %p127 = scmp.eq.s32.totalorder %s26, 35
      %p128 = scmp.ne.s32.totalorder %s123, %s125
      %p129 = scmp.eq.s32.totalorder %s26, 0
      %p130 = por %p128, %p129
      %p131 = scmp.ne.s32.totalorder %s123, %s125
      %p132 = scmp.eq.s32.totalorder %s31, 35
      %p133 = por %p131, %p132
      %p134 = scmp.ne.s32.totalorder %s125, %s126
      %p135 = scmp.eq.s32.totalorder %s31, 0
      %p136 = por %p134, %p135
      %p137 = scmp.ne.s32.totalorder %s125, %s126
      %p138 = scmp.eq.s32.totalorder %s32, 35
      %p139 = por %p137, %p138
      %p141 = scmp.ne.s32.totalorder %s126, %s140
      %p142 = scmp.eq.s32.totalorder %s32, 0
      %p143 = por %p141, %p142
      %s145 = sadd.s32 %s144, 1
      %p148 = scmp.eq.s32.totalorder %s26, 35
      %p149 = scmp.ne.s32.totalorder %s144, %s146
      %p150 = scmp.eq.s32.totalorder %s26, 0
      %p151 = por %p149, %p150
      %p152 = scmp.ne.s32.totalorder %s144, %s146
      %p153 = scmp.eq.s32.totalorder %s31, 35
      %p154 = por %p152, %p153
      %p155 = scmp.ne.s32.totalorder %s146, %s147
      %p156 = scmp.eq.s32.totalorder %s31, 0
      %p157 = por %p155, %p156
      %p158 = scmp.ne.s32.totalorder %s146, %s147
      %p159 = scmp.eq.s32.totalorder %s32, 35
      %p160 = por %p158, %p159
      %p162 = scmp.ne.s32.totalorder %s147, %s161
      %p163 = scmp.eq.s32.totalorder %s32, 0
      %p164 = por %p162, %p163
      %s166 = sadd.s32 %s165, 1
      %p169 = scmp.eq.s32.totalorder %s26, 35
      %p170 = scmp.ne.s32.totalorder %s165, %s167
      %p171 = scmp.eq.s32.totalorder %s26, 0
      %p172 = por %p170, %p171
      %p173 = scmp.ne.s32.totalorder %s165, %s167
      %p174 = scmp.eq.s32.totalorder %s31, 35
      %p175 = por %p173, %p174
      %p176 = scmp.ne.s32.totalorder %s167, %s168
      %p177 = scmp.eq.s32.totalorder %s31, 0
      %p178 = por %p176, %p177
      %p179 = scmp.ne.s32.totalorder %s167, %s168
      %p180 = scmp.eq.s32.totalorder %s32, 35
      %p181 = por %p179, %p180
      %p183 = scmp.ne.s32.totalorder %s168, %s182
      %p184 = scmp.eq.s32.totalorder %s32, 0
      %p185 = por %p183, %p184
      %s187 = sadd.s32 %s186, 1
      %p190 = scmp.eq.s32.totalorder %s26, 35
      %p191 = scmp.ne.s32.totalorder %s186, %s188
      %p192 = scmp.eq.s32.totalorder %s26, 0
      %p193 = por %p191, %p192
      %p194 = scmp.ne.s32.totalorder %s186, %s188
      %p195 = scmp.eq.s32.totalorder %s31, 35
      %p196 = por %p194, %p195
      %p197 = scmp.ne.s32.totalorder %s188, %s189
      %p198 = scmp.eq.s32.totalorder %s31, 0
      %p199 = por %p197, %p198
      %p200 = scmp.ne.s32.totalorder %s188, %s189
      %p201 = scmp.eq.s32.totalorder %s32, 35
      %p202 = por %p200, %p201
      %p204 = scmp.ne.s32.totalorder %s189, %s203
      %p205 = scmp.eq.s32.totalorder %s32, 0
      %p206 = por %p204, %p205
      %s208 = sadd.s32 %s207, 1
      %p211 = scmp.eq.s32.totalorder %s26, 35
      %p212 = scmp.ne.s32.totalorder %s207, %s209
      %p213 = scmp.eq.s32.totalorder %s26, 0
      %p214 = por %p212, %p213
      %p215 = scmp.ne.s32.totalorder %s207, %s209
      %p216 = scmp.eq.s32.totalorder %s31, 35
      %p217 = por %p215, %p216
      %p218 = scmp.ne.s32.totalorder %s209, %s210
      %p219 = scmp.eq.s32.totalorder %s31, 0
      %p220 = por %p218, %p219
      %p221 = scmp.ne.s32.totalorder %s209, %s210
      %p222 = scmp.eq.s32.totalorder %s32, 35
      %p223 = por %p221, %p222
      %p225 = scmp.ne.s32.totalorder %s210, %s224
      %p226 = scmp.eq.s32.totalorder %s32, 0
      %p227 = por %p225, %p226
      %s229 = sadd.s32 %s228, 1
      %p232 = scmp.eq.s32.totalorder %s26, 35
      %p233 = scmp.ne.s32.totalorder %s228, %s230
      %p234 = scmp.eq.s32.totalorder %s26, 0
      %p235 = por %p233, %p234
      %p236 = scmp.ne.s32.totalorder %s228, %s230
      %p237 = scmp.eq.s32.totalorder %s31, 35
      %p238 = por %p236, %p237
      %p239 = scmp.ne.s32.totalorder %s230, %s231
      %p240 = scmp.eq.s32.totalorder %s31, 0
      %p241 = por %p239, %p240
      %p242 = scmp.ne.s32.totalorder %s230, %s231
      %p243 = scmp.eq.s32.totalorder %s32, 35
      %p244 = por %p242, %p243
      %p246 = scmp.ne.s32.totalorder %s231, %s245
      %p247 = scmp.eq.s32.totalorder %s32, 0
      %p248 = por %p246, %p247
      %s250 = sadd.s32 %s249, 1
      %p253 = scmp.eq.s32.totalorder %s26, 35
      %p254 = scmp.ne.s32.totalorder %s249, %s251
      %p255 = scmp.eq.s32.totalorder %s26, 0
      %p256 = por %p254, %p255
      %p257 = scmp.ne.s32.totalorder %s249, %s251
      %p258 = scmp.eq.s32.totalorder %s31, 35
      %p259 = por %p257, %p258
      %p260 = scmp.ne.s32.totalorder %s251, %s252
      %p261 = scmp.eq.s32.totalorder %s31, 0
      %p262 = por %p260, %p261
      %p263 = scmp.ne.s32.totalorder %s251, %s252
      %p264 = scmp.eq.s32.totalorder %s32, 35
      %p265 = por %p263, %p264
      %p267 = scmp.ne.s32.totalorder %s252, %s266
      %p268 = scmp.eq.s32.totalorder %s32, 0
      %p269 = por %p267, %p268
      %s271 = sadd.s32 %s270, 1
      %p274 = scmp.eq.s32.totalorder %s26, 35
      %p275 = scmp.ne.s32.totalorder %s270, %s272
      %p276 = scmp.eq.s32.totalorder %s26, 0
      %p277 = por %p275, %p276
      %p278 = scmp.ne.s32.totalorder %s270, %s272
      %p279 = scmp.eq.s32.totalorder %s31, 35
      %p280 = por %p278, %p279
      %p281 = scmp.ne.s32.totalorder %s272, %s273
      %p282 = scmp.eq.s32.totalorder %s31, 0
      %p283 = por %p281, %p282
      %p284 = scmp.ne.s32.totalorder %s272, %s273
      %p285 = scmp.eq.s32.totalorder %s32, 35
      %p286 = por %p284, %p285
      %p288 = scmp.ne.s32.totalorder %s273, %s287
      %p289 = scmp.eq.s32.totalorder %s32, 0
      %p290 = por %p288, %p289
      %s292 = sadd.s32 %s291, 1
      %p295 = scmp.eq.s32.totalorder %s26, 35
      %p296 = scmp.ne.s32.totalorder %s291, %s293
      %p297 = scmp.eq.s32.totalorder %s26, 0
      %p298 = por %p296, %p297
      %p299 = scmp.ne.s32.totalorder %s291, %s293
      %p300 = scmp.eq.s32.totalorder %s31, 35
      %p301 = por %p299, %p300
      %p302 = scmp.ne.s32.totalorder %s293, %s294
      %p303 = scmp.eq.s32.totalorder %s31, 0
      %p304 = por %p302, %p303
      %p305 = scmp.ne.s32.totalorder %s293, %s294
      %p306 = scmp.eq.s32.totalorder %s32, 35
      %p307 = por %p305, %p306
      %p309 = scmp.ne.s32.totalorder %s294, %s308
      %p310 = scmp.eq.s32.totalorder %s32, 0
      %p311 = por %p309, %p310
      %s313 = sadd.s32 %s312, 1
      %p316 = scmp.eq.s32.totalorder %s26, 35
      %p317 = scmp.ne.s32.totalorder %s312, %s314
      %p318 = scmp.eq.s32.totalorder %s26, 0
      %p319 = por %p317, %p318
      %p320 = scmp.ne.s32.totalorder %s312, %s314
      %p321 = scmp.eq.s32.totalorder %s31, 35
      %p322 = por %p320, %p321
      %p323 = scmp.ne.s32.totalorder %s314, %s315
      %p324 = scmp.eq.s32.totalorder %s31, 0
      %p325 = por %p323, %p324
      %p326 = scmp.ne.s32.totalorder %s314, %s315
      %p327 = scmp.eq.s32.totalorder %s32, 35
      %p328 = por %p326, %p327
      %p330 = scmp.ne.s32.totalorder %s315, %s329
      %p331 = scmp.eq.s32.totalorder %s32, 0
      %p332 = por %p330, %p331
      %s334 = sadd.s32 %s333, 1
      %p337 = scmp.eq.s32.totalorder %s26, 35
      %p338 = scmp.ne.s32.totalorder %s333, %s335
      %p339 = scmp.eq.s32.totalorder %s26, 0
      %p340 = por %p338, %p339
      %p341 = scmp.ne.s32.totalorder %s333, %s335
      %p342 = scmp.eq.s32.totalorder %s31, 35
      %p343 = por %p341, %p342
      %p344 = scmp.ne.s32.totalorder %s335, %s336
      %p345 = scmp.eq.s32.totalorder %s31, 0
      %p346 = por %p344, %p345
      %p347 = scmp.ne.s32.totalorder %s335, %s336
      %p348 = scmp.eq.s32.totalorder %s32, 35
      %p349 = por %p347, %p348
      %p351 = scmp.ne.s32.totalorder %s336, %s350
      %p352 = scmp.eq.s32.totalorder %s32, 0
      %p353 = por %p351, %p352
      %s355 = sadd.s32 %s354, 1
      %p358 = scmp.eq.s32.totalorder %s26, 35
      %p359 = scmp.ne.s32.totalorder %s354, %s356
      %p360 = scmp.eq.s32.totalorder %s26, 0
      %p361 = por %p359, %p360
      %p362 = scmp.ne.s32.totalorder %s354, %s356
      %p363 = scmp.eq.s32.totalorder %s31, 35
      %p364 = por %p362, %p363
      %p365 = scmp.ne.s32.totalorder %s356, %s357
      %p366 = scmp.eq.s32.totalorder %s31, 0
      %p367 = por %p365, %p366
      %p368 = scmp.ne.s32.totalorder %s356, %s357
      %p369 = scmp.eq.s32.totalorder %s32, 35
      %p370 = por %p368, %p369
      %p372 = scmp.ne.s32.totalorder %s357, %s371
      %p373 = scmp.eq.s32.totalorder %s32, 0
      %p374 = por %p372, %p373
      %s376 = sadd.s32 %s375, 1
      %p379 = scmp.eq.s32.totalorder %s26, 35
      %p380 = scmp.ne.s32.totalorder %s375, %s377
      %p381 = scmp.eq.s32.totalorder %s26, 0
      %p382 = por %p380, %p381
      %p383 = scmp.ne.s32.totalorder %s375, %s377
      %p384 = scmp.eq.s32.totalorder %s31, 35
      %p385 = por %p383, %p384
      %p386 = scmp.ne.s32.totalorder %s377, %s378
      %p387 = scmp.eq.s32.totalorder %s31, 0
      %p388 = por %p386, %p387
      %p389 = scmp.ne.s32.totalorder %s377, %s378
      %p390 = scmp.eq.s32.totalorder %s32, 35
      %p391 = por %p389, %p390
      %p393 = scmp.ne.s32.totalorder %s378, %s392
      %p394 = scmp.eq.s32.totalorder %s32, 0
      %p395 = por %p393, %p394
      %s397 = sadd.s32 %s396, 1
      %p400 = scmp.eq.s32.totalorder %s26, 35
      %p401 = scmp.ne.s32.totalorder %s396, %s398
      %p402 = scmp.eq.s32.totalorder %s26, 0
      %p403 = por %p401, %p402
      %p404 = scmp.ne.s32.totalorder %s396, %s398
      %p405 = scmp.eq.s32.totalorder %s31, 35
      %p406 = por %p404, %p405
      %p407 = scmp.ne.s32.totalorder %s398, %s399
      %p408 = scmp.eq.s32.totalorder %s31, 0
      %p409 = por %p407, %p408
      %p410 = scmp.ne.s32.totalorder %s398, %s399
      %p411 = scmp.eq.s32.totalorder %s32, 35
      %p412 = por %p410, %p411
      %p414 = scmp.ne.s32.totalorder %s399, %s413
      %p415 = scmp.eq.s32.totalorder %s32, 0
      %p416 = por %p414, %p415
      %p417 = scmp.le.s32.totalorder 1, %s26
      %p418 = scmp.lt.s32.totalorder %s26, 37
      %p419 = pnand %p417, %p418
      %p420 = pneg %p419
      // Predicated region
      $region9: #{tpu_custom_call.1} parent=5 // pred_check
        _
      $region10: #{tpu_custom_call.1} parent=5 // pred_check_branch
        %422 = sbr.rel (%p419) target = $region12
      $region11: #{tpu_custom_call.1} parent=5 // pred_region
        %s423 = ssub.s32 %s26, 1
        // Predicated region
        $region13: #{tpu_custom_call.1} parent=11 // pred_check
          %p424 = pneg %p94
        $region14: #{tpu_custom_call.1} parent=11 // pred_check_branch
          %426 = sbr.rel (%p424) target = $region16
        $region15: #{tpu_custom_call.1} parent=11 // pred_region
          _
        $region16: #{tpu_custom_call.1} parent=11 // pred_fallthru
          _
        // Predicated region
        $region17: #{tpu_custom_call.1} parent=11 // pred_check
          %p427 = pneg %p115
        $region18: #{tpu_custom_call.1} parent=11 // pred_check_branch
          %429 = sbr.rel (%p427) target = $region20
        $region19: #{tpu_custom_call.1} parent=11 // pred_region
          _
        $region20: #{tpu_custom_call.1} parent=11 // pred_fallthru
          _
        // Predicated region
        $region21: #{tpu_custom_call.1} parent=11 // pred_check
          %p430 = pneg %p136
        $region22: #{tpu_custom_call.1} parent=11 // pred_check_branch
          %432 = sbr.rel (%p430) target = $region24
        $region23: #{tpu_custom_call.1} parent=11 // pred_region
          %s434 = ssub.s32 16, 16
          %435 = vsyncadd [#allocation14], %s434
          %s437 = sshll.u32 [#allocation13], 4
          %s438 = int_to_ptr.vmem [resolvable:$true] %s437
          %440 = dma.hbm_to_vmem [thread:$0]  %s3, 16, %s438, [#allocation14]
        $region24: #{tpu_custom_call.1} parent=11 // pred_fallthru
          _
        // Predicated region
        $region25: #{tpu_custom_call.1} parent=11 // pred_check
          %p441 = pneg %p157
        $region26: #{tpu_custom_call.1} parent=11 // pred_check_branch
          %443 = sbr.rel (%p441) target = $region28
        $region27: #{tpu_custom_call.1} parent=11 // pred_region
          _
        $region28: #{tpu_custom_call.1} parent=11 // pred_fallthru
          _
        // Predicated region
        $region29: #{tpu_custom_call.1} parent=11 // pred_check
          %p444 = pneg %p178
        $region30: #{tpu_custom_call.1} parent=11 // pred_check_branch
          %446 = sbr.rel (%p444) target = $region32
        $region31: #{tpu_custom_call.1} parent=11 // pred_region
          _
        $region32: #{tpu_custom_call.1} parent=11 // pred_fallthru
          _
        // Predicated region
        $region33: #{tpu_custom_call.1} parent=11 // pred_check
          %p447 = pneg %p199
        $region34: #{tpu_custom_call.1} parent=11 // pred_check_branch
          %449 = sbr.rel (%p447) target = $region36
        $region35: #{tpu_custom_call.1} parent=11 // pred_region
          _
        $region36: #{tpu_custom_call.1} parent=11 // pred_fallthru
          _
        // Predicated region
        $region37: #{tpu_custom_call.1} parent=11 // pred_check
          %p450 = pneg %p220
        $region38: #{tpu_custom_call.1} parent=11 // pred_check_branch
          %452 = sbr.rel (%p450) target = $region40
        $region39: #{tpu_custom_call.1} parent=11 // pred_region
          %s454 = ssub.s32 1024, 1024
          %455 = vsyncadd [#allocation17], %s454
          %s456 = sshll.u32 [#allocation16], 4
          %s457 = int_to_ptr.vmem [resolvable:$true] %s456
          %462 = dma.hbm_to_vmem [thread:$0]  %s7, 1024, %s457, [#allocation17], 128, 128, 8
        $region40: #{tpu_custom_call.1} parent=11 // pred_fallthru
          _
        // Predicated region
        $region41: #{tpu_custom_call.1} parent=11 // pred_check
          %p463 = pneg %p241
        $region42: #{tpu_custom_call.1} parent=11 // pred_check_branch
          %465 = sbr.rel (%p463) target = $region44
        $region43: #{tpu_custom_call.1} parent=11 // pred_region
          _
        $region44: #{tpu_custom_call.1} parent=11 // pred_fallthru
          _
        // Predicated region
        $region45: #{tpu_custom_call.1} parent=11 // pred_check
          %p466 = pneg %p262
        $region46: #{tpu_custom_call.1} parent=11 // pred_check_branch
          %468 = sbr.rel (%p466) target = $region48
        $region47: #{tpu_custom_call.1} parent=11 // pred_region
          _
        $region48: #{tpu_custom_call.1} parent=11 // pred_fallthru
          _
        // Predicated region
        $region49: #{tpu_custom_call.1} parent=11 // pred_check
          %p469 = pneg %p283
        $region50: #{tpu_custom_call.1} parent=11 // pred_check_branch
          %471 = sbr.rel (%p469) target = $region52
        $region51: #{tpu_custom_call.1} parent=11 // pred_region
          %s473 = ssub.s32 1024, 1024
          %474 = vsyncadd [#allocation17], %s473
          %s475 = sshll.u32 [#allocation18], 4
          %s476 = int_to_ptr.vmem [resolvable:$true] %s475
          %481 = dma.hbm_to_vmem [thread:$0]  %s10, 1024, %s476, [#allocation17], 128, 128, 8
        $region52: #{tpu_custom_call.1} parent=11 // pred_fallthru
          _
        // Predicated region
        $region53: #{tpu_custom_call.1} parent=11 // pred_check
          %p482 = pneg %p304
        $region54: #{tpu_custom_call.1} parent=11 // pred_check_branch
          %484 = sbr.rel (%p482) target = $region56
        $region55: #{tpu_custom_call.1} parent=11 // pred_region
          _
        $region56: #{tpu_custom_call.1} parent=11 // pred_fallthru
          _
        // Predicated region
        $region57: #{tpu_custom_call.1} parent=11 // pred_check
          %p485 = pneg %p325
        $region58: #{tpu_custom_call.1} parent=11 // pred_check_branch
          %487 = sbr.rel (%p485) target = $region60
        $region59: #{tpu_custom_call.1} parent=11 // pred_region
          _
        $region60: #{tpu_custom_call.1} parent=11 // pred_fallthru
          _
        // Predicated region
        $region61: #{tpu_custom_call.1} parent=11 // pred_check
          %p488 = pneg %p346
        $region62: #{tpu_custom_call.1} parent=11 // pred_check_branch
          %490 = sbr.rel (%p488) target = $region64
        $region63: #{tpu_custom_call.1} parent=11 // pred_region
          %s492 = ssub.s32 2048, 2048
          %493 = vsyncadd [#allocation20], %s492
          %s494 = sshll.u32 [#allocation19], 4
          %s495 = int_to_ptr.vmem [resolvable:$true] %s494
          %500 = dma.hbm_to_vmem [thread:$0]  %s13, 2048, %s495, [#allocation20], 128, 128, 8
        $region64: #{tpu_custom_call.1} parent=11 // pred_fallthru
          _
        // Predicated region
        $region65: #{tpu_custom_call.1} parent=11 // pred_check
          %p501 = pneg %p367
        $region66: #{tpu_custom_call.1} parent=11 // pred_check_branch
          %503 = sbr.rel (%p501) target = $region68
        $region67: #{tpu_custom_call.1} parent=11 // pred_region
          _
        $region68: #{tpu_custom_call.1} parent=11 // pred_fallthru
          _
        // Predicated region
        $region69: #{tpu_custom_call.1} parent=11 // pred_check
          %p504 = pneg %p388
        $region70: #{tpu_custom_call.1} parent=11 // pred_check_branch
          %506 = sbr.rel (%p504) target = $region72
        $region71: #{tpu_custom_call.1} parent=11 // pred_region
          _
        $region72: #{tpu_custom_call.1} parent=11 // pred_fallthru
          _
      $region12: #{tpu_custom_call.1} parent=5 // pred_fallthru
        _
      %p507 = scmp.lt.s32.totalorder %s26, 36
      // Predicated region
      $region73: #{tpu_custom_call.1} parent=5 // pred_check
        %p508 = pneg %p507
      $region74: #{tpu_custom_call.1} parent=5 // pred_check_branch
        %510 = sbr.rel (%p508) target = $region76
      $region75: #{tpu_custom_call.1} parent=5 // pred_region
        // Predicated region
        $region77: #{tpu_custom_call.1} parent=75 // pred_check
          %p511 = pneg %p67
        $region78: #{tpu_custom_call.1} parent=75 // pred_check_branch
          %513 = sbr.rel (%p511) target = $region80
        $region79: #{tpu_custom_call.1} parent=75 // pred_region
          %p514 = scmp.lt.s32.totalorder %s34, 1
          %s515 = scalar_select %p514, %s34, 1
          %p516 = scmp.lt.s32.totalorder %s35, 2
          %s517 = scalar_select %p516, %s35, 2
          %s518 = smul.addr %s515, 3
          %s519 = sadd.s32 %s517, %s518
          %s520 = smul.addr %s519, 8
          %s521 = scalar_lea.vmem %s0, %s520
        $region80: #{tpu_custom_call.1} parent=75 // pred_fallthru
          _
      $region76: #{tpu_custom_call.1} parent=5 // pred_fallthru
        _
      %p522 = scmp.le.s32.totalorder 1, %s26
      %p523 = scmp.lt.s32.totalorder %s26, 37
      %p524 = pnand %p522, %p523
      %p525 = pneg %p524
      // Predicated region
      $region81: #{tpu_custom_call.1} parent=5 // pred_check
        _
      $region82: #{tpu_custom_call.1} parent=5 // pred_check_branch
        %527 = sbr.rel (%p524) target = $region84
      $region83: #{tpu_custom_call.1} parent=5 // pred_region
        %s528 = ssub.s32 %s26, 1
        // Predicated region
        $region85: #{tpu_custom_call.1} parent=83 // pred_check
          %p529 = pneg %p136
        $region86: #{tpu_custom_call.1} parent=83 // pred_check_branch
          %531 = sbr.rel (%p529) target = $region88
        $region87: #{tpu_custom_call.1} parent=83 // pred_region
          %532 = dma.done [#allocation14], 16
        $region88: #{tpu_custom_call.1} parent=83 // pred_fallthru
          _
        // Predicated region
        $region89: #{tpu_custom_call.1} parent=83 // pred_check
          %p533 = pneg %p220
        $region90: #{tpu_custom_call.1} parent=83 // pred_check_branch
          %535 = sbr.rel (%p533) target = $region92
        $region91: #{tpu_custom_call.1} parent=83 // pred_region
          %536 = dma.done [#allocation17], 1024
        $region92: #{tpu_custom_call.1} parent=83 // pred_fallthru
          _
        // Predicated region
        $region93: #{tpu_custom_call.1} parent=83 // pred_check
          %p537 = pneg %p283
        $region94: #{tpu_custom_call.1} parent=83 // pred_check_branch
          %539 = sbr.rel (%p537) target = $region96
        $region95: #{tpu_custom_call.1} parent=83 // pred_region
          %540 = dma.done [#allocation17], 1024
        $region96: #{tpu_custom_call.1} parent=83 // pred_fallthru
          _
        // Predicated region
        $region97: #{tpu_custom_call.1} parent=83 // pred_check
          %p541 = pneg %p346
        $region98: #{tpu_custom_call.1} parent=83 // pred_check_branch
          %543 = sbr.rel (%p541) target = $region100
        $region99: #{tpu_custom_call.1} parent=83 // pred_region
          %544 = dma.done [#allocation20], 2048
        $region100: #{tpu_custom_call.1} parent=83 // pred_fallthru
          _
        %p545 = scmp.lt.s32.totalorder %s37, 1
        %s546 = scalar_select %p545, %s37, 1
        %p547 = scmp.lt.s32.totalorder %s38, 2
        %s548 = scalar_select %p547, %s38, 2
        %s549 = smul.addr %s546, 3
        %s550 = sadd.s32 %s548, %s549
        %s551 = smul.addr %s550, 8
        %s552 = scalar_lea.vmem %s0, %s551
        %p553 = pneg %p73
        %p554 = pneg %p70
        %p555 = pneg %p94
        %p556 = pneg %p91
        %p557 = pneg %p115
        %p558 = pneg %p112
        %p559 = pneg %p136
        %p560 = pneg %p133
        %p561 = pneg %p157
        %p562 = pneg %p154
        %p563 = pneg %p178
        %p564 = pneg %p175
        %p565 = pneg %p199
        %p566 = pneg %p196
        %p567 = pneg %p220
        %p568 = pneg %p217
        %p569 = pneg %p241
        %p570 = pneg %p238
        %p571 = pneg %p262
        %p572 = pneg %p259
        %p573 = pneg %p283
        %p574 = pneg %p280
        %p575 = pneg %p304
        %p576 = pneg %p301
        %p577 = pneg %p325
        %p578 = pneg %p322
        %p579 = pneg %p346
        %p580 = pneg %p343
        %p581 = pneg %p367
        %p582 = pneg %p364
        %p583 = pneg %p388
        %p584 = pneg %p385
        %p585 = pneg %p409
        %p586 = pneg %p406
        %p587 = scmp.lt.s32.totalorder %s37, 1
        %s588 = scalar_select %p587, %s37, 1
        %p589 = scmp.lt.s32.totalorder %s38, 2
        %s590 = scalar_select %p589, %s38, 2
        %s591 = smul.addr %s588, 3
        %s592 = sadd.s32 %s590, %s591
        %s593 = smul.addr %s592, 8
        %s594 = scalar_lea.vmem %s0, %s593
        %p595 = scmp.eq.s32.totalorder %s37, 0
        %p596 = scmp.eq.s32.totalorder %s38, 0
        %p597 = pnand %p595, %p596
        %p598 = pneg %p597
        %p599 = scmp.eq.s32.totalorder %s37, 1
        %p600 = scmp.eq.s32.totalorder %s38, 2
        %p601 = pnand %p599, %p600
        %p602 = pneg %p601
        %v603 = vld [vmem:[%s594] sm:$0xff]
        %s604 = smul.u32 %s38, 8
        %v605 = vlaneseq
        %v606 = vshrl.u32 %v605, 7
        %v607 = vstv %s604
        %v608 = vadd.s32 %v607, %v606
        %vm609 = vcmp.lt.s32.totalorder %v608, 20
        %p610 = scmp.eq.s32.totalorder %s36, 0
        // Predicated region
        $region101: #{tpu_custom_call.1} parent=83 // pred_check
          %p611 = pneg %p610
        $region102: #{tpu_custom_call.1} parent=83 // pred_check_branch
          %613 = sbr.rel (%p611) target = $region104
        $region103: #{tpu_custom_call.1} parent=83 // pred_region
          // Predicated region
          $region105: #{tpu_custom_call.1} parent=103 // pred_check
            _
          $region106: #{tpu_custom_call.1} parent=103 // pred_check_branch
            %615 = sbr.rel (%p597) target = $region108
          $region107: #{tpu_custom_call.1} parent=103 // pred_region
            %vm616 = vcmask 516096
            %617 = vst.msk [vmem:[#allocation2] sm:$0x1] %vm616, 0.0
            %618 = vst.msk [vmem:[#allocation3] sm:$0x1] %vm616, 0.0
          $region108: #{tpu_custom_call.1} parent=103 // pred_fallthru
            _
          %v619 = vld [vmem:[%s1] sm:$0x7]
          %621 = vset.pattern.permute.xlu0 0
          %622 = vperm.xlu0 %621, %v603
          %v623 = vpop.permute.xlu0 %622
          %v625 = vlaneseq
          %v626 = vshrl.u32 %v625, 7
          %v627 = vsub.s32 0, %v626
          %v628 = vrot.slane %v619, %v627
          %v629 = vmul.f32 %v623, %v628
          %630 = vset.pattern.permute.xlu0 1
          %631 = vperm.xlu0 %630, %v603
          %v632 = vpop.permute.xlu0 %631
          %v634 = vlaneseq
          %v635 = vshrl.u32 %v634, 7
          %v636 = vsub.s32 1, %v635
          %v637 = vrot.slane %v619, %v636
          %v638 = vmul.f32 %v632, %v637
          %v639 = vadd.f32 %v629, %v638
          %640 = vset.pattern.permute.xlu0 2
          %641 = vperm.xlu0 %640, %v603
          %v642 = vpop.permute.xlu0 %641
          %v644 = vlaneseq
          %v645 = vshrl.u32 %v644, 7
          %v646 = vsub.s32 2, %v645
          %v647 = vrot.slane %v619, %v646
          %v648 = vmul.f32 %v642, %v647
          %v649 = vadd.f32 %v639, %v648
          %v650 = vsel %vm609, 1, 0
          %vm651 = vcmp.eq.s32.totalorder %v650, 1
          %v652 = vsel %vm651, %v649, 0.0
          %v653 = vld [vmem:[#allocation2] sm:$0x1]
          %vm654 = vcmask 523264
          %v655 = vsel %vm654, %v652, 0.0
          %v656 = vrot.slane %v655, 4
          %v657 = vadd.f32 %v655, %v656
          %v658 = vrot.slane %v657, 2
          %v659 = vadd.f32 %v657, %v658
          %v660 = vrot.slane %v659, 1
          %v661 = vadd.f32 %v659, %v660
          %v662 = vadd.f32 %v653, %v661
          %vm663 = vcmask 516096
          %664 = vst.msk [vmem:[#allocation2] sm:$0x1] %vm663, %v662
          %v665 = vld [vmem:[#allocation3] sm:$0x1]
          %v666 = vmul.f32 %v652, %v652
          %v667 = vsel %vm654, %v666, 0.0
          %v668 = vrot.slane %v667, 4
          %v669 = vadd.f32 %v667, %v668
          %v670 = vrot.slane %v669, 2
          %v671 = vadd.f32 %v669, %v670
          %v672 = vrot.slane %v671, 1
          %v673 = vadd.f32 %v671, %v672
          %v674 = vadd.f32 %v665, %v673
          %675 = vst.msk [vmem:[#allocation3] sm:$0x1] %vm663, %v674
          // Predicated region
          $region109: #{tpu_custom_call.1} parent=103 // pred_check
            _
          $region110: #{tpu_custom_call.1} parent=103 // pred_check_branch
            %677 = sbr.rel (%p601) target = $region112
          $region111: #{tpu_custom_call.1} parent=103 // pred_region
            %v678 = vld [vmem:[#allocation2] sm:$0x1]
            %v679 = vmul.f32 %v678, 0.025
            %v680 = vld [vmem:[#allocation3] sm:$0x1]
            %v681 = vmul.f32 %v680, 0.025
            %v682 = vmul.f32 %v679, %v679
            %v683 = vsub.f32 %v681, %v682
            %v684 = vmax.f32 %v683, 0.0
            %v685 = vld [vmem:[%s2] sm:$0x1]
            %v686 = vadd.f32 %v684, 1e-05
            %v687 = vrsqrt.pop %v686
            %v688 = vmul.f32 %v685, %v687
            %v689 = vld [vmem:[#allocation13] sm:$0x1]
            %v690 = vmul.f32 %v679, %v688
            %v691 = vsub.f32 %v689, %v690
            %692 = vst.msk [vmem:[#allocation2] sm:$0x1] %vm663, %v688
            %693 = vst.msk [vmem:[#allocation3] sm:$0x1] %vm663, %v691
          $region112: #{tpu_custom_call.1} parent=103 // pred_fallthru
            _
        $region104: #{tpu_custom_call.1} parent=83 // pred_fallthru
          _
        %p694 = scmp.eq.s32.totalorder %s36, 1
        // Predicated region
        $region113: #{tpu_custom_call.1} parent=83 // pred_check
          %p695 = pneg %p694
        $region114: #{tpu_custom_call.1} parent=83 // pred_check_branch
          %697 = sbr.rel (%p695) target = $region116
        $region115: #{tpu_custom_call.1} parent=83 // pred_region
          // Predicated region
          $region117: #{tpu_custom_call.1} parent=115 // pred_check
            _
          $region118: #{tpu_custom_call.1} parent=115 // pred_check_branch
            %699 = sbr.rel (%p597) target = $region120
          $region119: #{tpu_custom_call.1} parent=115 // pred_region
            %vm700 = vcmask 516096
            %701 = vst.msk [vmem:[#allocation4] sm:$0x1] %vm700, 0.0
            %702 = vst.msk [vmem:[#allocation5] sm:$0x1] %vm700, 0.0
          $region120: #{tpu_custom_call.1} parent=115 // pred_fallthru
            _
          %v703 = vld [vmem:[%s1] sm:$0x7]
          %705 = vset.pattern.permute.xlu0 0
          %706 = vperm.xlu0 %705, %v603
          %v707 = vpop.permute.xlu0 %706
          %v709 = vlaneseq
          %v710 = vshrl.u32 %v709, 7
          %v711 = vsub.s32 0, %v710
          %v712 = vrot.slane %v703, %v711
          %v713 = vmul.f32 %v707, %v712
          %714 = vset.pattern.permute.xlu0 1
          %715 = vperm.xlu0 %714, %v603
          %v716 = vpop.permute.xlu0 %715
          %v718 = vlaneseq
          %v719 = vshrl.u32 %v718, 7
          %v720 = vsub.s32 1, %v719
          %v721 = vrot.slane %v703, %v720
          %v722 = vmul.f32 %v716, %v721
          %v723 = vadd.f32 %v713, %v722
          %724 = vset.pattern.permute.xlu0 2
          %725 = vperm.xlu0 %724, %v603
          %v726 = vpop.permute.xlu0 %725
          %v728 = vlaneseq
          %v729 = vshrl.u32 %v728, 7
          %v730 = vsub.s32 2, %v729
          %v731 = vrot.slane %v703, %v730
          %v732 = vmul.f32 %v726, %v731
          %v733 = vadd.f32 %v723, %v732
          %v734 = vld [vmem:[#allocation2] sm:$0x1]
          %v736 = vlaneseq
          %v737 = vshrl.u32 %v736, 7
          %v738 = vsub.s32 0, %v737
          %v739 = vrot.slane %v734, %v738
          %v741 = vmul.f32 %v733, %v739
          %v742 = vld [vmem:[#allocation3] sm:$0x1]
          %v744 = vlaneseq
          %v745 = vshrl.u32 %v744, 7
          %v746 = vsub.s32 0, %v745
          %v747 = vrot.slane %v742, %v746
          %v749 = vadd.f32 %v741, %v747
          %v750 = vmax.f32 %v749, 0.0
          %v751 = vld [vmem:[%s4] sm:$0xff]
          %v752 = vld [vmem:[%s4 + $0x8] sm:$0xff]
          %v753 = vld [vmem:[%s4 + $0x10] sm:$0xff]
          %v754 = vld [vmem:[%s4 + $0x18] sm:$0xff]
          %v755 = vld [vmem:[%s4 + $0x20] sm:$0xff]
          %v756 = vld [vmem:[%s4 + $0x28] sm:$0xff]
          %v757 = vld [vmem:[%s4 + $0x30] sm:$0xff]
          %v758 = vld [vmem:[%s4 + $0x38] sm:$0xff]
          %vm759 = vcmask 523264
          %v761 = vsel %vm759, %v750, 0
          %763 = vmatprep.subr.mxu0 0.0
          %764 = vmatpush1.msra.mxu0 %v751
          %765 = vmatprep.subr.mxu0 0.0
          %766 = vmatpush1.msra.mxu0 %v752
          %767 = vmatprep.subr.mxu0 0.0
          %768 = vmatpush1.msra.mxu0 %v753
          %769 = vmatprep.subr.mxu0 0.0
          %770 = vmatpush1.msra.mxu0 %v754
          %771 = vmatprep.subr.mxu0 0.0
          %772 = vmatpush1.msra.mxu0 %v755
          %773 = vmatprep.subr.mxu0 0.0
          %774 = vmatpush1.msra.mxu0 %v756
          %775 = vmatprep.subr.mxu0 0.0
          %776 = vmatpush1.msra.mxu0 %v757
          %777 = vmatprep.subr.mxu0 0.0
          %778 = vmatpush1.msra.mxu0 %v758
          %779 = vmatprep.subr.mxu0 0.0
          %780 = vmatpush1.msra.mxu0 0.0
          %781 = vmatprep.subr.mxu0 0.0
          %782 = vmatpush1.msra.mxu0 0.0
          %783 = vmatprep.subr.mxu0 0.0
          %784 = vmatpush1.msra.mxu0 0.0
          %785 = vmatprep.subr.mxu0 0.0
          %786 = vmatpush1.msra.mxu0 0.0
          %787 = vmatprep.subr.mxu0 0.0
          %788 = vmatpush1.msra.mxu0 0.0
          %789 = vmatprep.subr.mxu0 0.0
          %790 = vmatpush1.msra.mxu0 0.0
          %791 = vmatprep.subr.mxu0 0.0
          %792 = vmatpush1.msra.mxu0 0.0
          %793 = vmatprep.subr.mxu0 0.0
          %794 = vmatpush1.msra.mxu0 0.0
          %795 = vmatprep.subr.mxu0 0.0
          %796 = vmatpush1.msra.mxu0 0.0
          %797 = vmatprep.subr.mxu0 0.0
          %798 = vmatpush1.msra.mxu0 0.0
          %799 = vmatprep.subr.mxu0 0.0
          %800 = vmatpush1.msra.mxu0 0.0
          %801 = vmatprep.subr.mxu0 0.0
          %802 = vmatpush1.msra.mxu0 0.0
          %803 = vmatprep.subr.mxu0 0.0
          %804 = vmatpush1.msra.mxu0 0.0
          %805 = vmatprep.subr.mxu0 0.0
          %806 = vmatpush1.msra.mxu0 0.0
          %807 = vmatprep.subr.mxu0 0.0
          %808 = vmatpush1.msra.mxu0 0.0
          %809 = vmatprep.subr.mxu0 0.0
          %810 = vmatpush1.msra.mxu0 0.0
          %811 = vmatprep.subr.mxu0 0.0
          %812 = vmatpush1.msra.mxu0 0.0
          %813 = vmatprep.subr.mxu0 0.0
          %814 = vmatpush1.msra.mxu0 0.0
          %815 = vmatprep.subr.mxu0 0.0
          %816 = vmatpush1.msra.mxu0 0.0
          %817 = vmatprep.subr.mxu0 0.0
          %818 = vmatpush1.msra.mxu0 0.0
          %819 = vmatprep.subr.mxu0 0.0
          %820 = vmatpush1.msra.mxu0 0.0
          %821 = vmatprep.subr.mxu0 0.0
          %822 = vmatpush1.msra.mxu0 0.0
          %823 = vmatprep.subr.mxu0 0.0
          %824 = vmatpush1.msra.mxu0 0.0
          %825 = vmatprep.subr.mxu0 0.0
          %826 = vmatpush1.msra.mxu0 0.0
          %827 = vmatprep.mubr.f32.mxu0 0.0
          %828 = vmatmul.mubr.f32.gmra.mrb[0].mxu0 %v761
          %v829 = vpop.f32.mrb[0].mxu0
          %v830 = vadd.f32 0.0, %v829
          %v831 = vpop.f32.mrb[0].mxu0
          %832 = vdwg.mxu0
          %v833 = vsel %vm609, 1, 0
          %vm834 = vcmp.eq.s32.totalorder %v833, 1
          %v835 = vsel %vm834, %v830, 0.0
          %v836 = vld [vmem:[#allocation4] sm:$0x1]
          %v837 = vsel %vm759, %v835, 0.0
          %v838 = vrot.slane %v837, 4
          %v839 = vadd.f32 %v837, %v838
          %v840 = vrot.slane %v839, 2
          %v841 = vadd.f32 %v839, %v840
          %v842 = vrot.slane %v841, 1
          %v843 = vadd.f32 %v841, %v842
          %v844 = vadd.f32 %v836, %v843
          %vm845 = vcmask 516096
          %846 = vst.msk [vmem:[#allocation4] sm:$0x1] %vm845, %v844
          %v847 = vld [vmem:[#allocation5] sm:$0x1]
          %v848 = vmul.f32 %v835, %v835
          %v849 = vsel %vm759, %v848, 0.0
          %v850 = vrot.slane %v849, 4
          %v851 = vadd.f32 %v849, %v850
          %v852 = vrot.slane %v851, 2
          %v853 = vadd.f32 %v851, %v852
          %v854 = vrot.slane %v853, 1
          %v855 = vadd.f32 %v853, %v854
          %v856 = vadd.f32 %v847, %v855
          %857 = vst.msk [vmem:[#allocation5] sm:$0x1] %vm845, %v856
          // Predicated region
          $region121: #{tpu_custom_call.1} parent=115 // pred_check
            _
          $region122: #{tpu_custom_call.1} parent=115 // pred_check_branch
            %859 = sbr.rel (%p601) target = $region124
          $region123: #{tpu_custom_call.1} parent=115 // pred_region
            %v860 = vld [vmem:[#allocation4] sm:$0x1]
            %v861 = vmul.f32 %v860, 0.025
            %v862 = vld [vmem:[#allocation5] sm:$0x1]
            %v863 = vmul.f32 %v862, 0.025
            %v864 = vmul.f32 %v861, %v861
            %v865 = vsub.f32 %v863, %v864
            %v866 = vmax.f32 %v865, 0.0
            %v867 = vld [vmem:[%s5] sm:$0x1]
            %v868 = vadd.f32 %v866, 1e-05
            %v869 = vrsqrt.pop %v868
            %v870 = vmul.f32 %v867, %v869
            %v871 = vld [vmem:[%s6] sm:$0x1]
            %v872 = vmul.f32 %v861, %v870
            %v873 = vsub.f32 %v871, %v872
            %874 = vst.msk [vmem:[#allocation4] sm:$0x1] %vm845, %v870
            %875 = vst.msk [vmem:[#allocation5] sm:$0x1] %vm845, %v873
          $region124: #{tpu_custom_call.1} parent=115 // pred_fallthru
            _
        $region116: #{tpu_custom_call.1} parent=83 // pred_fallthru
          _
        %p876 = scmp.eq.s32.totalorder %s36, 2
        // Predicated region
        $region125: #{tpu_custom_call.1} parent=83 // pred_check
          %p877 = pneg %p876
        $region126: #{tpu_custom_call.1} parent=83 // pred_check_branch
          %879 = sbr.rel (%p877) target = $region128
        $region127: #{tpu_custom_call.1} parent=83 // pred_region
          // Predicated region
          $region129: #{tpu_custom_call.1} parent=127 // pred_check
            _
          $region130: #{tpu_custom_call.1} parent=127 // pred_check_branch
            %881 = sbr.rel (%p597) target = $region132
          $region131: #{tpu_custom_call.1} parent=127 // pred_region
            %vm882 = vcmask 516096
            %883 = vst.msk [vmem:[#allocation6] sm:$0x1] %vm882, 0.0
            %884 = vst.msk [vmem:[#allocation7] sm:$0x1] %vm882, 0.0
          $region132: #{tpu_custom_call.1} parent=127 // pred_fallthru
            _
          %v885 = vld [vmem:[%s1] sm:$0x7]
          %887 = vset.pattern.permute.xlu0 0
          %888 = vperm.xlu0 %887, %v603
          %v889 = vpop.permute.xlu0 %888
          %v891 = vlaneseq
          %v892 = vshrl.u32 %v891, 7
          %v893 = vsub.s32 0, %v892
          %v894 = vrot.slane %v885, %v893
          %v895 = vmul.f32 %v889, %v894
          %896 = vset.pattern.permute.xlu0 1
          %897 = vperm.xlu0 %896, %v603
          %v898 = vpop.permute.xlu0 %897
          %v900 = vlaneseq
          %v901 = vshrl.u32 %v900, 7
          %v902 = vsub.s32 1, %v901
          %v903 = vrot.slane %v885, %v902
          %v904 = vmul.f32 %v898, %v903
          %v905 = vadd.f32 %v895, %v904
          %906 = vset.pattern.permute.xlu0 2
          %907 = vperm.xlu0 %906, %v603
          %v908 = vpop.permute.xlu0 %907
          %v910 = vlaneseq
          %v911 = vshrl.u32 %v910, 7
          %v912 = vsub.s32 2, %v911
          %v913 = vrot.slane %v885, %v912
          %v914 = vmul.f32 %v908, %v913
          %v915 = vadd.f32 %v905, %v914
          %v916 = vld [vmem:[#allocation2] sm:$0x1]
          %v918 = vlaneseq
          %v919 = vshrl.u32 %v918, 7
          %v920 = vsub.s32 0, %v919
          %v921 = vrot.slane %v916, %v920
          %v923 = vmul.f32 %v915, %v921
          %v924 = vld [vmem:[#allocation3] sm:$0x1]
          %v926 = vlaneseq
          %v927 = vshrl.u32 %v926, 7
          %v928 = vsub.s32 0, %v927
          %v929 = vrot.slane %v924, %v928
          %v931 = vadd.f32 %v923, %v929
          %v932 = vmax.f32 %v931, 0.0
          %v933 = vld [vmem:[%s4] sm:$0xff]
          %v934 = vld [vmem:[%s4 + $0x8] sm:$0xff]
          %v935 = vld [vmem:[%s4 + $0x10] sm:$0xff]
          %v936 = vld [vmem:[%s4 + $0x18] sm:$0xff]
          %v937 = vld [vmem:[%s4 + $0x20] sm:$0xff]
          %v938 = vld [vmem:[%s4 + $0x28] sm:$0xff]
          %v939 = vld [vmem:[%s4 + $0x30] sm:$0xff]
          %v940 = vld [vmem:[%s4 + $0x38] sm:$0xff]
          %vm941 = vcmask 523264
          %v943 = vsel %vm941, %v932, 0
          %945 = vmatprep.subr.mxu0 0.0
          %946 = vmatpush1.msra.mxu0 %v933
          %947 = vmatprep.subr.mxu0 0.0
          %948 = vmatpush1.msra.mxu0 %v934
          %949 = vmatprep.subr.mxu0 0.0
          %950 = vmatpush1.msra.mxu0 %v935
          %951 = vmatprep.subr.mxu0 0.0
          %952 = vmatpush1.msra.mxu0 %v936
          %953 = vmatprep.subr.mxu0 0.0
          %954 = vmatpush1.msra.mxu0 %v937
          %955 = vmatprep.subr.mxu0 0.0
          %956 = vmatpush1.msra.mxu0 %v938
          %957 = vmatprep.subr.mxu0 0.0
          %958 = vmatpush1.msra.mxu0 %v939
          %959 = vmatprep.subr.mxu0 0.0
          %960 = vmatpush1.msra.mxu0 %v940
          %961 = vmatprep.subr.mxu0 0.0
          %962 = vmatpush1.msra.mxu0 0.0
          %963 = vmatprep.subr.mxu0 0.0
          %964 = vmatpush1.msra.mxu0 0.0
          %965 = vmatprep.subr.mxu0 0.0
          %966 = vmatpush1.msra.mxu0 0.0
          %967 = vmatprep.subr.mxu0 0.0
          %968 = vmatpush1.msra.mxu0 0.0
          %969 = vmatprep.subr.mxu0 0.0
          %970 = vmatpush1.msra.mxu0 0.0
          %971 = vmatprep.subr.mxu0 0.0
          %972 = vmatpush1.msra.mxu0 0.0
          %973 = vmatprep.subr.mxu0 0.0
          %974 = vmatpush1.msra.mxu0 0.0
          %975 = vmatprep.subr.mxu0 0.0
          %976 = vmatpush1.msra.mxu0 0.0
          %977 = vmatprep.subr.mxu0 0.0
          %978 = vmatpush1.msra.mxu0 0.0
          %979 = vmatprep.subr.mxu0 0.0
          %980 = vmatpush1.msra.mxu0 0.0
          %981 = vmatprep.subr.mxu0 0.0
          %982 = vmatpush1.msra.mxu0 0.0
          %983 = vmatprep.subr.mxu0 0.0
          %984 = vmatpush1.msra.mxu0 0.0
          %985 = vmatprep.subr.mxu0 0.0
          %986 = vmatpush1.msra.mxu0 0.0
          %987 = vmatprep.subr.mxu0 0.0
          %988 = vmatpush1.msra.mxu0 0.0
          %989 = vmatprep.subr.mxu0 0.0
          %990 = vmatpush1.msra.mxu0 0.0
          %991 = vmatprep.subr.mxu0 0.0
          %992 = vmatpush1.msra.mxu0 0.0
          %993 = vmatprep.subr.mxu0 0.0
          %994 = vmatpush1.msra.mxu0 0.0
          %995 = vmatprep.subr.mxu0 0.0
          %996 = vmatpush1.msra.mxu0 0.0
          %997 = vmatprep.subr.mxu0 0.0
          %998 = vmatpush1.msra.mxu0 0.0
          %999 = vmatprep.subr.mxu0 0.0
          %1000 = vmatpush1.msra.mxu0 0.0
          %1001 = vmatprep.subr.mxu0 0.0
          %1002 = vmatpush1.msra.mxu0 0.0
          %1003 = vmatprep.subr.mxu0 0.0
          %1004 = vmatpush1.msra.mxu0 0.0
          %1005 = vmatprep.subr.mxu0 0.0
          %1006 = vmatpush1.msra.mxu0 0.0
          %1007 = vmatprep.subr.mxu0 0.0
          %1008 = vmatpush1.msra.mxu0 0.0
          %1009 = vmatprep.mubr.f32.mxu0 0.0
          %1010 = vmatmul.mubr.f32.gmra.mrb[0].mxu0 %v943
          %v1011 = vpop.f32.mrb[0].mxu0
          %v1012 = vadd.f32 0.0, %v1011
          %v1013 = vpop.f32.mrb[0].mxu0
          %1014 = vdwg.mxu0
          %v1015 = vld [vmem:[#allocation4] sm:$0x1]
          %v1017 = vlaneseq
          %v1018 = vshrl.u32 %v1017, 7
          %v1019 = vsub.s32 0, %v1018
          %v1020 = vrot.slane %v1015, %v1019
          %v1022 = vmul.f32 %v1012, %v1020
          %v1023 = vld [vmem:[#allocation5] sm:$0x1]
          %v1025 = vlaneseq
          %v1026 = vshrl.u32 %v1025, 7
          %v1027 = vsub.s32 0, %v1026
          %v1028 = vrot.slane %v1023, %v1027
          %v1030 = vadd.f32 %v1022, %v1028
          %v1031 = vmax.f32 %v1030, 0.0
          %v1032 = vld [vmem:[#allocation16] sm:$0xff]
          %v1033 = vld [vmem:[#allocation16 + $0x8] sm:$0xff]
          %v1034 = vld [vmem:[#allocation16 + $0x10] sm:$0xff]
          %v1035 = vld [vmem:[#allocation16 + $0x18] sm:$0xff]
          %v1036 = vld [vmem:[#allocation16 + $0x20] sm:$0xff]
          %v1037 = vld [vmem:[#allocation16 + $0x28] sm:$0xff]
          %v1038 = vld [vmem:[#allocation16 + $0x30] sm:$0xff]
          %v1039 = vld [vmem:[#allocation16 + $0x38] sm:$0xff]
          %v1041 = vsel %vm941, %v1031, 0
          %1043 = vmatprep.subr.mxu0 0.0
          %1044 = vmatpush1.msra.mxu0 %v1032
          %1045 = vmatprep.subr.mxu0 0.0
          %1046 = vmatpush1.msra.mxu0 %v1033
          %1047 = vmatprep.subr.mxu0 0.0
          %1048 = vmatpush1.msra.mxu0 %v1034
          %1049 = vmatprep.subr.mxu0 0.0
          %1050 = vmatpush1.msra.mxu0 %v1035
          %1051 = vmatprep.subr.mxu0 0.0
          %1052 = vmatpush1.msra.mxu0 %v1036
          %1053 = vmatprep.subr.mxu0 0.0
          %1054 = vmatpush1.msra.mxu0 %v1037
          %1055 = vmatprep.subr.mxu0 0.0
          %1056 = vmatpush1.msra.mxu0 %v1038
          %1057 = vmatprep.subr.mxu0 0.0
          %1058 = vmatpush1.msra.mxu0 %v1039
          %1059 = vmatprep.subr.mxu0 0.0
          %1060 = vmatpush1.msra.mxu0 0.0
          %1061 = vmatprep.subr.mxu0 0.0
          %1062 = vmatpush1.msra.mxu0 0.0
          %1063 = vmatprep.subr.mxu0 0.0
          %1064 = vmatpush1.msra.mxu0 0.0
          %1065 = vmatprep.subr.mxu0 0.0
          %1066 = vmatpush1.msra.mxu0 0.0
          %1067 = vmatprep.subr.mxu0 0.0
          %1068 = vmatpush1.msra.mxu0 0.0
          %1069 = vmatprep.subr.mxu0 0.0
          %1070 = vmatpush1.msra.mxu0 0.0
          %1071 = vmatprep.subr.mxu0 0.0
          %1072 = vmatpush1.msra.mxu0 0.0
          %1073 = vmatprep.subr.mxu0 0.0
          %1074 = vmatpush1.msra.mxu0 0.0
          %1075 = vmatprep.subr.mxu0 0.0
          %1076 = vmatpush1.msra.mxu0 0.0
          %1077 = vmatprep.subr.mxu0 0.0
          %1078 = vmatpush1.msra.mxu0 0.0
          %1079 = vmatprep.subr.mxu0 0.0
          %1080 = vmatpush1.msra.mxu0 0.0
          %1081 = vmatprep.subr.mxu0 0.0
          %1082 = vmatpush1.msra.mxu0 0.0
          %1083 = vmatprep.subr.mxu0 0.0
          %1084 = vmatpush1.msra.mxu0 0.0
          %1085 = vmatprep.subr.mxu0 0.0
          %1086 = vmatpush1.msra.mxu0 0.0
          %1087 = vmatprep.subr.mxu0 0.0
          %1088 = vmatpush1.msra.mxu0 0.0
          %1089 = vmatprep.subr.mxu0 0.0
          %1090 = vmatpush1.msra.mxu0 0.0
          %1091 = vmatprep.subr.mxu0 0.0
          %1092 = vmatpush1.msra.mxu0 0.0
          %1093 = vmatprep.subr.mxu0 0.0
          %1094 = vmatpush1.msra.mxu0 0.0
          %1095 = vmatprep.subr.mxu0 0.0
          %1096 = vmatpush1.msra.mxu0 0.0
          %1097 = vmatprep.subr.mxu0 0.0
          %1098 = vmatpush1.msra.mxu0 0.0
          %1099 = vmatprep.subr.mxu0 0.0
          %1100 = vmatpush1.msra.mxu0 0.0
          %1101 = vmatprep.subr.mxu0 0.0
          %1102 = vmatpush1.msra.mxu0 0.0
          %1103 = vmatprep.subr.mxu0 0.0
          %1104 = vmatpush1.msra.mxu0 0.0
          %1105 = vmatprep.subr.mxu0 0.0
          %1106 = vmatpush1.msra.mxu0 0.0
          %1107 = vmatprep.mubr.f32.mxu0 0.0
          %1108 = vmatmul.mubr.f32.gmra.mrb[0].mxu0 %v1041
          %v1109 = vpop.f32.mrb[0].mxu0
          %v1110 = vadd.f32 0.0, %v1109
          %v1111 = vpop.f32.mrb[0].mxu0
          %1112 = vdwg.mxu0
          %v1113 = vsel %vm609, 1, 0
          %vm1114 = vcmp.eq.s32.totalorder %v1113, 1
          %v1115 = vsel %vm1114, %v1110, 0.0
          %v1116 = vld [vmem:[#allocation6] sm:$0x1]
          %v1117 = vsel %vm941, %v1115, 0.0
          %v1118 = vrot.slane %v1117, 4
          %v1119 = vadd.f32 %v1117, %v1118
          %v1120 = vrot.slane %v1119, 2
          %v1121 = vadd.f32 %v1119, %v1120
          %v1122 = vrot.slane %v1121, 1
          %v1123 = vadd.f32 %v1121, %v1122
          %v1124 = vadd.f32 %v1116, %v1123
          %vm1125 = vcmask 516096
          %1126 = vst.msk [vmem:[#allocation6] sm:$0x1] %vm1125, %v1124
          %v1127 = vld [vmem:[#allocation7] sm:$0x1]
          %v1128 = vmul.f32 %v1115, %v1115
          %v1129 = vsel %vm941, %v1128, 0.0
          %v1130 = vrot.slane %v1129, 4
          %v1131 = vadd.f32 %v1129, %v1130
          %v1132 = vrot.slane %v1131, 2
          %v1133 = vadd.f32 %v1131, %v1132
          %v1134 = vrot.slane %v1133, 1
          %v1135 = vadd.f32 %v1133, %v1134
          %v1136 = vadd.f32 %v1127, %v1135
          %1137 = vst.msk [vmem:[#allocation7] sm:$0x1] %vm1125, %v1136
          // Predicated region
          $region133: #{tpu_custom_call.1} parent=127 // pred_check
            _
          $region134: #{tpu_custom_call.1} parent=127 // pred_check_branch
            %1139 = sbr.rel (%p601) target = $region136
          $region135: #{tpu_custom_call.1} parent=127 // pred_region
            %v1140 = vld [vmem:[#allocation6] sm:$0x1]
            %v1141 = vmul.f32 %v1140, 0.025
            %v1142 = vld [vmem:[#allocation7] sm:$0x1]
            %v1143 = vmul.f32 %v1142, 0.025
            %v1144 = vmul.f32 %v1141, %v1141
            %v1145 = vsub.f32 %v1143, %v1144
            %v1146 = vmax.f32 %v1145, 0.0
            %v1147 = vld [vmem:[%s8] sm:$0x1]
            %v1148 = vadd.f32 %v1146, 1e-05
            %v1149 = vrsqrt.pop %v1148
            %v1150 = vmul.f32 %v1147, %v1149
            %v1151 = vld [vmem:[%s9] sm:$0x1]
            %v1152 = vmul.f32 %v1141, %v1150
            %v1153 = vsub.f32 %v1151, %v1152
            %1154 = vst.msk [vmem:[#allocation6] sm:$0x1] %vm1125, %v1150
            %1155 = vst.msk [vmem:[#allocation7] sm:$0x1] %vm1125, %v1153
          $region136: #{tpu_custom_call.1} parent=127 // pred_fallthru
            _
        $region128: #{tpu_custom_call.1} parent=83 // pred_fallthru
          _
        %p1156 = scmp.eq.s32.totalorder %s36, 3
        // Predicated region
        $region137: #{tpu_custom_call.1} parent=83 // pred_check
          %p1157 = pneg %p1156
        $region138: #{tpu_custom_call.1} parent=83 // pred_check_branch
          %1159 = sbr.rel (%p1157) target = $region140
        $region139: #{tpu_custom_call.1} parent=83 // pred_region
          // Predicated region
          $region141: #{tpu_custom_call.1} parent=139 // pred_check
            _
          $region142: #{tpu_custom_call.1} parent=139 // pred_check_branch
            %1161 = sbr.rel (%p597) target = $region144
          $region143: #{tpu_custom_call.1} parent=139 // pred_region
            %1162 = vst [vmem:[#allocation8] sm:$0x1] 0.0
            %1163 = vst [vmem:[#allocation9] sm:$0x1] 0.0
          $region144: #{tpu_custom_call.1} parent=139 // pred_fallthru
            _
          %v1164 = vld [vmem:[%s1] sm:$0x7]
          %1166 = vset.pattern.permute.xlu0 0
          %1167 = vperm.xlu0 %1166, %v603
          %v1168 = vpop.permute.xlu0 %1167
          %v1170 = vlaneseq
          %v1171 = vshrl.u32 %v1170, 7
          %v1172 = vsub.s32 0, %v1171
          %v1173 = vrot.slane %v1164, %v1172
          %v1174 = vmul.f32 %v1168, %v1173
          %1175 = vset.pattern.permute.xlu0 1
          %1176 = vperm.xlu0 %1175, %v603
          %v1177 = vpop.permute.xlu0 %1176
          %v1179 = vlaneseq
          %v1180 = vshrl.u32 %v1179, 7
          %v1181 = vsub.s32 1, %v1180
          %v1182 = vrot.slane %v1164, %v1181
          %v1183 = vmul.f32 %v1177, %v1182
          %v1184 = vadd.f32 %v1174, %v1183
          %1185 = vset.pattern.permute.xlu0 2
          %1186 = vperm.xlu0 %1185, %v603
          %v1187 = vpop.permute.xlu0 %1186
          %v1189 = vlaneseq
          %v1190 = vshrl.u32 %v1189, 7
          %v1191 = vsub.s32 2, %v1190
          %v1192 = vrot.slane %v1164, %v1191
          %v1193 = vmul.f32 %v1187, %v1192
          %v1194 = vadd.f32 %v1184, %v1193
          %v1195 = vld [vmem:[#allocation2] sm:$0x1]
          %v1197 = vlaneseq
          %v1198 = vshrl.u32 %v1197, 7
          %v1199 = vsub.s32 0, %v1198
          %v1200 = vrot.slane %v1195, %v1199
          %v1202 = vmul.f32 %v1194, %v1200
          %v1203 = vld [vmem:[#allocation3] sm:$0x1]
          %v1205 = vlaneseq
          %v1206 = vshrl.u32 %v1205, 7
          %v1207 = vsub.s32 0, %v1206
          %v1208 = vrot.slane %v1203, %v1207
          %v1210 = vadd.f32 %v1202, %v1208
          %v1211 = vmax.f32 %v1210, 0.0
          %v1212 = vld [vmem:[%s4] sm:$0xff]
          %v1213 = vld [vmem:[%s4 + $0x8] sm:$0xff]
          %v1214 = vld [vmem:[%s4 + $0x10] sm:$0xff]
          %v1215 = vld [vmem:[%s4 + $0x18] sm:$0xff]
          %v1216 = vld [vmem:[%s4 + $0x20] sm:$0xff]
          %v1217 = vld [vmem:[%s4 + $0x28] sm:$0xff]
          %v1218 = vld [vmem:[%s4 + $0x30] sm:$0xff]
          %v1219 = vld [vmem:[%s4 + $0x38] sm:$0xff]
          %vm1220 = vcmask 523264
          %v1222 = vsel %vm1220, %v1211, 0
          %1224 = vmatprep.subr.mxu0 0.0
          %1225 = vmatpush1.msra.mxu0 %v1212
          %1226 = vmatprep.subr.mxu0 0.0
          %1227 = vmatpush1.msra.mxu0 %v1213
          %1228 = vmatprep.subr.mxu0 0.0
          %1229 = vmatpush1.msra.mxu0 %v1214
          %1230 = vmatprep.subr.mxu0 0.0
          %1231 = vmatpush1.msra.mxu0 %v1215
          %1232 = vmatprep.subr.mxu0 0.0
          %1233 = vmatpush1.msra.mxu0 %v1216
          %1234 = vmatprep.subr.mxu0 0.0
          %1235 = vmatpush1.msra.mxu0 %v1217
          %1236 = vmatprep.subr.mxu0 0.0
          %1237 = vmatpush1.msra.mxu0 %v1218
          %1238 = vmatprep.subr.mxu0 0.0
          %1239 = vmatpush1.msra.mxu0 %v1219
          %1240 = vmatprep.subr.mxu0 0.0
          %1241 = vmatpush1.msra.mxu0 0.0
          %1242 = vmatprep.subr.mxu0 0.0
          %1243 = vmatpush1.msra.mxu0 0.0
          %1244 = vmatprep.subr.mxu0 0.0
          %1245 = vmatpush1.msra.mxu0 0.0
          %1246 = vmatprep.subr.mxu0 0.0
          %1247 = vmatpush1.msra.mxu0 0.0
          %1248 = vmatprep.subr.mxu0 0.0
          %1249 = vmatpush1.msra.mxu0 0.0
          %1250 = vmatprep.subr.mxu0 0.0
          %1251 = vmatpush1.msra.mxu0 0.0
          %1252 = vmatprep.subr.mxu0 0.0
          %1253 = vmatpush1.msra.mxu0 0.0
          %1254 = vmatprep.subr.mxu0 0.0
          %1255 = vmatpush1.msra.mxu0 0.0
          %1256 = vmatprep.subr.mxu0 0.0
          %1257 = vmatpush1.msra.mxu0 0.0
          %1258 = vmatprep.subr.mxu0 0.0
          %1259 = vmatpush1.msra.mxu0 0.0
          %1260 = vmatprep.subr.mxu0 0.0
          %1261 = vmatpush1.msra.mxu0 0.0
          %1262 = vmatprep.subr.mxu0 0.0
          %1263 = vmatpush1.msra.mxu0 0.0
          %1264 = vmatprep.subr.mxu0 0.0
          %1265 = vmatpush1.msra.mxu0 0.0
          %1266 = vmatprep.subr.mxu0 0.0
          %1267 = vmatpush1.msra.mxu0 0.0
          %1268 = vmatprep.subr.mxu0 0.0
          %1269 = vmatpush1.msra.mxu0 0.0
          %1270 = vmatprep.subr.mxu0 0.0
          %1271 = vmatpush1.msra.mxu0 0.0
          %1272 = vmatprep.subr.mxu0 0.0
          %1273 = vmatpush1.msra.mxu0 0.0
          %1274 = vmatprep.subr.mxu0 0.0
          %1275 = vmatpush1.msra.mxu0 0.0
          %1276 = vmatprep.subr.mxu0 0.0
          %1277 = vmatpush1.msra.mxu0 0.0
          %1278 = vmatprep.subr.mxu0 0.0
          %1279 = vmatpush1.msra.mxu0 0.0
          %1280 = vmatprep.subr.mxu0 0.0
          %1281 = vmatpush1.msra.mxu0 0.0
          %1282 = vmatprep.subr.mxu0 0.0
          %1283 = vmatpush1.msra.mxu0 0.0
          %1284 = vmatprep.subr.mxu0 0.0
          %1285 = vmatpush1.msra.mxu0 0.0
          %1286 = vmatprep.subr.mxu0 0.0
          %1287 = vmatpush1.msra.mxu0 0.0
          %1288 = vmatprep.mubr.f32.mxu0 0.0
          %1289 = vmatmul.mubr.f32.gmra.mrb[0].mxu0 %v1222
          %v1290 = vpop.f32.mrb[0].mxu0
          %v1291 = vadd.f32 0.0, %v1290
          %v1292 = vpop.f32.mrb[0].mxu0
          %1293 = vdwg.mxu0
          %v1294 = vld [vmem:[#allocation4] sm:$0x1]
          %v1296 = vlaneseq
          %v1297 = vshrl.u32 %v1296, 7
          %v1298 = vsub.s32 0, %v1297
          %v1299 = vrot.slane %v1294, %v1298
          %v1301 = vmul.f32 %v1291, %v1299
          %v1302 = vld [vmem:[#allocation5] sm:$0x1]
          %v1304 = vlaneseq
          %v1305 = vshrl.u32 %v1304, 7
          %v1306 = vsub.s32 0, %v1305
          %v1307 = vrot.slane %v1302, %v1306
          %v1309 = vadd.f32 %v1301, %v1307
          %v1310 = vmax.f32 %v1309, 0.0
          %v1311 = vld [vmem:[#allocation16] sm:$0xff]
          %v1312 = vld [vmem:[#allocation16 + $0x8] sm:$0xff]
          %v1313 = vld [vmem:[#allocation16 + $0x10] sm:$0xff]
          %v1314 = vld [vmem:[#allocation16 + $0x18] sm:$0xff]
          %v1315 = vld [vmem:[#allocation16 + $0x20] sm:$0xff]
          %v1316 = vld [vmem:[#allocation16 + $0x28] sm:$0xff]
          %v1317 = vld [vmem:[#allocation16 + $0x30] sm:$0xff]
          %v1318 = vld [vmem:[#allocation16 + $0x38] sm:$0xff]
          %v1320 = vsel %vm1220, %v1310, 0
          %1322 = vmatprep.subr.mxu0 0.0
          %1323 = vmatpush1.msra.mxu0 %v1311
          %1324 = vmatprep.subr.mxu0 0.0
          %1325 = vmatpush1.msra.mxu0 %v1312
          %1326 = vmatprep.subr.mxu0 0.0
          %1327 = vmatpush1.msra.mxu0 %v1313
          %1328 = vmatprep.subr.mxu0 0.0
          %1329 = vmatpush1.msra.mxu0 %v1314
          %1330 = vmatprep.subr.mxu0 0.0
          %1331 = vmatpush1.msra.mxu0 %v1315
          %1332 = vmatprep.subr.mxu0 0.0
          %1333 = vmatpush1.msra.mxu0 %v1316
          %1334 = vmatprep.subr.mxu0 0.0
          %1335 = vmatpush1.msra.mxu0 %v1317
          %1336 = vmatprep.subr.mxu0 0.0
          %1337 = vmatpush1.msra.mxu0 %v1318
          %1338 = vmatprep.subr.mxu0 0.0
          %1339 = vmatpush1.msra.mxu0 0.0
          %1340 = vmatprep.subr.mxu0 0.0
          %1341 = vmatpush1.msra.mxu0 0.0
          %1342 = vmatprep.subr.mxu0 0.0
          %1343 = vmatpush1.msra.mxu0 0.0
          %1344 = vmatprep.subr.mxu0 0.0
          %1345 = vmatpush1.msra.mxu0 0.0
          %1346 = vmatprep.subr.mxu0 0.0
          %1347 = vmatpush1.msra.mxu0 0.0
          %1348 = vmatprep.subr.mxu0 0.0
          %1349 = vmatpush1.msra.mxu0 0.0
          %1350 = vmatprep.subr.mxu0 0.0
          %1351 = vmatpush1.msra.mxu0 0.0
          %1352 = vmatprep.subr.mxu0 0.0
          %1353 = vmatpush1.msra.mxu0 0.0
          %1354 = vmatprep.subr.mxu0 0.0
          %1355 = vmatpush1.msra.mxu0 0.0
          %1356 = vmatprep.subr.mxu0 0.0
          %1357 = vmatpush1.msra.mxu0 0.0
          %1358 = vmatprep.subr.mxu0 0.0
          %1359 = vmatpush1.msra.mxu0 0.0
          %1360 = vmatprep.subr.mxu0 0.0
          %1361 = vmatpush1.msra.mxu0 0.0
          %1362 = vmatprep.subr.mxu0 0.0
          %1363 = vmatpush1.msra.mxu0 0.0
          %1364 = vmatprep.subr.mxu0 0.0
          %1365 = vmatpush1.msra.mxu0 0.0
          %1366 = vmatprep.subr.mxu0 0.0
          %1367 = vmatpush1.msra.mxu0 0.0
          %1368 = vmatprep.subr.mxu0 0.0
          %1369 = vmatpush1.msra.mxu0 0.0
          %1370 = vmatprep.subr.mxu0 0.0
          %1371 = vmatpush1.msra.mxu0 0.0
          %1372 = vmatprep.subr.mxu0 0.0
          %1373 = vmatpush1.msra.mxu0 0.0
          %1374 = vmatprep.subr.mxu0 0.0
          %1375 = vmatpush1.msra.mxu0 0.0
          %1376 = vmatprep.subr.mxu0 0.0
          %1377 = vmatpush1.msra.mxu0 0.0
          %1378 = vmatprep.subr.mxu0 0.0
          %1379 = vmatpush1.msra.mxu0 0.0
          %1380 = vmatprep.subr.mxu0 0.0
          %1381 = vmatpush1.msra.mxu0 0.0
          %1382 = vmatprep.subr.mxu0 0.0
          %1383 = vmatpush1.msra.mxu0 0.0
          %1384 = vmatprep.subr.mxu0 0.0
          %1385 = vmatpush1.msra.mxu0 0.0
          %1386 = vmatprep.mubr.f32.mxu0 0.0
          %1387 = vmatmul.mubr.f32.gmra.mrb[0].mxu0 %v1320
          %v1388 = vpop.f32.mrb[0].mxu0
          %v1389 = vadd.f32 0.0, %v1388
          %v1390 = vpop.f32.mrb[0].mxu0
          %1391 = vdwg.mxu0
          %v1392 = vld [vmem:[#allocation6] sm:$0x1]
          %v1394 = vlaneseq
          %v1395 = vshrl.u32 %v1394, 7
          %v1396 = vsub.s32 0, %v1395
          %v1397 = vrot.slane %v1392, %v1396
          %v1399 = vmul.f32 %v1389, %v1397
          %v1400 = vld [vmem:[#allocation7] sm:$0x1]
          %v1402 = vlaneseq
          %v1403 = vshrl.u32 %v1402, 7
          %v1404 = vsub.s32 0, %v1403
          %v1405 = vrot.slane %v1400, %v1404
          %v1407 = vadd.f32 %v1399, %v1405
          %v1408 = vmax.f32 %v1407, 0.0
          %v1409 = vld [vmem:[#allocation18] sm:$0xff]
          %v1410 = vld [vmem:[#allocation18 + $0x8] sm:$0xff]
          %v1411 = vld [vmem:[#allocation18 + $0x10] sm:$0xff]
          %v1412 = vld [vmem:[#allocation18 + $0x18] sm:$0xff]
          %v1413 = vld [vmem:[#allocation18 + $0x20] sm:$0xff]
          %v1414 = vld [vmem:[#allocation18 + $0x28] sm:$0xff]
          %v1415 = vld [vmem:[#allocation18 + $0x30] sm:$0xff]
          %v1416 = vld [vmem:[#allocation18 + $0x38] sm:$0xff]
          %v1418 = vsel %vm1220, %v1408, 0
          %1420 = vmatprep.subr.mxu0 0.0
          %1421 = vmatpush1.msra.mxu0 %v1409
          %1422 = vmatprep.subr.mxu0 0.0
          %1423 = vmatpush1.msra.mxu0 %v1410
          %1424 = vmatprep.subr.mxu0 0.0
          %1425 = vmatpush1.msra.mxu0 %v1411
          %1426 = vmatprep.subr.mxu0 0.0
          %1427 = vmatpush1.msra.mxu0 %v1412
          %1428 = vmatprep.subr.mxu0 0.0
          %1429 = vmatpush1.msra.mxu0 %v1413
          %1430 = vmatprep.subr.mxu0 0.0
          %1431 = vmatpush1.msra.mxu0 %v1414
          %1432 = vmatprep.subr.mxu0 0.0
          %1433 = vmatpush1.msra.mxu0 %v1415
          %1434 = vmatprep.subr.mxu0 0.0
          %1435 = vmatpush1.msra.mxu0 %v1416
          %1436 = vmatprep.subr.mxu0 0.0
          %1437 = vmatpush1.msra.mxu0 0.0
          %1438 = vmatprep.subr.mxu0 0.0
          %1439 = vmatpush1.msra.mxu0 0.0
          %1440 = vmatprep.subr.mxu0 0.0
          %1441 = vmatpush1.msra.mxu0 0.0
          %1442 = vmatprep.subr.mxu0 0.0
          %1443 = vmatpush1.msra.mxu0 0.0
          %1444 = vmatprep.subr.mxu0 0.0
          %1445 = vmatpush1.msra.mxu0 0.0
          %1446 = vmatprep.subr.mxu0 0.0
          %1447 = vmatpush1.msra.mxu0 0.0
          %1448 = vmatprep.subr.mxu0 0.0
          %1449 = vmatpush1.msra.mxu0 0.0
          %1450 = vmatprep.subr.mxu0 0.0
          %1451 = vmatpush1.msra.mxu0 0.0
          %1452 = vmatprep.subr.mxu0 0.0
          %1453 = vmatpush1.msra.mxu0 0.0
          %1454 = vmatprep.subr.mxu0 0.0
          %1455 = vmatpush1.msra.mxu0 0.0
          %1456 = vmatprep.subr.mxu0 0.0
          %1457 = vmatpush1.msra.mxu0 0.0
          %1458 = vmatprep.subr.mxu0 0.0
          %1459 = vmatpush1.msra.mxu0 0.0
          %1460 = vmatprep.subr.mxu0 0.0
          %1461 = vmatpush1.msra.mxu0 0.0
          %1462 = vmatprep.subr.mxu0 0.0
          %1463 = vmatpush1.msra.mxu0 0.0
          %1464 = vmatprep.subr.mxu0 0.0
          %1465 = vmatpush1.msra.mxu0 0.0
          %1466 = vmatprep.subr.mxu0 0.0
          %1467 = vmatpush1.msra.mxu0 0.0
          %1468 = vmatprep.subr.mxu0 0.0
          %1469 = vmatpush1.msra.mxu0 0.0
          %1470 = vmatprep.subr.mxu0 0.0
          %1471 = vmatpush1.msra.mxu0 0.0
          %1472 = vmatprep.subr.mxu0 0.0
          %1473 = vmatpush1.msra.mxu0 0.0
          %1474 = vmatprep.subr.mxu0 0.0
          %1475 = vmatpush1.msra.mxu0 0.0
          %1476 = vmatprep.subr.mxu0 0.0
          %1477 = vmatpush1.msra.mxu0 0.0
          %1478 = vmatprep.subr.mxu0 0.0
          %1479 = vmatpush1.msra.mxu0 0.0
          %1480 = vmatprep.subr.mxu0 0.0
          %1481 = vmatpush1.msra.mxu0 0.0
          %1482 = vmatprep.subr.mxu0 0.0
          %1483 = vmatpush1.msra.mxu0 0.0
          %1484 = vmatprep.mubr.f32.mxu0 0.0
          %1485 = vmatmul.mubr.f32.gmra.mrb[0].mxu0 %v1418
          %v1486 = vpop.f32.mrb[0].mxu0
          %v1487 = vadd.f32 0.0, %v1486
          %v1488 = vpop.f32.mrb[0].mxu0
          %1489 = vdwg.mxu0
          %v1490 = vsel %vm609, 1, 0
          %vm1491 = vcmp.eq.s32.totalorder %v1490, 1
          %v1492 = vsel %vm1491, %v1487, 0.0
          %v1493 = vld [vmem:[#allocation8] sm:$0x1]
          %v1494 = vrot.slane %v1492, 4
          %v1495 = vadd.f32 %v1492, %v1494
          %v1496 = vrot.slane %v1495, 2
          %v1497 = vadd.f32 %v1495, %v1496
          %v1498 = vrot.slane %v1497, 1
          %v1499 = vadd.f32 %v1497, %v1498
          %v1500 = vadd.f32 %v1493, %v1499
          %1501 = vst [vmem:[#allocation8] sm:$0x1] %v1500
          %v1502 = vld [vmem:[#allocation9] sm:$0x1]
          %v1503 = vmul.f32 %v1492, %v1492
          %v1504 = vrot.slane %v1503, 4
          %v1505 = vadd.f32 %v1503, %v1504
          %v1506 = vrot.slane %v1505, 2
          %v1507 = vadd.f32 %v1505, %v1506
          %v1508 = vrot.slane %v1507, 1
          %v1509 = vadd.f32 %v1507, %v1508
          %v1510 = vadd.f32 %v1502, %v1509
          %1511 = vst [vmem:[#allocation9] sm:$0x1] %v1510
          // Predicated region
          $region145: #{tpu_custom_call.1} parent=139 // pred_check
            _
          $region146: #{tpu_custom_call.1} parent=139 // pred_check_branch
            %1513 = sbr.rel (%p601) target = $region148
          $region147: #{tpu_custom_call.1} parent=139 // pred_region
            %v1514 = vld [vmem:[#allocation8] sm:$0x1]
            %v1515 = vmul.f32 %v1514, 0.025
            %v1516 = vld [vmem:[#allocation9] sm:$0x1]
            %v1517 = vmul.f32 %v1516, 0.025
            %v1518 = vmul.f32 %v1515, %v1515
            %v1519 = vsub.f32 %v1517, %v1518
            %v1520 = vmax.f32 %v1519, 0.0
            %v1521 = vld [vmem:[%s11] sm:$0x1]
            %v1522 = vadd.f32 %v1520, 1e-05
            %v1523 = vrsqrt.pop %v1522
            %v1524 = vmul.f32 %v1521, %v1523
            %v1525 = vld [vmem:[%s12] sm:$0x1]
            %v1526 = vmul.f32 %v1515, %v1524
            %v1527 = vsub.f32 %v1525, %v1526
            %1528 = vst [vmem:[#allocation8] sm:$0x1] %v1524
            %1529 = vst [vmem:[#allocation9] sm:$0x1] %v1527
          $region148: #{tpu_custom_call.1} parent=139 // pred_fallthru
            _
        $region140: #{tpu_custom_call.1} parent=83 // pred_fallthru
          _
        %p1530 = scmp.eq.s32.totalorder %s36, 4
        // Predicated region
        $region149: #{tpu_custom_call.1} parent=83 // pred_check
          %p1531 = pneg %p1530
        $region150: #{tpu_custom_call.1} parent=83 // pred_check_branch
          %1533 = sbr.rel (%p1531) target = $region152
        $region151: #{tpu_custom_call.1} parent=83 // pred_region
          // Predicated region
          $region153: #{tpu_custom_call.1} parent=151 // pred_check
            _
          $region154: #{tpu_custom_call.1} parent=151 // pred_check_branch
            %1535 = sbr.rel (%p597) target = $region156
          $region155: #{tpu_custom_call.1} parent=151 // pred_region
            %1536 = vst [vmem:[#allocation10] sm:$0x1] 0.0
            %1537 = vst [vmem:[#allocation11] sm:$0x1] 0.0
          $region156: #{tpu_custom_call.1} parent=151 // pred_fallthru
            _
          %v1538 = vld [vmem:[%s1] sm:$0x7]
          %1540 = vset.pattern.permute.xlu0 0
          %1541 = vperm.xlu0 %1540, %v603
          %v1542 = vpop.permute.xlu0 %1541
          %v1544 = vlaneseq
          %v1545 = vshrl.u32 %v1544, 7
          %v1546 = vsub.s32 0, %v1545
          %v1547 = vrot.slane %v1538, %v1546
          %v1548 = vmul.f32 %v1542, %v1547
          %1549 = vset.pattern.permute.xlu0 1
          %1550 = vperm.xlu0 %1549, %v603
          %v1551 = vpop.permute.xlu0 %1550
          %v1553 = vlaneseq
          %v1554 = vshrl.u32 %v1553, 7
          %v1555 = vsub.s32 1, %v1554
          %v1556 = vrot.slane %v1538, %v1555
          %v1557 = vmul.f32 %v1551, %v1556
          %v1558 = vadd.f32 %v1548, %v1557
          %1559 = vset.pattern.permute.xlu0 2
          %1560 = vperm.xlu0 %1559, %v603
          %v1561 = vpop.permute.xlu0 %1560
          %v1563 = vlaneseq
          %v1564 = vshrl.u32 %v1563, 7
          %v1565 = vsub.s32 2, %v1564
          %v1566 = vrot.slane %v1538, %v1565
          %v1567 = vmul.f32 %v1561, %v1566
          %v1568 = vadd.f32 %v1558, %v1567
          %v1569 = vld [vmem:[#allocation2] sm:$0x1]
          %v1571 = vlaneseq
          %v1572 = vshrl.u32 %v1571, 7
          %v1573 = vsub.s32 0, %v1572
          %v1574 = vrot.slane %v1569, %v1573
          %v1576 = vmul.f32 %v1568, %v1574
          %v1577 = vld [vmem:[#allocation3] sm:$0x1]
          %v1579 = vlaneseq
          %v1580 = vshrl.u32 %v1579, 7
          %v1581 = vsub.s32 0, %v1580
          %v1582 = vrot.slane %v1577, %v1581
          %v1584 = vadd.f32 %v1576, %v1582
          %v1585 = vmax.f32 %v1584, 0.0
          %v1586 = vld [vmem:[%s4] sm:$0xff]
          %v1587 = vld [vmem:[%s4 + $0x8] sm:$0xff]
          %v1588 = vld [vmem:[%s4 + $0x10] sm:$0xff]
          %v1589 = vld [vmem:[%s4 + $0x18] sm:$0xff]
          %v1590 = vld [vmem:[%s4 + $0x20] sm:$0xff]
          %v1591 = vld [vmem:[%s4 + $0x28] sm:$0xff]
          %v1592 = vld [vmem:[%s4 + $0x30] sm:$0xff]
          %v1593 = vld [vmem:[%s4 + $0x38] sm:$0xff]
          %vm1594 = vcmask 523264
          %v1596 = vsel %vm1594, %v1585, 0
          %1598 = vmatprep.subr.mxu0 0.0
          %1599 = vmatpush1.msra.mxu0 %v1586
          %1600 = vmatprep.subr.mxu0 0.0
          %1601 = vmatpush1.msra.mxu0 %v1587
          %1602 = vmatprep.subr.mxu0 0.0
          %1603 = vmatpush1.msra.mxu0 %v1588
          %1604 = vmatprep.subr.mxu0 0.0
          %1605 = vmatpush1.msra.mxu0 %v1589
          %1606 = vmatprep.subr.mxu0 0.0
          %1607 = vmatpush1.msra.mxu0 %v1590
          %1608 = vmatprep.subr.mxu0 0.0
          %1609 = vmatpush1.msra.mxu0 %v1591
          %1610 = vmatprep.subr.mxu0 0.0
          %1611 = vmatpush1.msra.mxu0 %v1592
          %1612 = vmatprep.subr.mxu0 0.0
          %1613 = vmatpush1.msra.mxu0 %v1593
          %1614 = vmatprep.subr.mxu0 0.0
          %1615 = vmatpush1.msra.mxu0 0.0
          %1616 = vmatprep.subr.mxu0 0.0
          %1617 = vmatpush1.msra.mxu0 0.0
          %1618 = vmatprep.subr.mxu0 0.0
          %1619 = vmatpush1.msra.mxu0 0.0
          %1620 = vmatprep.subr.mxu0 0.0
          %1621 = vmatpush1.msra.mxu0 0.0
          %1622 = vmatprep.subr.mxu0 0.0
          %1623 = vmatpush1.msra.mxu0 0.0
          %1624 = vmatprep.subr.mxu0 0.0
          %1625 = vmatpush1.msra.mxu0 0.0
          %1626 = vmatprep.subr.mxu0 0.0
          %1627 = vmatpush1.msra.mxu0 0.0
          %1628 = vmatprep.subr.mxu0 0.0
          %1629 = vmatpush1.msra.mxu0 0.0
          %1630 = vmatprep.subr.mxu0 0.0
          %1631 = vmatpush1.msra.mxu0 0.0
          %1632 = vmatprep.subr.mxu0 0.0
          %1633 = vmatpush1.msra.mxu0 0.0
          %1634 = vmatprep.subr.mxu0 0.0
          %1635 = vmatpush1.msra.mxu0 0.0
          %1636 = vmatprep.subr.mxu0 0.0
          %1637 = vmatpush1.msra.mxu0 0.0
          %1638 = vmatprep.subr.mxu0 0.0
          %1639 = vmatpush1.msra.mxu0 0.0
          %1640 = vmatprep.subr.mxu0 0.0
          %1641 = vmatpush1.msra.mxu0 0.0
          %1642 = vmatprep.subr.mxu0 0.0
          %1643 = vmatpush1.msra.mxu0 0.0
          %1644 = vmatprep.subr.mxu0 0.0
          %1645 = vmatpush1.msra.mxu0 0.0
          %1646 = vmatprep.subr.mxu0 0.0
          %1647 = vmatpush1.msra.mxu0 0.0
          %1648 = vmatprep.subr.mxu0 0.0
          %1649 = vmatpush1.msra.mxu0 0.0
          %1650 = vmatprep.subr.mxu0 0.0
          %1651 = vmatpush1.msra.mxu0 0.0
          %1652 = vmatprep.subr.mxu0 0.0
          %1653 = vmatpush1.msra.mxu0 0.0
          %1654 = vmatprep.subr.mxu0 0.0
          %1655 = vmatpush1.msra.mxu0 0.0
          %1656 = vmatprep.subr.mxu0 0.0
          %1657 = vmatpush1.msra.mxu0 0.0
          %1658 = vmatprep.subr.mxu0 0.0
          %1659 = vmatpush1.msra.mxu0 0.0
          %1660 = vmatprep.subr.mxu0 0.0
          %1661 = vmatpush1.msra.mxu0 0.0
          %1662 = vmatprep.mubr.f32.mxu0 0.0
          %1663 = vmatmul.mubr.f32.gmra.mrb[0].mxu0 %v1596
          %v1664 = vpop.f32.mrb[0].mxu0
          %v1665 = vadd.f32 0.0, %v1664
          %v1666 = vpop.f32.mrb[0].mxu0
          %1667 = vdwg.mxu0
          %v1668 = vld [vmem:[#allocation4] sm:$0x1]
          %v1670 = vlaneseq
          %v1671 = vshrl.u32 %v1670, 7
          %v1672 = vsub.s32 0, %v1671
          %v1673 = vrot.slane %v1668, %v1672
          %v1675 = vmul.f32 %v1665, %v1673
          %v1676 = vld [vmem:[#allocation5] sm:$0x1]
          %v1678 = vlaneseq
          %v1679 = vshrl.u32 %v1678, 7
          %v1680 = vsub.s32 0, %v1679
          %v1681 = vrot.slane %v1676, %v1680
          %v1683 = vadd.f32 %v1675, %v1681
          %v1684 = vmax.f32 %v1683, 0.0
          %v1685 = vld [vmem:[#allocation16] sm:$0xff]
          %v1686 = vld [vmem:[#allocation16 + $0x8] sm:$0xff]
          %v1687 = vld [vmem:[#allocation16 + $0x10] sm:$0xff]
          %v1688 = vld [vmem:[#allocation16 + $0x18] sm:$0xff]
          %v1689 = vld [vmem:[#allocation16 + $0x20] sm:$0xff]
          %v1690 = vld [vmem:[#allocation16 + $0x28] sm:$0xff]
          %v1691 = vld [vmem:[#allocation16 + $0x30] sm:$0xff]
          %v1692 = vld [vmem:[#allocation16 + $0x38] sm:$0xff]
          %v1694 = vsel %vm1594, %v1684, 0
          %1696 = vmatprep.subr.mxu0 0.0
          %1697 = vmatpush1.msra.mxu0 %v1685
          %1698 = vmatprep.subr.mxu0 0.0
          %1699 = vmatpush1.msra.mxu0 %v1686
          %1700 = vmatprep.subr.mxu0 0.0
          %1701 = vmatpush1.msra.mxu0 %v1687
          %1702 = vmatprep.subr.mxu0 0.0
          %1703 = vmatpush1.msra.mxu0 %v1688
          %1704 = vmatprep.subr.mxu0 0.0
          %1705 = vmatpush1.msra.mxu0 %v1689
          %1706 = vmatprep.subr.mxu0 0.0
          %1707 = vmatpush1.msra.mxu0 %v1690
          %1708 = vmatprep.subr.mxu0 0.0
          %1709 = vmatpush1.msra.mxu0 %v1691
          %1710 = vmatprep.subr.mxu0 0.0
          %1711 = vmatpush1.msra.mxu0 %v1692
          %1712 = vmatprep.subr.mxu0 0.0
          %1713 = vmatpush1.msra.mxu0 0.0
          %1714 = vmatprep.subr.mxu0 0.0
          %1715 = vmatpush1.msra.mxu0 0.0
          %1716 = vmatprep.subr.mxu0 0.0
          %1717 = vmatpush1.msra.mxu0 0.0
          %1718 = vmatprep.subr.mxu0 0.0
          %1719 = vmatpush1.msra.mxu0 0.0
          %1720 = vmatprep.subr.mxu0 0.0
          %1721 = vmatpush1.msra.mxu0 0.0
          %1722 = vmatprep.subr.mxu0 0.0
          %1723 = vmatpush1.msra.mxu0 0.0
          %1724 = vmatprep.subr.mxu0 0.0
          %1725 = vmatpush1.msra.mxu0 0.0
          %1726 = vmatprep.subr.mxu0 0.0
          %1727 = vmatpush1.msra.mxu0 0.0
          %1728 = vmatprep.subr.mxu0 0.0
          %1729 = vmatpush1.msra.mxu0 0.0
          %1730 = vmatprep.subr.mxu0 0.0
          %1731 = vmatpush1.msra.mxu0 0.0
          %1732 = vmatprep.subr.mxu0 0.0
          %1733 = vmatpush1.msra.mxu0 0.0
          %1734 = vmatprep.subr.mxu0 0.0
          %1735 = vmatpush1.msra.mxu0 0.0
          %1736 = vmatprep.subr.mxu0 0.0
          %1737 = vmatpush1.msra.mxu0 0.0
          %1738 = vmatprep.subr.mxu0 0.0
          %1739 = vmatpush1.msra.mxu0 0.0
          %1740 = vmatprep.subr.mxu0 0.0
          %1741 = vmatpush1.msra.mxu0 0.0
          %1742 = vmatprep.subr.mxu0 0.0
          %1743 = vmatpush1.msra.mxu0 0.0
          %1744 = vmatprep.subr.mxu0 0.0
          %1745 = vmatpush1.msra.mxu0 0.0
          %1746 = vmatprep.subr.mxu0 0.0
          %1747 = vmatpush1.msra.mxu0 0.0
          %1748 = vmatprep.subr.mxu0 0.0
          %1749 = vmatpush1.msra.mxu0 0.0
          %1750 = vmatprep.subr.mxu0 0.0
          %1751 = vmatpush1.msra.mxu0 0.0
          %1752 = vmatprep.subr.mxu0 0.0
          %1753 = vmatpush1.msra.mxu0 0.0
          %1754 = vmatprep.subr.mxu0 0.0
          %1755 = vmatpush1.msra.mxu0 0.0
          %1756 = vmatprep.subr.mxu0 0.0
          %1757 = vmatpush1.msra.mxu0 0.0
          %1758 = vmatprep.subr.mxu0 0.0
          %1759 = vmatpush1.msra.mxu0 0.0
          %1760 = vmatprep.mubr.f32.mxu0 0.0
          %1761 = vmatmul.mubr.f32.gmra.mrb[0].mxu0 %v1694
          %v1762 = vpop.f32.mrb[0].mxu0
          %v1763 = vadd.f32 0.0, %v1762
          %v1764 = vpop.f32.mrb[0].mxu0
          %1765 = vdwg.mxu0
          %v1766 = vld [vmem:[#allocation6] sm:$0x1]
          %v1768 = vlaneseq
          %v1769 = vshrl.u32 %v1768, 7
          %v1770 = vsub.s32 0, %v1769
          %v1771 = vrot.slane %v1766, %v1770
          %v1773 = vmul.f32 %v1763, %v1771
          %v1774 = vld [vmem:[#allocation7] sm:$0x1]
          %v1776 = vlaneseq
          %v1777 = vshrl.u32 %v1776, 7
          %v1778 = vsub.s32 0, %v1777
          %v1779 = vrot.slane %v1774, %v1778
          %v1781 = vadd.f32 %v1773, %v1779
          %v1782 = vmax.f32 %v1781, 0.0
          %v1783 = vld [vmem:[#allocation18] sm:$0xff]
          %v1784 = vld [vmem:[#allocation18 + $0x8] sm:$0xff]
          %v1785 = vld [vmem:[#allocation18 + $0x10] sm:$0xff]
          %v1786 = vld [vmem:[#allocation18 + $0x18] sm:$0xff]
          %v1787 = vld [vmem:[#allocation18 + $0x20] sm:$0xff]
          %v1788 = vld [vmem:[#allocation18 + $0x28] sm:$0xff]
          %v1789 = vld [vmem:[#allocation18 + $0x30] sm:$0xff]
          %v1790 = vld [vmem:[#allocation18 + $0x38] sm:$0xff]
          %v1792 = vsel %vm1594, %v1782, 0
          %1794 = vmatprep.subr.mxu0 0.0
          %1795 = vmatpush1.msra.mxu0 %v1783
          %1796 = vmatprep.subr.mxu0 0.0
          %1797 = vmatpush1.msra.mxu0 %v1784
          %1798 = vmatprep.subr.mxu0 0.0
          %1799 = vmatpush1.msra.mxu0 %v1785
          %1800 = vmatprep.subr.mxu0 0.0
          %1801 = vmatpush1.msra.mxu0 %v1786
          %1802 = vmatprep.subr.mxu0 0.0
          %1803 = vmatpush1.msra.mxu0 %v1787
          %1804 = vmatprep.subr.mxu0 0.0
          %1805 = vmatpush1.msra.mxu0 %v1788
          %1806 = vmatprep.subr.mxu0 0.0
          %1807 = vmatpush1.msra.mxu0 %v1789
          %1808 = vmatprep.subr.mxu0 0.0
          %1809 = vmatpush1.msra.mxu0 %v1790
          %1810 = vmatprep.subr.mxu0 0.0
          %1811 = vmatpush1.msra.mxu0 0.0
          %1812 = vmatprep.subr.mxu0 0.0
          %1813 = vmatpush1.msra.mxu0 0.0
          %1814 = vmatprep.subr.mxu0 0.0
          %1815 = vmatpush1.msra.mxu0 0.0
          %1816 = vmatprep.subr.mxu0 0.0
          %1817 = vmatpush1.msra.mxu0 0.0
          %1818 = vmatprep.subr.mxu0 0.0
          %1819 = vmatpush1.msra.mxu0 0.0
          %1820 = vmatprep.subr.mxu0 0.0
          %1821 = vmatpush1.msra.mxu0 0.0
          %1822 = vmatprep.subr.mxu0 0.0
          %1823 = vmatpush1.msra.mxu0 0.0
          %1824 = vmatprep.subr.mxu0 0.0
          %1825 = vmatpush1.msra.mxu0 0.0
          %1826 = vmatprep.subr.mxu0 0.0
          %1827 = vmatpush1.msra.mxu0 0.0
          %1828 = vmatprep.subr.mxu0 0.0
          %1829 = vmatpush1.msra.mxu0 0.0
          %1830 = vmatprep.subr.mxu0 0.0
          %1831 = vmatpush1.msra.mxu0 0.0
          %1832 = vmatprep.subr.mxu0 0.0
          %1833 = vmatpush1.msra.mxu0 0.0
          %1834 = vmatprep.subr.mxu0 0.0
          %1835 = vmatpush1.msra.mxu0 0.0
          %1836 = vmatprep.subr.mxu0 0.0
          %1837 = vmatpush1.msra.mxu0 0.0
          %1838 = vmatprep.subr.mxu0 0.0
          %1839 = vmatpush1.msra.mxu0 0.0
          %1840 = vmatprep.subr.mxu0 0.0
          %1841 = vmatpush1.msra.mxu0 0.0
          %1842 = vmatprep.subr.mxu0 0.0
          %1843 = vmatpush1.msra.mxu0 0.0
          %1844 = vmatprep.subr.mxu0 0.0
          %1845 = vmatpush1.msra.mxu0 0.0
          %1846 = vmatprep.subr.mxu0 0.0
          %1847 = vmatpush1.msra.mxu0 0.0
          %1848 = vmatprep.subr.mxu0 0.0
          %1849 = vmatpush1.msra.mxu0 0.0
          %1850 = vmatprep.subr.mxu0 0.0
          %1851 = vmatpush1.msra.mxu0 0.0
          %1852 = vmatprep.subr.mxu0 0.0
          %1853 = vmatpush1.msra.mxu0 0.0
          %1854 = vmatprep.subr.mxu0 0.0
          %1855 = vmatpush1.msra.mxu0 0.0
          %1856 = vmatprep.subr.mxu0 0.0
          %1857 = vmatpush1.msra.mxu0 0.0
          %1858 = vmatprep.mubr.f32.mxu0 0.0
          %1859 = vmatmul.mubr.f32.gmra.mrb[0].mxu0 %v1792
          %v1860 = vpop.f32.mrb[0].mxu0
          %v1861 = vadd.f32 0.0, %v1860
          %v1862 = vpop.f32.mrb[0].mxu0
          %1863 = vdwg.mxu0
          %v1864 = vld [vmem:[#allocation8] sm:$0x1]
          %v1866 = vlaneseq
          %v1867 = vshrl.u32 %v1866, 7
          %v1868 = vsub.s32 0, %v1867
          %v1869 = vrot.slane %v1864, %v1868
          %v1871 = vmul.f32 %v1861, %v1869
          %v1872 = vld [vmem:[#allocation9] sm:$0x1]
          %v1874 = vlaneseq
          %v1875 = vshrl.u32 %v1874, 7
          %v1876 = vsub.s32 0, %v1875
          %v1877 = vrot.slane %v1872, %v1876
          %v1879 = vadd.f32 %v1871, %v1877
          %v1880 = vmax.f32 %v1879, 0.0
          %v1881 = vld [vmem:[#allocation19] sm:$0xff]
          %v1882 = vld [vmem:[#allocation19 + $0x8] sm:$0xff]
          %v1883 = vld [vmem:[#allocation19 + $0x10] sm:$0xff]
          %v1884 = vld [vmem:[#allocation19 + $0x18] sm:$0xff]
          %v1885 = vld [vmem:[#allocation19 + $0x20] sm:$0xff]
          %v1886 = vld [vmem:[#allocation19 + $0x28] sm:$0xff]
          %v1887 = vld [vmem:[#allocation19 + $0x30] sm:$0xff]
          %v1888 = vld [vmem:[#allocation19 + $0x38] sm:$0xff]
          %v1889 = vld [vmem:[#allocation19 + $0x40] sm:$0xff]
          %v1890 = vld [vmem:[#allocation19 + $0x48] sm:$0xff]
          %v1891 = vld [vmem:[#allocation19 + $0x50] sm:$0xff]
          %v1892 = vld [vmem:[#allocation19 + $0x58] sm:$0xff]
          %v1893 = vld [vmem:[#allocation19 + $0x60] sm:$0xff]
          %v1894 = vld [vmem:[#allocation19 + $0x68] sm:$0xff]
          %v1895 = vld [vmem:[#allocation19 + $0x70] sm:$0xff]
          %v1896 = vld [vmem:[#allocation19 + $0x78] sm:$0xff]
          %1897 = vmatprep.subr.mxu0 0.0
          %1898 = vmatpush1.msra.mxu0 %v1881
          %1899 = vmatprep.subr.mxu0 0.0
          %1900 = vmatpush1.msra.mxu0 %v1882
          %1901 = vmatprep.subr.mxu0 0.0
          %1902 = vmatpush1.msra.mxu0 %v1883
          %1903 = vmatprep.subr.mxu0 0.0
          %1904 = vmatpush1.msra.mxu0 %v1884
          %1905 = vmatprep.subr.mxu0 0.0
          %1906 = vmatpush1.msra.mxu0 %v1885
          %1907 = vmatprep.subr.mxu0 0.0
          %1908 = vmatpush1.msra.mxu0 %v1886
          %1909 = vmatprep.subr.mxu0 0.0
          %1910 = vmatpush1.msra.mxu0 %v1887
          %1911 = vmatprep.subr.mxu0 0.0
          %1912 = vmatpush1.msra.mxu0 %v1888
          %1913 = vmatprep.subr.mxu0 0.0
          %1914 = vmatpush1.msra.mxu0 %v1889
          %1915 = vmatprep.subr.mxu0 0.0
          %1916 = vmatpush1.msra.mxu0 %v1890
          %1917 = vmatprep.subr.mxu0 0.0
          %1918 = vmatpush1.msra.mxu0 %v1891
          %1919 = vmatprep.subr.mxu0 0.0
          %1920 = vmatpush1.msra.mxu0 %v1892
          %1921 = vmatprep.subr.mxu0 0.0
          %1922 = vmatpush1.msra.mxu0 %v1893
          %1923 = vmatprep.subr.mxu0 0.0
          %1924 = vmatpush1.msra.mxu0 %v1894
          %1925 = vmatprep.subr.mxu0 0.0
          %1926 = vmatpush1.msra.mxu0 %v1895
          %1927 = vmatprep.subr.mxu0 0.0
          %1928 = vmatpush1.msra.mxu0 %v1896
          %1929 = vmatprep.subr.mxu0 0.0
          %1930 = vmatpush1.msra.mxu0 0.0
          %1931 = vmatprep.subr.mxu0 0.0
          %1932 = vmatpush1.msra.mxu0 0.0
          %1933 = vmatprep.subr.mxu0 0.0
          %1934 = vmatpush1.msra.mxu0 0.0
          %1935 = vmatprep.subr.mxu0 0.0
          %1936 = vmatpush1.msra.mxu0 0.0
          %1937 = vmatprep.subr.mxu0 0.0
          %1938 = vmatpush1.msra.mxu0 0.0
          %1939 = vmatprep.subr.mxu0 0.0
          %1940 = vmatpush1.msra.mxu0 0.0
          %1941 = vmatprep.subr.mxu0 0.0
          %1942 = vmatpush1.msra.mxu0 0.0
          %1943 = vmatprep.subr.mxu0 0.0
          %1944 = vmatpush1.msra.mxu0 0.0
          %1945 = vmatprep.subr.mxu0 0.0
          %1946 = vmatpush1.msra.mxu0 0.0
          %1947 = vmatprep.subr.mxu0 0.0
          %1948 = vmatpush1.msra.mxu0 0.0
          %1949 = vmatprep.subr.mxu0 0.0
          %1950 = vmatpush1.msra.mxu0 0.0
          %1951 = vmatprep.subr.mxu0 0.0
          %1952 = vmatpush1.msra.mxu0 0.0
          %1953 = vmatprep.subr.mxu0 0.0
          %1954 = vmatpush1.msra.mxu0 0.0
          %1955 = vmatprep.subr.mxu0 0.0
          %1956 = vmatpush1.msra.mxu0 0.0
          %1957 = vmatprep.subr.mxu0 0.0
          %1958 = vmatpush1.msra.mxu0 0.0
          %1959 = vmatprep.subr.mxu0 0.0
          %1960 = vmatpush1.msra.mxu0 0.0
          %1961 = vmatprep.mubr.f32.mxu0 0.0
          %1962 = vmatmul.mubr.f32.gmra.mrb[0].mxu0 %v1880
          %v1963 = vpop.f32.mrb[0].mxu0
          %v1964 = vadd.f32 0.0, %v1963
          %v1965 = vpop.f32.mrb[0].mxu0
          %1966 = vdwg.mxu0
          %v1967 = vsel %vm609, 1, 0
          %vm1968 = vcmp.eq.s32.totalorder %v1967, 1
          %v1969 = vsel %vm1968, %v1964, 0.0
          %v1970 = vld [vmem:[#allocation10] sm:$0x1]
          %v1971 = vrot.slane %v1969, 4
          %v1972 = vadd.f32 %v1969, %v1971
          %v1973 = vrot.slane %v1972, 2
          %v1974 = vadd.f32 %v1972, %v1973
          %v1975 = vrot.slane %v1974, 1
          %v1976 = vadd.f32 %v1974, %v1975
          %v1977 = vadd.f32 %v1970, %v1976
          %1978 = vst [vmem:[#allocation10] sm:$0x1] %v1977
          %v1979 = vld [vmem:[#allocation11] sm:$0x1]
          %v1980 = vmul.f32 %v1969, %v1969
          %v1981 = vrot.slane %v1980, 4
          %v1982 = vadd.f32 %v1980, %v1981
          %v1983 = vrot.slane %v1982, 2
          %v1984 = vadd.f32 %v1982, %v1983
          %v1985 = vrot.slane %v1984, 1
          %v1986 = vadd.f32 %v1984, %v1985
          %v1987 = vadd.f32 %v1979, %v1986
          %1988 = vst [vmem:[#allocation11] sm:$0x1] %v1987
          // Predicated region
          $region157: #{tpu_custom_call.1} parent=151 // pred_check
            _
          $region158: #{tpu_custom_call.1} parent=151 // pred_check_branch
            %1990 = sbr.rel (%p601) target = $region160
          $region159: #{tpu_custom_call.1} parent=151 // pred_region
            %v1991 = vld [vmem:[#allocation10] sm:$0x1]
            %v1992 = vmul.f32 %v1991, 0.025
            %v1993 = vld [vmem:[#allocation11] sm:$0x1]
            %v1994 = vmul.f32 %v1993, 0.025
            %v1995 = vmul.f32 %v1992, %v1992
            %v1996 = vsub.f32 %v1994, %v1995
            %v1997 = vmax.f32 %v1996, 0.0
            %v1998 = vld [vmem:[%s14] sm:$0x1]
            %v1999 = vadd.f32 %v1997, 1e-05
            %v2000 = vrsqrt.pop %v1999
            %v2001 = vmul.f32 %v1998, %v2000
            %v2002 = vld [vmem:[%s15] sm:$0x1]
            %v2003 = vmul.f32 %v1992, %v2001
            %v2004 = vsub.f32 %v2002, %v2003
            %2005 = vst [vmem:[#allocation10] sm:$0x1] %v2001
            %2006 = vst [vmem:[#allocation11] sm:$0x1] %v2004
          $region160: #{tpu_custom_call.1} parent=151 // pred_fallthru
            _
        $region152: #{tpu_custom_call.1} parent=83 // pred_fallthru
          _
        %p2007 = scmp.eq.s32.totalorder %s36, 5
        // Predicated region
        $region161: #{tpu_custom_call.1} parent=83 // pred_check
          %p2008 = pneg %p2007
        $region162: #{tpu_custom_call.1} parent=83 // pred_check_branch
          %2010 = sbr.rel (%p2008) target = $region164
        $region163: #{tpu_custom_call.1} parent=83 // pred_region
          // Predicated region
          $region165: #{tpu_custom_call.1} parent=163 // pred_check
            _
          $region166: #{tpu_custom_call.1} parent=163 // pred_check_branch
            %2012 = sbr.rel (%p597) target = $region168
          $region167: #{tpu_custom_call.1} parent=163 // pred_region
            %2013 = vst [vmem:[#allocation12] sm:$0x3] -inf
          $region168: #{tpu_custom_call.1} parent=163 // pred_fallthru
            _
          %v2014 = vld [vmem:[%s1] sm:$0x7]
          %2016 = vset.pattern.permute.xlu0 0
          %2017 = vperm.xlu0 %2016, %v603
          %v2018 = vpop.permute.xlu0 %2017
          %v2020 = vlaneseq
          %v2021 = vshrl.u32 %v2020, 7
          %v2022 = vsub.s32 0, %v2021
          %v2023 = vrot.slane %v2014, %v2022
          %v2024 = vmul.f32 %v2018, %v2023
          %2025 = vset.pattern.permute.xlu0 1
          %2026 = vperm.xlu0 %2025, %v603
          %v2027 = vpop.permute.xlu0 %2026
          %v2029 = vlaneseq
          %v2030 = vshrl.u32 %v2029, 7
          %v2031 = vsub.s32 1, %v2030
          %v2032 = vrot.slane %v2014, %v2031
          %v2033 = vmul.f32 %v2027, %v2032
          %v2034 = vadd.f32 %v2024, %v2033
          %2035 = vset.pattern.permute.xlu0 2
          %2036 = vperm.xlu0 %2035, %v603
          %v2037 = vpop.permute.xlu0 %2036
          %v2039 = vlaneseq
          %v2040 = vshrl.u32 %v2039, 7
          %v2041 = vsub.s32 2, %v2040
          %v2042 = vrot.slane %v2014, %v2041
          %v2043 = vmul.f32 %v2037, %v2042
          %v2044 = vadd.f32 %v2034, %v2043
          %v2045 = vld [vmem:[#allocation2] sm:$0x1]
          %v2047 = vlaneseq
          %v2048 = vshrl.u32 %v2047, 7
          %v2049 = vsub.s32 0, %v2048
          %v2050 = vrot.slane %v2045, %v2049
          %v2052 = vmul.f32 %v2044, %v2050
          %v2053 = vld [vmem:[#allocation3] sm:$0x1]
          %v2055 = vlaneseq
          %v2056 = vshrl.u32 %v2055, 7
          %v2057 = vsub.s32 0, %v2056
          %v2058 = vrot.slane %v2053, %v2057
          %v2060 = vadd.f32 %v2052, %v2058
          %v2061 = vmax.f32 %v2060, 0.0
          %v2062 = vld [vmem:[%s4] sm:$0xff]
          %v2063 = vld [vmem:[%s4 + $0x8] sm:$0xff]
          %v2064 = vld [vmem:[%s4 + $0x10] sm:$0xff]
          %v2065 = vld [vmem:[%s4 + $0x18] sm:$0xff]
          %v2066 = vld [vmem:[%s4 + $0x20] sm:$0xff]
          %v2067 = vld [vmem:[%s4 + $0x28] sm:$0xff]
          %v2068 = vld [vmem:[%s4 + $0x30] sm:$0xff]
          %v2069 = vld [vmem:[%s4 + $0x38] sm:$0xff]
          %vm2070 = vcmask 523264
          %v2072 = vsel %vm2070, %v2061, 0
          %2074 = vmatprep.subr.mxu0 0.0
          %2075 = vmatpush1.msra.mxu0 %v2062
          %2076 = vmatprep.subr.mxu0 0.0
          %2077 = vmatpush1.msra.mxu0 %v2063
          %2078 = vmatprep.subr.mxu0 0.0
          %2079 = vmatpush1.msra.mxu0 %v2064
          %2080 = vmatprep.subr.mxu0 0.0
          %2081 = vmatpush1.msra.mxu0 %v2065
          %2082 = vmatprep.subr.mxu0 0.0
          %2083 = vmatpush1.msra.mxu0 %v2066
          %2084 = vmatprep.subr.mxu0 0.0
          %2085 = vmatpush1.msra.mxu0 %v2067
          %2086 = vmatprep.subr.mxu0 0.0
          %2087 = vmatpush1.msra.mxu0 %v2068
          %2088 = vmatprep.subr.mxu0 0.0
          %2089 = vmatpush1.msra.mxu0 %v2069
          %2090 = vmatprep.subr.mxu0 0.0
          %2091 = vmatpush1.msra.mxu0 0.0
          %2092 = vmatprep.subr.mxu0 0.0
          %2093 = vmatpush1.msra.mxu0 0.0
          %2094 = vmatprep.subr.mxu0 0.0
          %2095 = vmatpush1.msra.mxu0 0.0
          %2096 = vmatprep.subr.mxu0 0.0
          %2097 = vmatpush1.msra.mxu0 0.0
          %2098 = vmatprep.subr.mxu0 0.0
          %2099 = vmatpush1.msra.mxu0 0.0
          %2100 = vmatprep.subr.mxu0 0.0
          %2101 = vmatpush1.msra.mxu0 0.0
          %2102 = vmatprep.subr.mxu0 0.0
          %2103 = vmatpush1.msra.mxu0 0.0
          %2104 = vmatprep.subr.mxu0 0.0
          %2105 = vmatpush1.msra.mxu0 0.0
          %2106 = vmatprep.subr.mxu0 0.0
          %2107 = vmatpush1.msra.mxu0 0.0
          %2108 = vmatprep.subr.mxu0 0.0
          %2109 = vmatpush1.msra.mxu0 0.0
          %2110 = vmatprep.subr.mxu0 0.0
          %2111 = vmatpush1.msra.mxu0 0.0
          %2112 = vmatprep.subr.mxu0 0.0
          %2113 = vmatpush1.msra.mxu0 0.0
          %2114 = vmatprep.subr.mxu0 0.0
          %2115 = vmatpush1.msra.mxu0 0.0
          %2116 = vmatprep.subr.mxu0 0.0
          %2117 = vmatpush1.msra.mxu0 0.0
          %2118 = vmatprep.subr.mxu0 0.0
          %2119 = vmatpush1.msra.mxu0 0.0
          %2120 = vmatprep.subr.mxu0 0.0
          %2121 = vmatpush1.msra.mxu0 0.0
          %2122 = vmatprep.subr.mxu0 0.0
          %2123 = vmatpush1.msra.mxu0 0.0
          %2124 = vmatprep.subr.mxu0 0.0
          %2125 = vmatpush1.msra.mxu0 0.0
          %2126 = vmatprep.subr.mxu0 0.0
          %2127 = vmatpush1.msra.mxu0 0.0
          %2128 = vmatprep.subr.mxu0 0.0
          %2129 = vmatpush1.msra.mxu0 0.0
          %2130 = vmatprep.subr.mxu0 0.0
          %2131 = vmatpush1.msra.mxu0 0.0
          %2132 = vmatprep.subr.mxu0 0.0
          %2133 = vmatpush1.msra.mxu0 0.0
          %2134 = vmatprep.subr.mxu0 0.0
          %2135 = vmatpush1.msra.mxu0 0.0
          %2136 = vmatprep.subr.mxu0 0.0
          %2137 = vmatpush1.msra.mxu0 0.0
          %2138 = vmatprep.mubr.f32.mxu0 0.0
          %2139 = vmatmul.mubr.f32.gmra.mrb[0].mxu0 %v2072
          %v2140 = vpop.f32.mrb[0].mxu0
          %v2141 = vadd.f32 0.0, %v2140
          %v2142 = vpop.f32.mrb[0].mxu0
          %2143 = vdwg.mxu0
          %v2144 = vld [vmem:[#allocation4] sm:$0x1]
          %v2146 = vlaneseq
          %v2147 = vshrl.u32 %v2146, 7
          %v2148 = vsub.s32 0, %v2147
          %v2149 = vrot.slane %v2144, %v2148
          %v2151 = vmul.f32 %v2141, %v2149
          %v2152 = vld [vmem:[#allocation5] sm:$0x1]
          %v2154 = vlaneseq
          %v2155 = vshrl.u32 %v2154, 7
          %v2156 = vsub.s32 0, %v2155
          %v2157 = vrot.slane %v2152, %v2156
          %v2159 = vadd.f32 %v2151, %v2157
          %v2160 = vmax.f32 %v2159, 0.0
          %v2161 = vld [vmem:[#allocation16] sm:$0xff]
          %v2162 = vld [vmem:[#allocation16 + $0x8] sm:$0xff]
          %v2163 = vld [vmem:[#allocation16 + $0x10] sm:$0xff]
          %v2164 = vld [vmem:[#allocation16 + $0x18] sm:$0xff]
          %v2165 = vld [vmem:[#allocation16 + $0x20] sm:$0xff]
          %v2166 = vld [vmem:[#allocation16 + $0x28] sm:$0xff]
          %v2167 = vld [vmem:[#allocation16 + $0x30] sm:$0xff]
          %v2168 = vld [vmem:[#allocation16 + $0x38] sm:$0xff]
          %v2170 = vsel %vm2070, %v2160, 0
          %2172 = vmatprep.subr.mxu0 0.0
          %2173 = vmatpush1.msra.mxu0 %v2161
          %2174 = vmatprep.subr.mxu0 0.0
          %2175 = vmatpush1.msra.mxu0 %v2162
          %2176 = vmatprep.subr.mxu0 0.0
          %2177 = vmatpush1.msra.mxu0 %v2163
          %2178 = vmatprep.subr.mxu0 0.0
          %2179 = vmatpush1.msra.mxu0 %v2164
          %2180 = vmatprep.subr.mxu0 0.0
          %2181 = vmatpush1.msra.mxu0 %v2165
          %2182 = vmatprep.subr.mxu0 0.0
          %2183 = vmatpush1.msra.mxu0 %v2166
          %2184 = vmatprep.subr.mxu0 0.0
          %2185 = vmatpush1.msra.mxu0 %v2167
          %2186 = vmatprep.subr.mxu0 0.0
          %2187 = vmatpush1.msra.mxu0 %v2168
          %2188 = vmatprep.subr.mxu0 0.0
          %2189 = vmatpush1.msra.mxu0 0.0
          %2190 = vmatprep.subr.mxu0 0.0
          %2191 = vmatpush1.msra.mxu0 0.0
          %2192 = vmatprep.subr.mxu0 0.0
          %2193 = vmatpush1.msra.mxu0 0.0
          %2194 = vmatprep.subr.mxu0 0.0
          %2195 = vmatpush1.msra.mxu0 0.0
          %2196 = vmatprep.subr.mxu0 0.0
          %2197 = vmatpush1.msra.mxu0 0.0
          %2198 = vmatprep.subr.mxu0 0.0
          %2199 = vmatpush1.msra.mxu0 0.0
          %2200 = vmatprep.subr.mxu0 0.0
          %2201 = vmatpush1.msra.mxu0 0.0
          %2202 = vmatprep.subr.mxu0 0.0
          %2203 = vmatpush1.msra.mxu0 0.0
          %2204 = vmatprep.subr.mxu0 0.0
          %2205 = vmatpush1.msra.mxu0 0.0
          %2206 = vmatprep.subr.mxu0 0.0
          %2207 = vmatpush1.msra.mxu0 0.0
          %2208 = vmatprep.subr.mxu0 0.0
          %2209 = vmatpush1.msra.mxu0 0.0
          %2210 = vmatprep.subr.mxu0 0.0
          %2211 = vmatpush1.msra.mxu0 0.0
          %2212 = vmatprep.subr.mxu0 0.0
          %2213 = vmatpush1.msra.mxu0 0.0
          %2214 = vmatprep.subr.mxu0 0.0
          %2215 = vmatpush1.msra.mxu0 0.0
          %2216 = vmatprep.subr.mxu0 0.0
          %2217 = vmatpush1.msra.mxu0 0.0
          %2218 = vmatprep.subr.mxu0 0.0
          %2219 = vmatpush1.msra.mxu0 0.0
          %2220 = vmatprep.subr.mxu0 0.0
          %2221 = vmatpush1.msra.mxu0 0.0
          %2222 = vmatprep.subr.mxu0 0.0
          %2223 = vmatpush1.msra.mxu0 0.0
          %2224 = vmatprep.subr.mxu0 0.0
          %2225 = vmatpush1.msra.mxu0 0.0
          %2226 = vmatprep.subr.mxu0 0.0
          %2227 = vmatpush1.msra.mxu0 0.0
          %2228 = vmatprep.subr.mxu0 0.0
          %2229 = vmatpush1.msra.mxu0 0.0
          %2230 = vmatprep.subr.mxu0 0.0
          %2231 = vmatpush1.msra.mxu0 0.0
          %2232 = vmatprep.subr.mxu0 0.0
          %2233 = vmatpush1.msra.mxu0 0.0
          %2234 = vmatprep.subr.mxu0 0.0
          %2235 = vmatpush1.msra.mxu0 0.0
          %2236 = vmatprep.mubr.f32.mxu0 0.0
          %2237 = vmatmul.mubr.f32.gmra.mrb[0].mxu0 %v2170
          %v2238 = vpop.f32.mrb[0].mxu0
          %v2239 = vadd.f32 0.0, %v2238
          %v2240 = vpop.f32.mrb[0].mxu0
          %2241 = vdwg.mxu0
          %v2242 = vld [vmem:[#allocation6] sm:$0x1]
          %v2244 = vlaneseq
          %v2245 = vshrl.u32 %v2244, 7
          %v2246 = vsub.s32 0, %v2245
          %v2247 = vrot.slane %v2242, %v2246
          %v2249 = vmul.f32 %v2239, %v2247
          %v2250 = vld [vmem:[#allocation7] sm:$0x1]
          %v2252 = vlaneseq
          %v2253 = vshrl.u32 %v2252, 7
          %v2254 = vsub.s32 0, %v2253
          %v2255 = vrot.slane %v2250, %v2254
          %v2257 = vadd.f32 %v2249, %v2255
          %v2258 = vmax.f32 %v2257, 0.0
          %v2259 = vld [vmem:[#allocation18] sm:$0xff]
          %v2260 = vld [vmem:[#allocation18 + $0x8] sm:$0xff]
          %v2261 = vld [vmem:[#allocation18 + $0x10] sm:$0xff]
          %v2262 = vld [vmem:[#allocation18 + $0x18] sm:$0xff]
          %v2263 = vld [vmem:[#allocation18 + $0x20] sm:$0xff]
          %v2264 = vld [vmem:[#allocation18 + $0x28] sm:$0xff]
          %v2265 = vld [vmem:[#allocation18 + $0x30] sm:$0xff]
          %v2266 = vld [vmem:[#allocation18 + $0x38] sm:$0xff]
          %v2268 = vsel %vm2070, %v2258, 0
          %2270 = vmatprep.subr.mxu0 0.0
          %2271 = vmatpush1.msra.mxu0 %v2259
          %2272 = vmatprep.subr.mxu0 0.0
          %2273 = vmatpush1.msra.mxu0 %v2260
          %2274 = vmatprep.subr.mxu0 0.0
          %2275 = vmatpush1.msra.mxu0 %v2261
          %2276 = vmatprep.subr.mxu0 0.0
          %2277 = vmatpush1.msra.mxu0 %v2262
          %2278 = vmatprep.subr.mxu0 0.0
          %2279 = vmatpush1.msra.mxu0 %v2263
          %2280 = vmatprep.subr.mxu0 0.0
          %2281 = vmatpush1.msra.mxu0 %v2264
          %2282 = vmatprep.subr.mxu0 0.0
          %2283 = vmatpush1.msra.mxu0 %v2265
          %2284 = vmatprep.subr.mxu0 0.0
          %2285 = vmatpush1.msra.mxu0 %v2266
          %2286 = vmatprep.subr.mxu0 0.0
          %2287 = vmatpush1.msra.mxu0 0.0
          %2288 = vmatprep.subr.mxu0 0.0
          %2289 = vmatpush1.msra.mxu0 0.0
          %2290 = vmatprep.subr.mxu0 0.0
          %2291 = vmatpush1.msra.mxu0 0.0
          %2292 = vmatprep.subr.mxu0 0.0
          %2293 = vmatpush1.msra.mxu0 0.0
          %2294 = vmatprep.subr.mxu0 0.0
          %2295 = vmatpush1.msra.mxu0 0.0
          %2296 = vmatprep.subr.mxu0 0.0
          %2297 = vmatpush1.msra.mxu0 0.0
          %2298 = vmatprep.subr.mxu0 0.0
          %2299 = vmatpush1.msra.mxu0 0.0
          %2300 = vmatprep.subr.mxu0 0.0
          %2301 = vmatpush1.msra.mxu0 0.0
          %2302 = vmatprep.subr.mxu0 0.0
          %2303 = vmatpush1.msra.mxu0 0.0
          %2304 = vmatprep.subr.mxu0 0.0
          %2305 = vmatpush1.msra.mxu0 0.0
          %2306 = vmatprep.subr.mxu0 0.0
          %2307 = vmatpush1.msra.mxu0 0.0
          %2308 = vmatprep.subr.mxu0 0.0
          %2309 = vmatpush1.msra.mxu0 0.0
          %2310 = vmatprep.subr.mxu0 0.0
          %2311 = vmatpush1.msra.mxu0 0.0
          %2312 = vmatprep.subr.mxu0 0.0
          %2313 = vmatpush1.msra.mxu0 0.0
          %2314 = vmatprep.subr.mxu0 0.0
          %2315 = vmatpush1.msra.mxu0 0.0
          %2316 = vmatprep.subr.mxu0 0.0
          %2317 = vmatpush1.msra.mxu0 0.0
          %2318 = vmatprep.subr.mxu0 0.0
          %2319 = vmatpush1.msra.mxu0 0.0
          %2320 = vmatprep.subr.mxu0 0.0
          %2321 = vmatpush1.msra.mxu0 0.0
          %2322 = vmatprep.subr.mxu0 0.0
          %2323 = vmatpush1.msra.mxu0 0.0
          %2324 = vmatprep.subr.mxu0 0.0
          %2325 = vmatpush1.msra.mxu0 0.0
          %2326 = vmatprep.subr.mxu0 0.0
          %2327 = vmatpush1.msra.mxu0 0.0
          %2328 = vmatprep.subr.mxu0 0.0
          %2329 = vmatpush1.msra.mxu0 0.0
          %2330 = vmatprep.subr.mxu0 0.0
          %2331 = vmatpush1.msra.mxu0 0.0
          %2332 = vmatprep.subr.mxu0 0.0
          %2333 = vmatpush1.msra.mxu0 0.0
          %2334 = vmatprep.mubr.f32.mxu0 0.0
          %2335 = vmatmul.mubr.f32.gmra.mrb[0].mxu0 %v2268
          %v2336 = vpop.f32.mrb[0].mxu0
          %v2337 = vadd.f32 0.0, %v2336
          %v2338 = vpop.f32.mrb[0].mxu0
          %2339 = vdwg.mxu0
          %v2340 = vld [vmem:[#allocation8] sm:$0x1]
          %v2342 = vlaneseq
          %v2343 = vshrl.u32 %v2342, 7
          %v2344 = vsub.s32 0, %v2343
          %v2345 = vrot.slane %v2340, %v2344
          %v2347 = vmul.f32 %v2337, %v2345
          %v2348 = vld [vmem:[#allocation9] sm:$0x1]
          %v2350 = vlaneseq
          %v2351 = vshrl.u32 %v2350, 7
          %v2352 = vsub.s32 0, %v2351
          %v2353 = vrot.slane %v2348, %v2352
          %v2355 = vadd.f32 %v2347, %v2353
          %v2356 = vmax.f32 %v2355, 0.0
          %v2357 = vld [vmem:[#allocation19] sm:$0xff]
          %v2358 = vld [vmem:[#allocation19 + $0x8] sm:$0xff]
          %v2359 = vld [vmem:[#allocation19 + $0x10] sm:$0xff]
          %v2360 = vld [vmem:[#allocation19 + $0x18] sm:$0xff]
          %v2361 = vld [vmem:[#allocation19 + $0x20] sm:$0xff]
          %v2362 = vld [vmem:[#allocation19 + $0x28] sm:$0xff]
          %v2363 = vld [vmem:[#allocation19 + $0x30] sm:$0xff]
          %v2364 = vld [vmem:[#allocation19 + $0x38] sm:$0xff]
          %v2365 = vld [vmem:[#allocation19 + $0x40] sm:$0xff]
          %v2366 = vld [vmem:[#allocation19 + $0x48] sm:$0xff]
          %v2367 = vld [vmem:[#allocation19 + $0x50] sm:$0xff]
          %v2368 = vld [vmem:[#allocation19 + $0x58] sm:$0xff]
          %v2369 = vld [vmem:[#allocation19 + $0x60] sm:$0xff]
          %v2370 = vld [vmem:[#allocation19 + $0x68] sm:$0xff]
          %v2371 = vld [vmem:[#allocation19 + $0x70] sm:$0xff]
          %v2372 = vld [vmem:[#allocation19 + $0x78] sm:$0xff]
          %2373 = vmatprep.subr.mxu0 0.0
          %2374 = vmatpush1.msra.mxu0 %v2357
          %2375 = vmatprep.subr.mxu0 0.0
          %2376 = vmatpush1.msra.mxu0 %v2358
          %2377 = vmatprep.subr.mxu0 0.0
          %2378 = vmatpush1.msra.mxu0 %v2359
          %2379 = vmatprep.subr.mxu0 0.0
          %2380 = vmatpush1.msra.mxu0 %v2360
          %2381 = vmatprep.subr.mxu0 0.0
          %2382 = vmatpush1.msra.mxu0 %v2361
          %2383 = vmatprep.subr.mxu0 0.0
          %2384 = vmatpush1.msra.mxu0 %v2362
          %2385 = vmatprep.subr.mxu0 0.0
          %2386 = vmatpush1.msra.mxu0 %v2363
          %2387 = vmatprep.subr.mxu0 0.0
          %2388 = vmatpush1.msra.mxu0 %v2364
          %2389 = vmatprep.subr.mxu0 0.0
          %2390 = vmatpush1.msra.mxu0 %v2365
          %2391 = vmatprep.subr.mxu0 0.0
          %2392 = vmatpush1.msra.mxu0 %v2366
          %2393 = vmatprep.subr.mxu0 0.0
          %2394 = vmatpush1.msra.mxu0 %v2367
          %2395 = vmatprep.subr.mxu0 0.0
          %2396 = vmatpush1.msra.mxu0 %v2368
          %2397 = vmatprep.subr.mxu0 0.0
          %2398 = vmatpush1.msra.mxu0 %v2369
          %2399 = vmatprep.subr.mxu0 0.0
          %2400 = vmatpush1.msra.mxu0 %v2370
          %2401 = vmatprep.subr.mxu0 0.0
          %2402 = vmatpush1.msra.mxu0 %v2371
          %2403 = vmatprep.subr.mxu0 0.0
          %2404 = vmatpush1.msra.mxu0 %v2372
          %2405 = vmatprep.subr.mxu0 0.0
          %2406 = vmatpush1.msra.mxu0 0.0
          %2407 = vmatprep.subr.mxu0 0.0
          %2408 = vmatpush1.msra.mxu0 0.0
          %2409 = vmatprep.subr.mxu0 0.0
          %2410 = vmatpush1.msra.mxu0 0.0
          %2411 = vmatprep.subr.mxu0 0.0
          %2412 = vmatpush1.msra.mxu0 0.0
          %2413 = vmatprep.subr.mxu0 0.0
          %2414 = vmatpush1.msra.mxu0 0.0
          %2415 = vmatprep.subr.mxu0 0.0
          %2416 = vmatpush1.msra.mxu0 0.0
          %2417 = vmatprep.subr.mxu0 0.0
          %2418 = vmatpush1.msra.mxu0 0.0
          %2419 = vmatprep.subr.mxu0 0.0
          %2420 = vmatpush1.msra.mxu0 0.0
          %2421 = vmatprep.subr.mxu0 0.0
          %2422 = vmatpush1.msra.mxu0 0.0
          %2423 = vmatprep.subr.mxu0 0.0
          %2424 = vmatpush1.msra.mxu0 0.0
          %2425 = vmatprep.subr.mxu0 0.0
          %2426 = vmatpush1.msra.mxu0 0.0
          %2427 = vmatprep.subr.mxu0 0.0
          %2428 = vmatpush1.msra.mxu0 0.0
          %2429 = vmatprep.subr.mxu0 0.0
          %2430 = vmatpush1.msra.mxu0 0.0
          %2431 = vmatprep.subr.mxu0 0.0
          %2432 = vmatpush1.msra.mxu0 0.0
          %2433 = vmatprep.subr.mxu0 0.0
          %2434 = vmatpush1.msra.mxu0 0.0
          %2435 = vmatprep.subr.mxu0 0.0
          %2436 = vmatpush1.msra.mxu0 0.0
          %2437 = vmatprep.mubr.f32.mxu0 0.0
          %2438 = vmatmul.mubr.f32.gmra.mrb[0].mxu0 %v2356
          %v2439 = vpop.f32.mrb[0].mxu0
          %v2440 = vadd.f32 0.0, %v2439
          %v2441 = vpop.f32.mrb[0].mxu0
          %2442 = vdwg.mxu0
          %v2443 = vld [vmem:[#allocation10] sm:$0x1]
          %v2445 = vlaneseq
          %v2446 = vshrl.u32 %v2445, 7
          %v2447 = vsub.s32 0, %v2446
          %v2448 = vrot.slane %v2443, %v2447
          %v2450 = vmul.f32 %v2440, %v2448
          %v2451 = vld [vmem:[#allocation11] sm:$0x1]
          %v2453 = vlaneseq
          %v2454 = vshrl.u32 %v2453, 7
          %v2455 = vsub.s32 0, %v2454
          %v2456 = vrot.slane %v2451, %v2455
          %v2458 = vadd.f32 %v2450, %v2456
          %v2459 = vmax.f32 %v2458, 0.0
          %v2460 = vsel %vm609, 1, 0
          %vm2461 = vcmp.eq.s32.totalorder %v2460, 1
          %v2462 = vsel %vm2461, %v2459, -inf
          %v2463 = vrot.slane %v2462, 4
          %v2464 = vmax.f32 %v2462, %v2463
          %v2465 = vrot.slane %v2464, 2
          %v2466 = vmax.f32 %v2464, %v2465
          %v2467 = vrot.slane %v2466, 1
          %v2468 = vmax.f32 %v2466, %v2467
          %v2469 = vstv %s37
          %vm2470 = vcmp.eq.s32.totalorder %v606, %v2469
          %v2471 = vsel %vm2470, 1, 0
          %vm2472 = vcmp.eq.s32.totalorder %v2471, 1
          %v2473 = vsel %vm2472, %v2468, -inf
          %v2474 = vld [vmem:[#allocation12] sm:$0x3]
          %v2475 = vmax.f32 %v2474, %v2473
          %2476 = vst [vmem:[#allocation12] sm:$0x3] %v2475
          // Predicated region
          $region169: #{tpu_custom_call.1} parent=163 // pred_check
            _
          $region170: #{tpu_custom_call.1} parent=163 // pred_check_branch
            %2478 = sbr.rel (%p601) target = $region172
          $region171: #{tpu_custom_call.1} parent=163 // pred_region
            %v2479 = vld [vmem:[#allocation12] sm:$0x3]
            %2480 = vst [vmem:[#allocation21] sm:$0x3] %v2479
          $region172: #{tpu_custom_call.1} parent=163 // pred_fallthru
            _
        $region164: #{tpu_custom_call.1} parent=83 // pred_fallthru
          _
        // Predicated region
        $region173: #{tpu_custom_call.1} parent=83 // pred_check
          %p2481 = pneg %p406
        $region174: #{tpu_custom_call.1} parent=83 // pred_check_branch
          %2483 = sbr.rel (%p2481) target = $region176
        $region175: #{tpu_custom_call.1} parent=83 // pred_region
          %s2485 = ssub.s32 32, 32
          %2486 = vsyncadd [#allocation15], %s2485
          %s2488 = sshll.u32 [#allocation21], 4
          %s2489 = int_to_ptr.vmem [resolvable:$true] %s2488
          %2491 = dma.vmem_to_hbm [thread:$0]  %s2489, 32, %s16, [#allocation15]
        $region176: #{tpu_custom_call.1} parent=83 // pred_fallthru
          _
        // Predicated region
        $region177: #{tpu_custom_call.1} parent=83 // pred_check
          %p2492 = pneg %p406
        $region178: #{tpu_custom_call.1} parent=83 // pred_check_branch
          %2494 = sbr.rel (%p2492) target = $region180
        $region179: #{tpu_custom_call.1} parent=83 // pred_region
          %2495 = dma.done [#allocation15], 32
        $region180: #{tpu_custom_call.1} parent=83 // pred_fallthru
          _
      $region84: #{tpu_custom_call.1} parent=5 // pred_fallthru
        _
      %p2496 = scmp.le.s32.totalorder 2, %s26
      // Predicated region
      $region181: #{tpu_custom_call.1} parent=5 // pred_check
        %p2497 = pneg %p2496
      $region182: #{tpu_custom_call.1} parent=5 // pred_check_branch
        %2499 = sbr.rel (%p2497) target = $region184
      $region183: #{tpu_custom_call.1} parent=5 // pred_region
        %s2500 = ssub.s32 %s26, 2
      $region184: #{tpu_custom_call.1} parent=5 // pred_fallthru
        _
    $region6: #{tpu_custom_call.1} parent=1 // loop_footer
      %s30 = sadd.s32 1, %s26
    $region7: #{tpu_custom_call.1} parent=1 // loop_footer_branch
      %25 = sbr.rel target = $region3
    $region8: #{tpu_custom_call.1} parent=1 // loop_exit
      _
    %2501 = vsyncpa [#allocation14], 1
    %s2502 = scalar_lea.sflag [#allocation14], 1
    %2503 = vsyncpa %s2502, 1
    %2504 = vsyncpa [#allocation17], 1
    %2505 = vsyncpa [#allocation20], 1
    %2506 = vsyncpa [#allocation15], 1
    %s2507 = scalar_lea.sflag [#allocation15], 1
    %2508 = vsyncpa %s2507, 1

</llo_original>
